<compile_context>
chip_gen: v7x
topology: tpu7x:2x2x1
jax: 0.10.0
libtpu: 0.0.40
codegen_flags: <defaults>
</compile_context>

<pallas_src>
import functools
import math

import numpy as np
import jax
import jax.numpy as jnp
from jax.experimental import pallas as pl
from jax.experimental.pallas import tpu as pltpu


def _round_up(x, m):
    return ((x + m - 1) // m) * m


def _cdiv(a, b):
    return (a + b - 1) // b


def _pick_tm(M, target=8192):
    """Row tile for kernel 1 (rows are (n, b, t), channels innermost)."""
    tm = min(target, _round_up(M, 8))
    if M > 8:
        # keep >= 2 grid steps so v7x megacore sharding has work for both cores
        tm = min(tm, _round_up(_cdiv(M, 2), 8))
    return max(tm, 8)


def _pick_tc(N, BTC, cout, budget_bytes=20 << 20):
    """Column tile for kernel 2: a multiple of lcm(128, Cout) (lane-dense stores and
    per-block channel alignment), sized so the double-buffered hw/res/h streams stay
    under ~budget_bytes, and capped so the grid has >= 2 steps when possible (v7x)."""
    mult = 128 * cout // math.gcd(128, cout)
    if BTC <= mult:
        return BTC
    denom = 2 * 3 * N * 4                      # 2 buffers x 3 f32 streams per column
    avail = max(budget_bytes - 2 * N * N * 4, denom * mult)
    tc_fit = max(mult, (avail // denom) // mult * mult)
    tc_half = _round_up(_cdiv(BTC, 2), mult)
    tc = max(mult, min(tc_fit, tc_half, 8192))
    return BTC if tc >= BTC else tc


# ----------------------------------------------------------------------------
# Kernel 1: gated dilated temporal conv + 1x1 skip conv + GraphConv weight matmul
#   fg = x(t) @ [Wf0|Wg0] + x(t+d) @ [Wf1|Wg1] + [bf|bg]   (merged wide GEMMs)
#   hg = tanh(fg[:, :C]) * sigmoid(fg[:, C:])
#   sg = hg @ [Wskip.T | Wgc] + [bskip | 0]                 (merged wide GEMM)
#   s  = sg[:, :Csk] ;  hw = sg[:, Csk:]
# Boundary blocks run tanh/sigmoid/MXU on padded garbage rows; those writes are
# masked, so it is wasted work only (never read back).
# ----------------------------------------------------------------------------
def _gated_conv_kernel(x0_ref, x1_ref, w0_ref, w1_ref, bfg_ref, wsg_ref, bsg_ref,
                       s_ref, hw_ref, *, cout, csk):
    fg = (jnp.dot(x0_ref[...], w0_ref[...], preferred_element_type=jnp.float32)
          + jnp.dot(x1_ref[...], w1_ref[...], preferred_element_type=jnp.float32)
          + bfg_ref[...])
    hg = jnp.tanh(fg[:, :cout]) * jax.nn.sigmoid(fg[:, cout:])
    sg = jnp.dot(hg, wsg_ref[...], preferred_element_type=jnp.float32) + bsg_ref[...]
    s_ref[...] = sg[:, :csk]
    hw_ref[...] = sg[:, csk:]


# ----------------------------------------------------------------------------
# Kernel 2: graph aggregation + GraphConv bias + relu + residual, column-tiled.
# Also emits per-column partial sums / sums-of-squares for the BatchNorm statistics
# (combined per channel by a tiny XLA reduction in the wrapper).
# ----------------------------------------------------------------------------
def _agg_epilogue_kernel(a_ref, hw_ref, res_ref, bias_ref, h_ref, sum_ref, ssq_ref):
    agg = jnp.dot(a_ref[...], hw_ref[...], preferred_element_type=jnp.float32)
    hcol = jnp.maximum(agg + bias_ref[...], 0.0) + res_ref[...]
    h_ref[...] = hcol
    sum_ref[...] = jnp.sum(hcol, axis=0, keepdims=True)
    ssq_ref[...] = jnp.sum(hcol * hcol, axis=0, keepdims=True)


# ----------------------------------------------------------------------------
# Wrapper
# ----------------------------------------------------------------------------
@functools.partial(jax.jit, static_argnames=("dilation", "kernel_size"))
def gcn_layer_st_forward(h, skip, a_hat, params, *, dilation, kernel_size=2):
    B, Cin, N, T = h.shape
    Cout = params["w_filter"].shape[0]
    Csk = params["w_skip"].shape[0]
    assert kernel_size == 2, "fused kernel written for kernel_size=2 (module default)"
    assert Cin == Cout, "residual add requires in_channels == out_channels"
    d = dilation
    Tout = T - d * (kernel_size - 1)
    assert Tout > 0
    M = N * B * Tout               # rows, ordered (n, b, t), channels innermost
    BT = B * Tout
    BTC = BT * Cout
    eps = 1e-5

    # --- glue: the two dilated taps as channels-last row arrays (one copy pass each);
    #     tap 1 doubles as the residual stream for kernel 2 (free reshape). ---
    x0 = jnp.transpose(h[:, :, :, :Tout], (2, 0, 3, 1)).reshape(M, Cin)
    x1 = jnp.transpose(h[:, :, :, d:], (2, 0, 3, 1)).reshape(M, Cin)

    # --- weight repacking for the merged GEMMs (tiny) ---
    wf, wg = params["w_filter"], params["w_gate"]
    w0 = jnp.concatenate([wf[:, :, 0, 0].T, wg[:, :, 0, 0].T], axis=1)      # (Cin, 2Cout)
    w1 = jnp.concatenate([wf[:, :, 0, 1].T, wg[:, :, 0, 1].T], axis=1)      # (Cin, 2Cout)
    bfg = jnp.concatenate([params["b_filter"], params["b_gate"]]).reshape(1, 2 * Cout)
    wsg = jnp.concatenate([params["w_skip"][:, :, 0, 0].T, params["w_gc"]], axis=1)
    bsg = jnp.concatenate([params["b_skip"],
                           jnp.zeros((Cout,), jnp.float32)]).reshape(1, Csk + Cout)

    # --- kernel 1: tiled over rows, no padding copies (boundary block masked) ---
    tm = _pick_tm(M)
    grid1 = (_cdiv(M, tm),)
    row_spec = lambda c: pl.BlockSpec((tm, c), lambda i: (i, 0))
    full_spec = lambda s: pl.BlockSpec(s, lambda i: (0, 0))

    s_rows, hw_rows = pl.pallas_call(
        functools.partial(_gated_conv_kernel, cout=Cout, csk=Csk),
        out_shape=(jax.ShapeDtypeStruct((M, Csk), jnp.float32),
                   jax.ShapeDtypeStruct((M, Cout), jnp.float32)),
        grid=grid1,
        in_specs=[row_spec(Cin), row_spec(Cin),
                  full_spec((Cin, 2 * Cout)), full_spec((Cin, 2 * Cout)),
                  full_spec((1, 2 * Cout)),
                  full_spec((Cout, Csk + Cout)), full_spec((1, Csk + Cout))],
        out_specs=(row_spec(Csk), row_spec(Cout)),
        compiler_params=pltpu.CompilerParams(
            dimension_semantics=("parallel",),
            vmem_limit_bytes=32 * 1024 * 1024),
    )(x0, x1, w0, w1, bfg, wsg, bsg)

    # free reshapes: rows are (n, b, t) with channels innermost
    hw_cols = hw_rows.reshape(N, BTC)
    res_cols = x1.reshape(N, BTC)              # residual == dilated tap (Cin == Cout)

    # --- kernel 2: A_hat resident, activation streamed in lane-dense column tiles;
    #     bias + relu + residual + BN partial sums fused into the epilogue ---
    tc = _pick_tc(N, BTC, Cout)
    grid2 = (_cdiv(BTC, tc),)
    col_spec = lambda r: pl.BlockSpec((r, tc), lambda j: (0, j))
    bias_tc = jnp.tile(params["b_gc"], tc // Cout).reshape(1, tc)   # tiny resident operand

    h_cols, col_sum, col_ssq = pl.pallas_call(
        _agg_epilogue_kernel,
        out_shape=(jax.ShapeDtypeStruct((N, BTC), jnp.float32),
                   jax.ShapeDtypeStruct((1, BTC), jnp.float32),
                   jax.ShapeDtypeStruct((1, BTC), jnp.float32)),
        grid=grid2,
        in_specs=[pl.BlockSpec((N, N), lambda j: (0, 0)),    # adjacency stays in VMEM
                  col_spec(N), col_spec(N),
                  pl.BlockSpec((1, tc), lambda j: (0, 0))],
        out_specs=(col_spec(N), col_spec(1), col_spec(1)),
        compiler_params=pltpu.CompilerParams(
            dimension_semantics=("parallel",),
            vmem_limit_bytes=32 * 1024 * 1024),
    )(a_hat, hw_cols, res_cols, bias_tc)

    # --- per-channel BN statistics: Chan-style combine of per-column partials
    #     (better conditioned than a global E[x^2]-E[x]^2; tiny O(BT*Cout) XLA work) ---
    cs = col_sum.reshape(BT, Cout)
    cq = col_ssq.reshape(BT, Cout)
    col_mean = cs / N
    col_m2 = jnp.maximum(cq - cs * col_mean, 0.0)
    mean = jnp.mean(col_mean, axis=0)
    m2 = jnp.sum(col_m2, axis=0) + N * jnp.sum(jnp.square(col_mean - mean), axis=0)
    var = m2 / (N * BT)
    scale = params["bn_gamma"] * jax.lax.rsqrt(var + eps)
    shift = params["bn_beta"] - mean * scale

    # --- epilogue: BN apply / skip add fused by XLA into the NCHW output transposes ---
    h4 = h_cols.reshape(N, B, Tout, Cout)
    h_out = jnp.transpose(h4 * scale + shift, (1, 3, 0, 2))            # (B, Cout, N, Tout)
    skip_out = jnp.transpose(s_rows.reshape(N, B, Tout, Csk), (1, 3, 0, 2))
    if skip is not None:
        skip_out = skip_out + skip[:, :, :, T - Tout:]
    return h_out, skip_out


# ----------------------------------------------------------------------------
# Pure-JAX reference (same math) for the correctness check
# ----------------------------------------------------------------------------
def reference_forward(h, skip, a_hat, p, *, dilation, kernel_size=2):
    B, Cin, N, T = h.shape
    d = dilation
    Tout = T - d * (kernel_size - 1)

    def tconv(x, w, b):
        acc = jnp.zeros((B, w.shape[0], N, Tout), jnp.float32) + b[None, :, None, None]
        for k in range(kernel_size):
            acc = acc + jnp.einsum("oi,bint->bont", w[:, :, 0, k],
                                   x[:, :, :, k * d:k * d + Tout])
        return acc

    filt = jnp.tanh(tconv(h, p["w_filter"], p["b_filter"]))
    gate = jax.nn.sigmoid(tconv(h, p["w_gate"], p["b_gate"]))
    hg = filt * gate
    s = (jnp.einsum("oi,bint->bont", p["w_skip"][:, :, 0, 0], hg)
         + p["b_skip"][None, :, None, None])
    skip_out = s + (skip[:, :, :, -Tout:] if skip is not None else 0.0)

    hg_cl = jnp.transpose(hg, (0, 2, 3, 1))                      # (B, N, Tout, C)
    agg = jnp.einsum("ij,bjtc->bitc", a_hat, hg_cl)
    g = jnp.maximum(agg @ p["w_gc"] + p["b_gc"], 0.0)
    g = jnp.transpose(g, (0, 3, 1, 2))                           # (B, C, N, Tout)
    hr = g + h[:, :, :, -Tout:]
    mean = hr.mean(axis=(0, 2, 3), keepdims=True)
    var = jnp.square(hr - mean).mean(axis=(0, 2, 3), keepdims=True)
    out = (p["bn_gamma"][None, :, None, None] * (hr - mean) * jax.lax.rsqrt(var + 1e-5)
           + p["bn_beta"][None, :, None, None])
    return out, skip_out


if __name__ == "__main__":
    B, Cin, Cout, Csk, N, T = 2, 32, 32, 32, 8, 16
    K, d = 2, 2

    key = jax.random.PRNGKey(0)
    ks = jax.random.split(key, 12)

    h = jax.random.normal(ks[0], (B, Cin, N, T), jnp.float32)
    skip = jax.random.normal(ks[1], (B, Csk, N, T), jnp.float32)

    # synthetic weighted dense graph; DGL GraphConv norm='both' with edge weights:
    # A_hat = D_in^{-1/2} A D_out^{-1/2}
    A = jax.nn.softplus(jax.random.normal(ks[2], (N, N), jnp.float32))
    in_deg = A.sum(axis=1)
    out_deg = A.sum(axis=0)
    a_hat = (in_deg ** -0.5)[:, None] * A * (out_deg ** -0.5)[None, :]

    params = {
        "w_filter": 0.1 * jax.random.normal(ks[3], (Cout, Cin, 1, K), jnp.float32),
        "b_filter": 0.1 * jax.random.normal(ks[4], (Cout,), jnp.float32),
        "w_gate":   0.1 * jax.random.normal(ks[5], (Cout, Cin, 1, K), jnp.float32),
        "b_gate":   0.1 * jax.random.normal(ks[6], (Cout,), jnp.float32),
        "w_skip":   0.1 * jax.random.normal(ks[7], (Csk, Cout, 1, 1), jnp.float32),
        "b_skip":   0.1 * jax.random.normal(ks[8], (Csk,), jnp.float32),
        "w_gc":     0.1 * jax.random.normal(ks[9], (Cout, Cout), jnp.float32),  # DGL (in,out)
        "b_gc":     0.1 * jax.random.normal(ks[10], (Cout,), jnp.float32),
        "bn_gamma": jnp.ones((Cout,), jnp.float32),
        "bn_beta":  jnp.zeros((Cout,), jnp.float32),
    }

    h_out, skip_out = gcn_layer_st_forward(h, skip, a_hat, params, dilation=d, kernel_size=K)
    jax.block_until_ready((h_out, skip_out))

    Tout = T - d * (K - 1)
    assert h_out.shape == (B, Cout, N, Tout)
    assert skip_out.shape == (B, Csk, N, Tout)

    h_ref, s_ref = reference_forward(h, skip, a_hat, params, dilation=d, kernel_size=K)
    np.testing.assert_allclose(np.asarray(h_out), np.asarray(h_ref), rtol=2e-3, atol=2e-3)
    np.testing.assert_allclose(np.asarray(skip_out), np.asarray(s_ref), rtol=2e-3, atol=2e-3)

    print("KERNEL_OK")
</pallas_src>

<mosaic_0001>
module attributes {stable_mosaic.version = 11 : i64} {
  func.func @_gated_conv_kernel(%arg0: i32, %arg1: memref<112x32xf32, #tpu.memory_space<vmem>>, %arg2: memref<112x32xf32, #tpu.memory_space<vmem>>, %arg3: memref<32x64xf32, #tpu.memory_space<vmem>>, %arg4: memref<32x64xf32, #tpu.memory_space<vmem>>, %arg5: memref<1x64xf32, #tpu.memory_space<vmem>>, %arg6: memref<32x64xf32, #tpu.memory_space<vmem>>, %arg7: memref<1x64xf32, #tpu.memory_space<vmem>>, %arg8: memref<112x32xf32, #tpu.memory_space<vmem>>, %arg9: memref<112x32xf32, #tpu.memory_space<vmem>>) attributes {dimension_semantics = [#tpu.dimension_semantics<parallel>], iteration_bounds = array<i64: 2>, scalar_prefetch = 0 : i64, scratch_operands = 0 : i64, tpu.core_type = #tpu.core_type<tc>, window_params = [{transform_indices = @transform_0, window_bounds = array<i64: 112, 32>}, {transform_indices = @transform_1, window_bounds = array<i64: 112, 32>}, {pipeline_mode = #tpu.pipeline_mode<synchronous>, transform_indices = @transform_2, window_bounds = array<i64: 32, 64>}, {pipeline_mode = #tpu.pipeline_mode<synchronous>, transform_indices = @transform_3, window_bounds = array<i64: 32, 64>}, {pipeline_mode = #tpu.pipeline_mode<synchronous>, transform_indices = @transform_4, window_bounds = array<i64: 1, 64>}, {pipeline_mode = #tpu.pipeline_mode<synchronous>, transform_indices = @transform_5, window_bounds = array<i64: 32, 64>}, {pipeline_mode = #tpu.pipeline_mode<synchronous>, transform_indices = @transform_6, window_bounds = array<i64: 1, 64>}, {transform_indices = @transform_7, window_bounds = array<i64: 112, 32>}, {transform_indices = @transform_8, window_bounds = array<i64: 112, 32>}]} {
    %c0 = arith.constant 0 : index
    %c0_0 = arith.constant 0 : index
    %0 = vector.load %arg1[%c0, %c0_0] : memref<112x32xf32, #tpu.memory_space<vmem>>, vector<112x32xf32>
    %c0_1 = arith.constant 0 : index
    %c0_2 = arith.constant 0 : index
    %1 = vector.load %arg3[%c0_1, %c0_2] : memref<32x64xf32, #tpu.memory_space<vmem>>, vector<32x64xf32>
    %cst = arith.constant dense<0.000000e+00> : vector<112x64xf32>
    %2 = tpu.matmul %0, %1, %cst {dimension_numbers = #tpu.dot_dimension_numbers<[1], [0], [0], [1], [0, 0, 1, 1], [], []>} : vector<112x32xf32>, vector<32x64xf32>, vector<112x64xf32> -> vector<112x64xf32>
    %c0_3 = arith.constant 0 : index
    %c0_4 = arith.constant 0 : index
    %3 = vector.load %arg2[%c0_3, %c0_4] : memref<112x32xf32, #tpu.memory_space<vmem>>, vector<112x32xf32>
    %c0_5 = arith.constant 0 : index
    %c0_6 = arith.constant 0 : index
    %4 = vector.load %arg4[%c0_5, %c0_6] : memref<32x64xf32, #tpu.memory_space<vmem>>, vector<32x64xf32>
    %cst_7 = arith.constant dense<0.000000e+00> : vector<112x64xf32>
    %5 = tpu.matmul %3, %4, %cst_7 {dimension_numbers = #tpu.dot_dimension_numbers<[1], [0], [0], [1], [0, 0, 1, 1], [], []>} : vector<112x32xf32>, vector<32x64xf32>, vector<112x64xf32> -> vector<112x64xf32>
    %6 = arith.addf %2, %5 : vector<112x64xf32>
    %c0_8 = arith.constant 0 : index
    %c0_9 = arith.constant 0 : index
    %7 = vector.load %arg5[%c0_8, %c0_9] : memref<1x64xf32, #tpu.memory_space<vmem>>, vector<1x64xf32>
    %8 = vector.broadcast %7 : vector<1x64xf32> to vector<112x64xf32>
    %9 = arith.addf %6, %8 : vector<112x64xf32>
    %10 = vector.extract_strided_slice %9 {offsets = [0, 0], sizes = [112, 32], strides = [1, 1]} : vector<112x64xf32> to vector<112x32xf32>
    %11 = math.tanh %10 : vector<112x32xf32>
    %12 = vector.extract_strided_slice %9 {offsets = [0, 32], sizes = [112, 32], strides = [1, 1]} : vector<112x64xf32> to vector<112x32xf32>
    %13 = arith.negf %12 : vector<112x32xf32>
    %14 = math.exp %13 : vector<112x32xf32>
    %cst_10 = arith.constant 1.000000e+00 : f32
    %15 = vector.broadcast %cst_10 : f32 to vector<112x32xf32>
    %16 = arith.addf %15, %14 : vector<112x32xf32>
    %17 = arith.divf %15, %16 : vector<112x32xf32>
    %18 = arith.mulf %11, %17 : vector<112x32xf32>
    %c0_11 = arith.constant 0 : index
    %c0_12 = arith.constant 0 : index
    %19 = vector.load %arg6[%c0_11, %c0_12] : memref<32x64xf32, #tpu.memory_space<vmem>>, vector<32x64xf32>
    %cst_13 = arith.constant dense<0.000000e+00> : vector<112x64xf32>
    %20 = tpu.matmul %18, %19, %cst_13 {dimension_numbers = #tpu.dot_dimension_numbers<[1], [0], [0], [1], [0, 0, 1, 1], [], []>} : vector<112x32xf32>, vector<32x64xf32>, vector<112x64xf32> -> vector<112x64xf32>
    %c0_14 = arith.constant 0 : index
    %c0_15 = arith.constant 0 : index
    %21 = vector.load %arg7[%c0_14, %c0_15] : memref<1x64xf32, #tpu.memory_space<vmem>>, vector<1x64xf32>
    %22 = vector.broadcast %21 : vector<1x64xf32> to vector<112x64xf32>
    %23 = arith.addf %20, %22 : vector<112x64xf32>
    %24 = vector.extract_strided_slice %23 {offsets = [0, 0], sizes = [112, 32], strides = [1, 1]} : vector<112x64xf32> to vector<112x32xf32>
    %c0_16 = arith.constant 0 : index
    %c0_17 = arith.constant 0 : index
    %25 = vector.load %arg8[%c0_16, %c0_17] : memref<112x32xf32, #tpu.memory_space<vmem>>, vector<112x32xf32>
    tpu.vector_store %arg8[%c0_16, %c0_17], %24 {strides = array<i32>} : memref<112x32xf32, #tpu.memory_space<vmem>>, vector<112x32xf32>,
    %26 = vector.extract_strided_slice %23 {offsets = [0, 32], sizes = [112, 32], strides = [1, 1]} : vector<112x64xf32> to vector<112x32xf32>
    %c0_18 = arith.constant 0 : index
    %c0_19 = arith.constant 0 : index
    %27 = vector.load %arg9[%c0_18, %c0_19] : memref<112x32xf32, #tpu.memory_space<vmem>>, vector<112x32xf32>
    tpu.vector_store %arg9[%c0_18, %c0_19], %26 {strides = array<i32>} : memref<112x32xf32, #tpu.memory_space<vmem>>, vector<112x32xf32>,
    return
  }
  func.func @transform_0(%arg0: i32) -> (i32, i32) {
    %c0_i32 = arith.constant 0 : i32
    %c0_i32_0 = arith.constant 0 : i32
    return %arg0, %c0_i32 : i32, i32
  }
  func.func @transform_1(%arg0: i32) -> (i32, i32) {
    %c0_i32 = arith.constant 0 : i32
    %c0_i32_0 = arith.constant 0 : i32
    return %arg0, %c0_i32 : i32, i32
  }
  func.func @transform_2(%arg0: i32) -> (i32, i32) {
    %c0_i32 = arith.constant 0 : i32
    %c0_i32_0 = arith.constant 0 : i32
    %c0_i32_1 = arith.constant 0 : i32
    return %c0_i32, %c0_i32_0 : i32, i32
  }
  func.func @transform_3(%arg0: i32) -> (i32, i32) {
    %c0_i32 = arith.constant 0 : i32
    %c0_i32_0 = arith.constant 0 : i32
    %c0_i32_1 = arith.constant 0 : i32
    return %c0_i32, %c0_i32_0 : i32, i32
  }
  func.func @transform_4(%arg0: i32) -> (i32, i32) {
    %c0_i32 = arith.constant 0 : i32
    %c0_i32_0 = arith.constant 0 : i32
    %c0_i32_1 = arith.constant 0 : i32
    return %c0_i32, %c0_i32_0 : i32, i32
  }
  func.func @transform_5(%arg0: i32) -> (i32, i32) {
    %c0_i32 = arith.constant 0 : i32
    %c0_i32_0 = arith.constant 0 : i32
    %c0_i32_1 = arith.constant 0 : i32
    return %c0_i32, %c0_i32_0 : i32, i32
  }
  func.func @transform_6(%arg0: i32) -> (i32, i32) {
    %c0_i32 = arith.constant 0 : i32
    %c0_i32_0 = arith.constant 0 : i32
    %c0_i32_1 = arith.constant 0 : i32
    return %c0_i32, %c0_i32_0 : i32, i32
  }
  func.func @transform_7(%arg0: i32) -> (i32, i32) {
    %c0_i32 = arith.constant 0 : i32
    %c0_i32_0 = arith.constant 0 : i32
    return %arg0, %c0_i32 : i32, i32
  }
  func.func @transform_8(%arg0: i32) -> (i32, i32) {
    %c0_i32 = arith.constant 0 : i32
    %c0_i32_0 = arith.constant 0 : i32
    return %arg0, %c0_i32 : i32, i32
  }
}

module attributes {stable_mosaic.version = 11 : i64} {
  func.func @_agg_epilogue_kernel(%arg0: i32, %arg1: memref<8x8xf32, #tpu.memory_space<vmem>>, %arg2: memref<8x512xf32, #tpu.memory_space<vmem>>, %arg3: memref<8x512xf32, #tpu.memory_space<vmem>>, %arg4: memref<1x512xf32, #tpu.memory_space<vmem>>, %arg5: memref<8x512xf32, #tpu.memory_space<vmem>>, %arg6: memref<1x512xf32, #tpu.memory_space<vmem>>, %arg7: memref<1x512xf32, #tpu.memory_space<vmem>>) attributes {dimension_semantics = [#tpu.dimension_semantics<parallel>], iteration_bounds = array<i64: 2>, scalar_prefetch = 0 : i64, scratch_operands = 0 : i64, tpu.core_type = #tpu.core_type<tc>, window_params = [{pipeline_mode = #tpu.pipeline_mode<synchronous>, transform_indices = @transform_0, window_bounds = array<i64: 8, 8>}, {transform_indices = @transform_1, window_bounds = array<i64: 8, 512>}, {transform_indices = @transform_2, window_bounds = array<i64: 8, 512>}, {pipeline_mode = #tpu.pipeline_mode<synchronous>, transform_indices = @transform_3, window_bounds = array<i64: 1, 512>}, {transform_indices = @transform_4, window_bounds = array<i64: 8, 512>}, {transform_indices = @transform_5, window_bounds = array<i64: 1, 512>}, {transform_indices = @transform_6, window_bounds = array<i64: 1, 512>}]} {
    %c0 = arith.constant 0 : index
    %c0_0 = arith.constant 0 : index
    %0 = vector.load %arg1[%c0, %c0_0] : memref<8x8xf32, #tpu.memory_space<vmem>>, vector<8x8xf32>
    %c0_1 = arith.constant 0 : index
    %c0_2 = arith.constant 0 : index
    %1 = vector.load %arg2[%c0_1, %c0_2] : memref<8x512xf32, #tpu.memory_space<vmem>>, vector<8x512xf32>
    %cst = arith.constant dense<0.000000e+00> : vector<8x512xf32>
    %2 = tpu.matmul %0, %1, %cst {dimension_numbers = #tpu.dot_dimension_numbers<[1], [0], [0], [1], [0, 0, 1, 1], [], []>} : vector<8x8xf32>, vector<8x512xf32>, vector<8x512xf32> -> vector<8x512xf32>
    %c0_3 = arith.constant 0 : index
    %c0_4 = arith.constant 0 : index
    %3 = vector.load %arg4[%c0_3, %c0_4] : memref<1x512xf32, #tpu.memory_space<vmem>>, vector<1x512xf32>
    %4 = vector.broadcast %3 : vector<1x512xf32> to vector<8x512xf32>
    %5 = arith.addf %2, %4 : vector<8x512xf32>
    %cst_5 = arith.constant 0.000000e+00 : f32
    %6 = vector.broadcast %cst_5 : f32 to vector<8x512xf32>
    %7 = arith.maximumf %5, %6 : vector<8x512xf32>
    %c0_6 = arith.constant 0 : index
    %c0_7 = arith.constant 0 : index
    %8 = vector.load %arg3[%c0_6, %c0_7] : memref<8x512xf32, #tpu.memory_space<vmem>>, vector<8x512xf32>
    %9 = arith.addf %7, %8 : vector<8x512xf32>
    %c0_8 = arith.constant 0 : index
    %c0_9 = arith.constant 0 : index
    %10 = vector.load %arg5[%c0_8, %c0_9] : memref<8x512xf32, #tpu.memory_space<vmem>>, vector<8x512xf32>
    tpu.vector_store %arg5[%c0_8, %c0_9], %9 {strides = array<i32>} : memref<8x512xf32, #tpu.memory_space<vmem>>, vector<8x512xf32>,
    %cst_10 = arith.constant dense<0.000000e+00> : vector<512xf32>
    %11 = vector.multi_reduction <add>, %9, %cst_10 [0] : vector<8x512xf32> to vector<512xf32>
    %12 = vector.shape_cast %11 : vector<512xf32> to vector<1x512xf32>
    %c0_11 = arith.constant 0 : index
    %c0_12 = arith.constant 0 : index
    %13 = vector.load %arg6[%c0_11, %c0_12] : memref<1x512xf32, #tpu.memory_space<vmem>>, vector<1x512xf32>
    tpu.vector_store %arg6[%c0_11, %c0_12], %12 {strides = array<i32>} : memref<1x512xf32, #tpu.memory_space<vmem>>, vector<1x512xf32>,
    %14 = arith.mulf %9, %9 : vector<8x512xf32>
    %cst_13 = arith.constant dense<0.000000e+00> : vector<512xf32>
    %15 = vector.multi_reduction <add>, %14, %cst_13 [0] : vector<8x512xf32> to vector<512xf32>
    %16 = vector.shape_cast %15 : vector<512xf32> to vector<1x512xf32>
    %c0_14 = arith.constant 0 : index
    %c0_15 = arith.constant 0 : index
    %17 = vector.load %arg7[%c0_14, %c0_15] : memref<1x512xf32, #tpu.memory_space<vmem>>, vector<1x512xf32>
    tpu.vector_store %arg7[%c0_14, %c0_15], %16 {strides = array<i32>} : memref<1x512xf32, #tpu.memory_space<vmem>>, vector<1x512xf32>,
    return
  }
  func.func @transform_0(%arg0: i32) -> (i32, i32) {
    %c0_i32 = arith.constant 0 : i32
    %c0_i32_0 = arith.constant 0 : i32
    %c0_i32_1 = arith.constant 0 : i32
    return %c0_i32, %c0_i32_0 : i32, i32
  }
  func.func @transform_1(%arg0: i32) -> (i32, i32) {
    %c0_i32 = arith.constant 0 : i32
    %c0_i32_0 = arith.constant 0 : i32
    return %c0_i32, %arg0 : i32, i32
  }
  func.func @transform_2(%arg0: i32) -> (i32, i32) {
    %c0_i32 = arith.constant 0 : i32
    %c0_i32_0 = arith.constant 0 : i32
    return %c0_i32, %arg0 : i32, i32
  }
  func.func @transform_3(%arg0: i32) -> (i32, i32) {
    %c0_i32 = arith.constant 0 : i32
    %c0_i32_0 = arith.constant 0 : i32
    %c0_i32_1 = arith.constant 0 : i32
    return %c0_i32, %c0_i32_0 : i32, i32
  }
  func.func @transform_4(%arg0: i32) -> (i32, i32) {
    %c0_i32 = arith.constant 0 : i32
    %c0_i32_0 = arith.constant 0 : i32
    return %c0_i32, %arg0 : i32, i32
  }
  func.func @transform_5(%arg0: i32) -> (i32, i32) {
    %c0_i32 = arith.constant 0 : i32
    %c0_i32_0 = arith.constant 0 : i32
    return %c0_i32, %arg0 : i32, i32
  }
  func.func @transform_6(%arg0: i32) -> (i32, i32) {
    %c0_i32 = arith.constant 0 : i32
    %c0_i32_0 = arith.constant 0 : i32
    return %c0_i32, %arg0 : i32, i32
  }
}

</mosaic_0001>

<llo_original>
// kernel: tile.8
$region0: #{tile.8}
  #allocation0 [shape = 's32[1]{0}', space=sflag, size = 0x4, scoped, tag = 'scoped memory for tile.8']
  %s0 = inlined_call_operand.vmem [shape: f32[32], index: 0, kind: input, shape index: {}]
  %s1 = inlined_call_operand.vmem [shape: f32[16,32], index: 1, kind: output, shape index: {}]
  // Predicated region
  $region2: #{tile.8} parent=0 // pred_check
    _
  $region3: #{tile.8} parent=0 // pred_check_branch
    %3 = sbr.rel (0) target = $region5
  $region4: #{tile.8} parent=0 // pred_region
    _
  $region5: #{tile.8} parent=0 // pred_fallthru
    _
  %v4 = vld [vmem:[%s0] ss:$0 sm:$0xff]
  %5 = vst [vmem:[%s1] sm:$0xff] %v4
  %s6 = scalar_lea.vmem %s1, 8
  %7 = vst [vmem:[%s6] sm:$0xff] %v4

// kernel: tile.9
$region0: #{tile.9}
  %s0 = inlined_call_operand.vmem [shape: f32[16,32], index: 0, kind: input, shape index: {}]
  %s1 = inlined_call_operand.vmem [shape: f32[1,512], index: 1, kind: output, shape index: {}]
  $region1: #{tile.9} parent=0
    #allocation0 [shape = 'u8[16384]{0}', space=vmem, size = 0x4000, scoped, tag = 'scoped mem for output reshape']
    %v2 = vld [vmem:[%s0] ss:$4 sm:$0xf]
    %vm3 = vcmask 261120
    %4 = vst.msk [vmem:[#allocation0] ss:$8 sm:$0xf] %vm3, %v2
    %s5 = scalar_lea.vmem %s0, 3
    %v6 = vld [vmem:[%s5] ss:$4 sm:$0xf]
    %7 = vrot.lane.b32.xlu0 %v6, 96
    %v8 = vpop.permute.xlu0 %7
    %vm9 = vcmask 1048320
    %10 = vst.msk [vmem:[#allocation0] ss:$8 sm:$0xf] %vm9, %v8
    %s11 = scalar_lea.vmem %s0, 2
    %v12 = vld [vmem:[%s11] ss:$4 sm:$0xf]
    %13 = vrot.lane.b32.xlu0 %v12, 64
    %v14 = vpop.permute.xlu0 %13
    %vm15 = vcmask 785920
    %16 = vst.msk [vmem:[#allocation0] ss:$8 sm:$0xf] %vm15, %v14
    %s17 = scalar_lea.vmem %s0, 1
    %v18 = vld [vmem:[%s17] ss:$4 sm:$0xf]
    %19 = vrot.lane.b32.xlu0 %v18, 32
    %v20 = vpop.permute.xlu0 %19
    %vm21 = vcmask 523520
    %22 = vst.msk [vmem:[#allocation0] ss:$8 sm:$0xf] %vm21, %v20
    %s24 = sshllo.u32 0, 1
    %v26 = vld [vmem:[#allocation0] sm:%s24]
    %s27 = sshllo.u32 0, 1
    %28 = vst [vmem:[%s1] sm:%s27] %v26
    %s29 = scalar_lea.vmem [#allocation0], 8
    %v30 = vld [vmem:[%s29] sm:%s24]
    %s31 = sshllo.u32 0, 1
    %s32 = scalar_lea.vmem %s1, 1
    %33 = vst [vmem:[%s32] sm:%s31] %v30
    %s34 = scalar_lea.vmem [#allocation0], 16
    %v35 = vld [vmem:[%s34] sm:%s24]
    %s36 = sshllo.u32 0, 1
    %s37 = smul.addr 1, 2
    %s38 = scalar_lea.vmem %s1, %s37
    %39 = vst [vmem:[%s38] sm:%s36] %v35
    %s40 = scalar_lea.vmem [#allocation0], 24
    %v41 = vld [vmem:[%s40] sm:%s24]
    %s42 = sshllo.u32 0, 1
    %s43 = smul.addr 1, 3
    %s44 = scalar_lea.vmem %s1, %s43
    %45 = vst [vmem:[%s44] sm:%s42] %v41

// kernel: gcn_layer_st_forward.3
$region0: #{gcn_layer_st_forward.3}
  #allocation0 [shape = 'u32[]', space=smem, size = 0x4, offset = 0x4, fixed_abs, tag = 'smem constant byte address 0x4 - core index']
  #allocation1 [shape = 'u32[144,128]{1,0:T(1,128)}', space=vmem, size = 0x12000, scoped, tag = 'internal scratch']
  %s0 = inlined_call_operand.vmem [shape: f32[8,8], index: 0, kind: input, shape index: {}]
  %s1 = inlined_call_operand.vmem [shape: f32[8,896], index: 1, kind: input, shape index: {}]
  %s2 = inlined_call_operand.vmem [shape: f32[8,896], index: 2, kind: input, shape index: {}]
  %s3 = inlined_call_operand.vmem [shape: f32[1,512], index: 3, kind: input, shape index: {}]
  %s4 = inlined_call_operand.vmem [shape: f32[8,896], index: 4, kind: output, shape index: {0}]
  %s5 = inlined_call_operand.vmem [shape: f32[1,896], index: 5, kind: output, shape index: {1}]
  %s6 = inlined_call_operand.vmem [shape: f32[1,896], index: 6, kind: output, shape index: {2}]
  %7 = xla_tuple %s4, %s5, %s6
  %s8 = sld [smem:[#allocation0]]
  $region251: #{gcn_layer_st_forward.3} parent=0
    _
  %s10 = ssub.s32 1, %s8
  %s11 = scalar_select 0, %s10, %s8
  $region1: #{gcn_layer_st_forward.3} parent=0
    #allocation2 [shape = 'u8[32768]{0}', space=vmem, size = 0x8000, scoped, tag = 'output window, operand 0']
    #allocation3 [shape = 'u8[4096]{0}', space=vmem, size = 0x1000, scoped, tag = 'output window, operand 1']
    #allocation4 [shape = 'u8[4096]{0}', space=vmem, size = 0x1000, scoped, tag = 'output window, operand 2']
    loop: start=0, step=1, limit=4
    $region2: #{gcn_layer_st_forward.3} parent=1 // loop_pre_header
      _
    $region3: #{gcn_layer_st_forward.3} parent=1 // loop_header
      %s13 = sphi 0, %s17
      %p14 = scmp.ge.s32.totalorder %s13, 4
      %s21 = sphi 0, %s21
      %s23 = sphi 0, %s21
      %s24 = sphi 0, %s23
      %s38 = sphi 0, %s24
      %s44 = sphi 0, %s46
      %s47 = sphi 0, %s44
      %s48 = sphi 0, %s47
      %s64 = sphi 0, %s48
      %s70 = sphi 0, %s72
      %s73 = sphi 0, %s70
      %s74 = sphi 0, %s73
      %s90 = sphi 0, %s74
      %s94 = sphi 0, %s94
      %s96 = sphi 0, %s94
      %s97 = sphi 0, %s96
      %s111 = sphi 0, %s97
      %s117 = sphi 0, %s119
      %s120 = sphi 0, %s117
      %s121 = sphi 0, %s120
      %s137 = sphi 0, %s121
      %s143 = sphi 0, %s145
      %s146 = sphi 0, %s143
      %s147 = sphi 0, %s146
      %s163 = sphi 0, %s147
      %s169 = sphi 0, %s171
      %s172 = sphi 0, %s169
      %s173 = sphi 0, %s172
      %s189 = sphi 0, %s173
    $region4: #{gcn_layer_st_forward.3} parent=1 // loop_header_branch
      %16 = sbr.rel (%p14) target = $region8
    $region5: #{gcn_layer_st_forward.3} parent=1 // loop_body
      %s18 = ssub.s32 %s13, 1
      %s19 = ssub.s32 %s13, 2
      %s20 = sadd.s32 %s13, 1
      %s22 = sadd.s32 %s21, 1
      %p25 = scmp.eq.s32.totalorder %s13, 1
      %p26 = scmp.ne.s32.totalorder %s21, %s23
      %p27 = scmp.eq.s32.totalorder %s13, 0
      %p28 = por %p26, %p27
      %p29 = scmp.ne.s32.totalorder %s21, %s23
      %p30 = scmp.eq.s32.totalorder %s18, 1
      %p31 = por %p29, %p30
      %p32 = scmp.ne.s32.totalorder %s23, %s24
      %p33 = scmp.eq.s32.totalorder %s18, 0
      %p34 = por %p32, %p33
      %p35 = scmp.ne.s32.totalorder %s23, %s24
      %p36 = scmp.eq.s32.totalorder %s19, 1
      %p37 = por %p35, %p36
      %p39 = scmp.ne.s32.totalorder %s24, %s38
      %p40 = scmp.eq.s32.totalorder %s19, 0
      %p41 = por %p39, %p40
      %s42 = ssub.s32 %s13, %s20
      %p43 = scmp.eq.s32.totalorder %s42, 0
      %s45 = sadd.s32 %s44, 1
      %s46 = scalar_select %p43, %s44, %s45
      %p49 = pneg %p43
      %p50 = scmp.eq.s32.totalorder %s13, 1
      %p51 = por %p49, %p50
      %p52 = scmp.ne.s32.totalorder %s44, %s47
      %p53 = scmp.eq.s32.totalorder %s13, 0
      %p54 = por %p52, %p53
      %p55 = scmp.ne.s32.totalorder %s44, %s47
      %p56 = scmp.eq.s32.totalorder %s18, 1
      %p57 = por %p55, %p56
      %p58 = scmp.ne.s32.totalorder %s47, %s48
      %p59 = scmp.eq.s32.totalorder %s18, 0
      %p60 = por %p58, %p59
      %p61 = scmp.ne.s32.totalorder %s47, %s48
      %p62 = scmp.eq.s32.totalorder %s19, 1
      %p63 = por %p61, %p62
      %p65 = scmp.ne.s32.totalorder %s48, %s64
      %p66 = scmp.eq.s32.totalorder %s19, 0
      %p67 = por %p65, %p66
      %s68 = ssub.s32 %s13, %s20
      %p69 = scmp.eq.s32.totalorder %s68, 0
      %s71 = sadd.s32 %s70, 1
      %s72 = scalar_select %p69, %s70, %s71
      %p75 = pneg %p69
      %p76 = scmp.eq.s32.totalorder %s13, 1
      %p77 = por %p75, %p76
      %p78 = scmp.ne.s32.totalorder %s70, %s73
      %p79 = scmp.eq.s32.totalorder %s13, 0
      %p80 = por %p78, %p79
      %p81 = scmp.ne.s32.totalorder %s70, %s73
      %p82 = scmp.eq.s32.totalorder %s18, 1
      %p83 = por %p81, %p82
      %p84 = scmp.ne.s32.totalorder %s73, %s74
      %p85 = scmp.eq.s32.totalorder %s18, 0
      %p86 = por %p84, %p85
      %p87 = scmp.ne.s32.totalorder %s73, %s74
      %p88 = scmp.eq.s32.totalorder %s19, 1
      %p89 = por %p87, %p88
      %p91 = scmp.ne.s32.totalorder %s74, %s90
      %p92 = scmp.eq.s32.totalorder %s19, 0
      %p93 = por %p91, %p92
      %s95 = sadd.s32 %s94, 1
      %p98 = scmp.eq.s32.totalorder %s13, 1
      %p99 = scmp.ne.s32.totalorder %s94, %s96
      %p100 = scmp.eq.s32.totalorder %s13, 0
      %p101 = por %p99, %p100
      %p102 = scmp.ne.s32.totalorder %s94, %s96
      %p103 = scmp.eq.s32.totalorder %s18, 1
      %p104 = por %p102, %p103
      %p105 = scmp.ne.s32.totalorder %s96, %s97
      %p106 = scmp.eq.s32.totalorder %s18, 0
      %p107 = por %p105, %p106
      %p108 = scmp.ne.s32.totalorder %s96, %s97
      %p109 = scmp.eq.s32.totalorder %s19, 1
      %p110 = por %p108, %p109
      %p112 = scmp.ne.s32.totalorder %s97, %s111
      %p113 = scmp.eq.s32.totalorder %s19, 0
      %p114 = por %p112, %p113
      %s115 = ssub.s32 %s13, %s20
      %p116 = scmp.eq.s32.totalorder %s115, 0
      %s118 = sadd.s32 %s117, 1
      %s119 = scalar_select %p116, %s117, %s118
      %p122 = pneg %p116
      %p123 = scmp.eq.s32.totalorder %s13, 1
      %p124 = por %p122, %p123
      %p125 = scmp.ne.s32.totalorder %s117, %s120
      %p126 = scmp.eq.s32.totalorder %s13, 0
      %p127 = por %p125, %p126
      %p128 = scmp.ne.s32.totalorder %s117, %s120
      %p129 = scmp.eq.s32.totalorder %s18, 1
      %p130 = por %p128, %p129
      %p131 = scmp.ne.s32.totalorder %s120, %s121
      %p132 = scmp.eq.s32.totalorder %s18, 0
      %p133 = por %p131, %p132
      %p134 = scmp.ne.s32.totalorder %s120, %s121
      %p135 = scmp.eq.s32.totalorder %s19, 1
      %p136 = por %p134, %p135
      %p138 = scmp.ne.s32.totalorder %s121, %s137
      %p139 = scmp.eq.s32.totalorder %s19, 0
      %p140 = por %p138, %p139
      %s141 = ssub.s32 %s13, %s20
      %p142 = scmp.eq.s32.totalorder %s141, 0
      %s144 = sadd.s32 %s143, 1
      %s145 = scalar_select %p142, %s143, %s144
      %p148 = pneg %p142
      %p149 = scmp.eq.s32.totalorder %s13, 1
      %p150 = por %p148, %p149
      %p151 = scmp.ne.s32.totalorder %s143, %s146
      %p152 = scmp.eq.s32.totalorder %s13, 0
      %p153 = por %p151, %p152
      %p154 = scmp.ne.s32.totalorder %s143, %s146
      %p155 = scmp.eq.s32.totalorder %s18, 1
      %p156 = por %p154, %p155
      %p157 = scmp.ne.s32.totalorder %s146, %s147
      %p158 = scmp.eq.s32.totalorder %s18, 0
      %p159 = por %p157, %p158
      %p160 = scmp.ne.s32.totalorder %s146, %s147
      %p161 = scmp.eq.s32.totalorder %s19, 1
      %p162 = por %p160, %p161
      %p164 = scmp.ne.s32.totalorder %s147, %s163
      %p165 = scmp.eq.s32.totalorder %s19, 0
      %p166 = por %p164, %p165
      %s167 = ssub.s32 %s13, %s20
      %p168 = scmp.eq.s32.totalorder %s167, 0
      %s170 = sadd.s32 %s169, 1
      %s171 = scalar_select %p168, %s169, %s170
      %p174 = pneg %p168
      %p175 = scmp.eq.s32.totalorder %s13, 1
      %p176 = por %p174, %p175
      %p177 = scmp.ne.s32.totalorder %s169, %s172
      %p178 = scmp.eq.s32.totalorder %s13, 0
      %p179 = por %p177, %p178
      %p180 = scmp.ne.s32.totalorder %s169, %s172
      %p181 = scmp.eq.s32.totalorder %s18, 1
      %p182 = por %p180, %p181
      %p183 = scmp.ne.s32.totalorder %s172, %s173
      %p184 = scmp.eq.s32.totalorder %s18, 0
      %p185 = por %p183, %p184
      %p186 = scmp.ne.s32.totalorder %s172, %s173
      %p187 = scmp.eq.s32.totalorder %s19, 1
      %p188 = por %p186, %p187
      %p190 = scmp.ne.s32.totalorder %s173, %s189
      %p191 = scmp.eq.s32.totalorder %s19, 0
      %p192 = por %p190, %p191
      %p193 = scmp.le.s32.totalorder 1, %s13
      %p194 = scmp.lt.s32.totalorder %s13, 3
      %p195 = pnand %p193, %p194
      %p196 = pneg %p195
      // Predicated region
      $region9: #{gcn_layer_st_forward.3} parent=5 // pred_check
        _
      $region10: #{gcn_layer_st_forward.3} parent=5 // pred_check_branch
        %198 = sbr.rel (%p195) target = $region12
      $region11: #{gcn_layer_st_forward.3} parent=5 // pred_region
        %s199 = ssub.s32 %s13, 1
        // Predicated region
        $region13: #{gcn_layer_st_forward.3} parent=11 // pred_check
          %p200 = pneg %p34
        $region14: #{gcn_layer_st_forward.3} parent=11 // pred_check_branch
          %202 = sbr.rel (%p200) target = $region16
        $region15: #{gcn_layer_st_forward.3} parent=11 // pred_region
          _
        $region16: #{gcn_layer_st_forward.3} parent=11 // pred_fallthru
          _
        // Predicated region
        $region17: #{gcn_layer_st_forward.3} parent=11 // pred_check
          %p203 = pneg %p107
        $region18: #{gcn_layer_st_forward.3} parent=11 // pred_check_branch
          %205 = sbr.rel (%p203) target = $region20
        $region19: #{gcn_layer_st_forward.3} parent=11 // pred_region
          _
        $region20: #{gcn_layer_st_forward.3} parent=11 // pred_fallthru
          _
      $region12: #{gcn_layer_st_forward.3} parent=5 // pred_fallthru
        _
      %p206 = scmp.lt.s32.totalorder %s13, 2
      // Predicated region
      $region21: #{gcn_layer_st_forward.3} parent=5 // pred_check
        %p207 = pneg %p206
      $region22: #{gcn_layer_st_forward.3} parent=5 // pred_check_branch
        %209 = sbr.rel (%p207) target = $region24
      $region23: #{gcn_layer_st_forward.3} parent=5 // pred_region
        // Predicated region
        $region25: #{gcn_layer_st_forward.3} parent=23 // pred_check
          %p210 = pneg %p54
        $region26: #{gcn_layer_st_forward.3} parent=23 // pred_check_branch
          %212 = sbr.rel (%p210) target = $region28
        $region27: #{gcn_layer_st_forward.3} parent=23 // pred_region
          %s213 = smul.u32 4, %s13
          %s214 = ssub.s32 7, %s213
          %p215 = scmp.lt.s32.totalorder %s214, 4
          %s216 = scalar_select %p215, %s214, 4
          %s217 = smul.u32 128, %s216
          %p218 = scmp.lt.s32.totalorder %s213, 6
          %s219 = scalar_select %p218, %s213, 6
          %s220 = smul.addr %s219, 8
          %s221 = scalar_lea.vmem %s1, %s220
          %s222 = smul.u32 4, %s13
          %s223 = ssub.s32 7, %s222
          %p224 = scmp.lt.s32.totalorder %s223, 4
          %s225 = scalar_select %p224, %s223, 4
          %s226 = smul.u32 128, %s225
        $region28: #{gcn_layer_st_forward.3} parent=23 // pred_fallthru
          _
        // Predicated region
        $region29: #{gcn_layer_st_forward.3} parent=23 // pred_check
          %p227 = pneg %p80
        $region30: #{gcn_layer_st_forward.3} parent=23 // pred_check_branch
          %229 = sbr.rel (%p227) target = $region32
        $region31: #{gcn_layer_st_forward.3} parent=23 // pred_region
          %s230 = smul.u32 4, %s13
          %s231 = ssub.s32 7, %s230
          %p232 = scmp.lt.s32.totalorder %s231, 4
          %s233 = scalar_select %p232, %s231, 4
          %s234 = smul.u32 128, %s233
          %p235 = scmp.lt.s32.totalorder %s230, 6
          %s236 = scalar_select %p235, %s230, 6
          %s237 = smul.addr %s236, 8
          %s238 = scalar_lea.vmem %s2, %s237
          %s239 = smul.u32 4, %s13
          %s240 = ssub.s32 7, %s239
          %p241 = scmp.lt.s32.totalorder %s240, 4
          %s242 = scalar_select %p241, %s240, 4
          %s243 = smul.u32 128, %s242
        $region32: #{gcn_layer_st_forward.3} parent=23 // pred_fallthru
          _
      $region24: #{gcn_layer_st_forward.3} parent=5 // pred_fallthru
        _
      %p244 = scmp.le.s32.totalorder 1, %s13
      %p245 = scmp.lt.s32.totalorder %s13, 3
      %p246 = pnand %p244, %p245
      %p247 = pneg %p246
      // Predicated region
      $region33: #{gcn_layer_st_forward.3} parent=5 // pred_check
        _
      $region34: #{gcn_layer_st_forward.3} parent=5 // pred_check_branch
        %249 = sbr.rel (%p246) target = $region36
      $region35: #{gcn_layer_st_forward.3} parent=5 // pred_region
        %s250 = ssub.s32 %s13, 1
        %p251 = pneg %p34
        %p252 = pneg %p31
        %s253 = smul.u32 4, %s18
        %s254 = ssub.s32 7, %s253
        %p255 = scmp.lt.s32.totalorder %s254, 4
        %s256 = scalar_select %p255, %s254, 4
        %s257 = smul.u32 128, %s256
        %p258 = scmp.lt.s32.totalorder %s253, 6
        %s259 = scalar_select %p258, %s253, 6
        %s260 = smul.addr %s259, 8
        %s261 = scalar_lea.vmem %s1, %s260
        %p262 = pneg %p60
        %p263 = pneg %p57
        %s264 = smul.u32 4, %s18
        %s265 = ssub.s32 7, %s264
        %p266 = scmp.lt.s32.totalorder %s265, 4
        %s267 = scalar_select %p266, %s265, 4
        %s268 = smul.u32 128, %s267
        %p269 = scmp.lt.s32.totalorder %s264, 6
        %s270 = scalar_select %p269, %s264, 6
        %s271 = smul.addr %s270, 8
        %s272 = scalar_lea.vmem %s2, %s271
        %p273 = pneg %p86
        %p274 = pneg %p83
        %p275 = pneg %p107
        %p276 = pneg %p104
        %p277 = pneg %p133
        %p278 = pneg %p130
        %s279 = sand.u32 %s120, 1
        %s280 = sand.u32 %s120, 1
        %s281 = smul.addr %s280, 32
        %s282 = scalar_lea.vmem [#allocation2], %s281
        %p283 = pneg %p159
        %p284 = pneg %p156
        %s285 = sand.u32 %s146, 1
        %s286 = sand.u32 %s146, 1
        %s287 = smul.addr %s286, 4
        %s288 = scalar_lea.vmem [#allocation3], %s287
        %p289 = pneg %p185
        %p290 = pneg %p182
        %s291 = sand.u32 %s172, 1
        %s292 = sand.u32 %s172, 1
        %s293 = smul.addr %s292, 4
        %s294 = scalar_lea.vmem [#allocation4], %s293
        %s295 = smul.u32 4, %s18
        %s296 = ssub.s32 7, %s295
        %p297 = scmp.lt.s32.totalorder %s296, 4
        %s298 = scalar_select %p297, %s296, 4
        %s299 = smul.u32 128, %s298
        %p300 = scmp.lt.s32.totalorder %s295, 6
        %s301 = scalar_select %p300, %s295, 6
        %s302 = smul.addr %s301, 8
        %s303 = scalar_lea.vmem %s1, %s302
        %s304 = smul.u32 4, %s18
        %s305 = ssub.s32 7, %s304
        %p306 = scmp.lt.s32.totalorder %s305, 4
        %s307 = scalar_select %p306, %s305, 4
        %s308 = smul.u32 128, %s307
        %s309 = smul.u32 4, %s18
        %s310 = ssub.s32 7, %s309
        %p311 = scmp.lt.s32.totalorder %s310, 4
        %s312 = scalar_select %p311, %s310, 4
        %s313 = smul.u32 128, %s312
        %p314 = scmp.lt.s32.totalorder %s309, 6
        %s315 = scalar_select %p314, %s309, 6
        %s316 = smul.addr %s315, 8
        %s317 = scalar_lea.vmem %s2, %s316
        %s318 = smul.u32 4, %s18
        %s319 = ssub.s32 7, %s318
        %p320 = scmp.lt.s32.totalorder %s319, 4
        %s321 = scalar_select %p320, %s319, 4
        %s322 = smul.u32 128, %s321
        %s323 = smul.u32 4, %s18
        %s324 = ssub.s32 7, %s323
        %p325 = scmp.lt.s32.totalorder %s324, 4
        %s326 = scalar_select %p325, %s324, 4
        %s327 = smul.u32 128, %s326
        %s328 = smul.u32 4, %s18
        %s329 = ssub.s32 7, %s328
        %p330 = scmp.lt.s32.totalorder %s329, 4
        %s331 = scalar_select %p330, %s329, 4
        %s332 = smul.u32 16, %s331
        %s333 = smul.u32 4, %s18
        %s334 = ssub.s32 7, %s333
        %p335 = scmp.lt.s32.totalorder %s334, 4
        %s336 = scalar_select %p335, %s334, 4
        %s337 = smul.u32 16, %s336
        %v338 = vld [vmem:[%s0] sm:$0xff]
        %v339 = vld [vmem:[%s303] sm:$0xff]
        %v340 = vld [vmem:[%s303 + $0x8] sm:$0xff]
        %v341 = vld [vmem:[%s303 + $0x10] sm:$0xff]
        %v342 = vld [vmem:[%s303 + $0x18] sm:$0xff]
        %v343 = vld [vmem:[%s3] sm:$0xf]
        %v345 = vlaneseq
        %v346 = vshrl.u32 %v345, 7
        %v347 = vsub.s32 0, %v346
        %v348 = vrot.slane %v343, %v347
        %v349 = vlaneseq
        %v350 = vshrl.u32 %v349, 7
        %v351 = vsub.s32 1, %v350
        %v352 = vrot.slane %v343, %v351
        %v353 = vlaneseq
        %v354 = vshrl.u32 %v353, 7
        %v355 = vsub.s32 2, %v354
        %v356 = vrot.slane %v343, %v355
        %v357 = vlaneseq
        %v358 = vshrl.u32 %v357, 7
        %v359 = vsub.s32 3, %v358
        %v360 = vrot.slane %v343, %v359
        %vm365 = vcmask 64512
        %v367 = vsel %vm365, %v338, 0
        %369 = vmatprep.subr.mxu0 %v340
        %370 = vmatpush1.msra.mxu0 %v339
        %371 = vmatprep.subr.mxu0 0.0
        %372 = vmatpush1.msra.mxu0 0.0
        %373 = vmatprep.subr.mxu0 0.0
        %374 = vmatpush1.msra.mxu0 0.0
        %375 = vmatprep.subr.mxu0 0.0
        %376 = vmatpush1.msra.mxu0 0.0
        %377 = vmatprep.subr.mxu0 0.0
        %378 = vmatpush1.msra.mxu0 0.0
        %379 = vmatprep.subr.mxu0 0.0
        %380 = vmatpush1.msra.mxu0 0.0
        %381 = vmatprep.subr.mxu0 0.0
        %382 = vmatpush1.msra.mxu0 0.0
        %383 = vmatprep.subr.mxu0 0.0
        %384 = vmatpush1.msra.mxu0 0.0
        %385 = vmatprep.subr.mxu0 0.0
        %386 = vmatpush1.msra.mxu0 0.0
        %387 = vmatprep.subr.mxu0 0.0
        %388 = vmatpush1.msra.mxu0 0.0
        %389 = vmatprep.subr.mxu0 0.0
        %390 = vmatpush1.msra.mxu0 0.0
        %391 = vmatprep.subr.mxu0 0.0
        %392 = vmatpush1.msra.mxu0 0.0
        %393 = vmatprep.subr.mxu0 0.0
        %394 = vmatpush1.msra.mxu0 0.0
        %395 = vmatprep.subr.mxu0 0.0
        %396 = vmatpush1.msra.mxu0 0.0
        %397 = vmatprep.subr.mxu0 0.0
        %398 = vmatpush1.msra.mxu0 0.0
        %399 = vmatprep.subr.mxu0 0.0
        %400 = vmatpush1.msra.mxu0 0.0
        %401 = vmatprep.subr.mxu0 0.0
        %402 = vmatpush1.msra.mxu0 0.0
        %403 = vmatprep.subr.mxu0 0.0
        %404 = vmatpush1.msra.mxu0 0.0
        %405 = vmatprep.subr.mxu0 0.0
        %406 = vmatpush1.msra.mxu0 0.0
        %407 = vmatprep.subr.mxu0 0.0
        %408 = vmatpush1.msra.mxu0 0.0
        %409 = vmatprep.subr.mxu0 0.0
        %410 = vmatpush1.msra.mxu0 0.0
        %411 = vmatprep.subr.mxu0 0.0
        %412 = vmatpush1.msra.mxu0 0.0
        %413 = vmatprep.subr.mxu0 0.0
        %414 = vmatpush1.msra.mxu0 0.0
        %415 = vmatprep.subr.mxu0 0.0
        %416 = vmatpush1.msra.mxu0 0.0
        %417 = vmatprep.subr.mxu0 0.0
        %418 = vmatpush1.msra.mxu0 0.0
        %419 = vmatprep.subr.mxu0 0.0
        %420 = vmatpush1.msra.mxu0 0.0
        %421 = vmatprep.subr.mxu0 0.0
        %422 = vmatpush1.msra.mxu0 0.0
        %423 = vmatprep.subr.mxu0 0.0
        %424 = vmatpush1.msra.mxu0 0.0
        %425 = vmatprep.subr.mxu0 0.0
        %426 = vmatpush1.msra.mxu0 0.0
        %427 = vmatprep.subr.mxu0 0.0
        %428 = vmatpush1.msra.mxu0 0.0
        %429 = vmatprep.subr.mxu0 0.0
        %430 = vmatpush1.msra.mxu0 0.0
        %431 = vmatprep.subr.mxu0 0.0
        %432 = vmatpush1.msra.mxu0 0.0
        %433 = vmatprep.mubr.f32.mxu0 0.0
        %434 = vmatmul.mubr.f32.gmra.mrb[0].mxu0 %v367
        %v435 = vpop.f32.mrb[0].mxu0
        %v436 = vadd.f32 %v348, %v435
        %v437 = vpop.f32.mrb[0].mxu0
        %v438 = vadd.f32 %v352, %v437
        %439 = vdwg.mxu0
        %440 = vmatprep.subr.mxu0 %v342
        %441 = vmatpush1.msra.mxu0 %v341
        %442 = vmatprep.subr.mxu0 0.0
        %443 = vmatpush1.msra.mxu0 0.0
        %444 = vmatprep.subr.mxu0 0.0
        %445 = vmatpush1.msra.mxu0 0.0
        %446 = vmatprep.subr.mxu0 0.0
        %447 = vmatpush1.msra.mxu0 0.0
        %448 = vmatprep.subr.mxu0 0.0
        %449 = vmatpush1.msra.mxu0 0.0
        %450 = vmatprep.subr.mxu0 0.0
        %451 = vmatpush1.msra.mxu0 0.0
        %452 = vmatprep.subr.mxu0 0.0
        %453 = vmatpush1.msra.mxu0 0.0
        %454 = vmatprep.subr.mxu0 0.0
        %455 = vmatpush1.msra.mxu0 0.0
        %456 = vmatprep.subr.mxu0 0.0
        %457 = vmatpush1.msra.mxu0 0.0
        %458 = vmatprep.subr.mxu0 0.0
        %459 = vmatpush1.msra.mxu0 0.0
        %460 = vmatprep.subr.mxu0 0.0
        %461 = vmatpush1.msra.mxu0 0.0
        %462 = vmatprep.subr.mxu0 0.0
        %463 = vmatpush1.msra.mxu0 0.0
        %464 = vmatprep.subr.mxu0 0.0
        %465 = vmatpush1.msra.mxu0 0.0
        %466 = vmatprep.subr.mxu0 0.0
        %467 = vmatpush1.msra.mxu0 0.0
        %468 = vmatprep.subr.mxu0 0.0
        %469 = vmatpush1.msra.mxu0 0.0
        %470 = vmatprep.subr.mxu0 0.0
        %471 = vmatpush1.msra.mxu0 0.0
        %472 = vmatprep.subr.mxu0 0.0
        %473 = vmatpush1.msra.mxu0 0.0
        %474 = vmatprep.subr.mxu0 0.0
        %475 = vmatpush1.msra.mxu0 0.0
        %476 = vmatprep.subr.mxu0 0.0
        %477 = vmatpush1.msra.mxu0 0.0
        %478 = vmatprep.subr.mxu0 0.0
        %479 = vmatpush1.msra.mxu0 0.0
        %480 = vmatprep.subr.mxu0 0.0
        %481 = vmatpush1.msra.mxu0 0.0
        %482 = vmatprep.subr.mxu0 0.0
        %483 = vmatpush1.msra.mxu0 0.0
        %484 = vmatprep.subr.mxu0 0.0
        %485 = vmatpush1.msra.mxu0 0.0
        %486 = vmatprep.subr.mxu0 0.0
        %487 = vmatpush1.msra.mxu0 0.0
        %488 = vmatprep.subr.mxu0 0.0
        %489 = vmatpush1.msra.mxu0 0.0
        %490 = vmatprep.subr.mxu0 0.0
        %491 = vmatpush1.msra.mxu0 0.0
        %492 = vmatprep.subr.mxu0 0.0
        %493 = vmatpush1.msra.mxu0 0.0
        %494 = vmatprep.subr.mxu0 0.0
        %495 = vmatpush1.msra.mxu0 0.0
        %496 = vmatprep.subr.mxu0 0.0
        %497 = vmatpush1.msra.mxu0 0.0
        %498 = vmatprep.subr.mxu0 0.0
        %499 = vmatpush1.msra.mxu0 0.0
        %500 = vmatprep.subr.mxu0 0.0
        %501 = vmatpush1.msra.mxu0 0.0
        %502 = vmatprep.subr.mxu0 0.0
        %503 = vmatpush1.msra.mxu0 0.0
        %504 = vmatprep.mubr.f32.mxu0 0.0
        %505 = vmatmul.mubr.f32.gmra.mrb[0].mxu0 %v367
        %v506 = vpop.f32.mrb[0].mxu0
        %v507 = vadd.f32 %v356, %v506
        %v508 = vpop.f32.mrb[0].mxu0
        %v509 = vadd.f32 %v360, %v508
        %510 = vdwg.mxu0
        %v511 = vmax.f32 %v436, 0.0
        %v512 = vmax.f32 %v438, 0.0
        %v513 = vmax.f32 %v507, 0.0
        %v514 = vmax.f32 %v509, 0.0
        %v515 = vld [vmem:[%s317] sm:$0xff]
        %v516 = vld [vmem:[%s317 + $0x8] sm:$0xff]
        %v517 = vld [vmem:[%s317 + $0x10] sm:$0xff]
        %v518 = vld [vmem:[%s317 + $0x18] sm:$0xff]
        %v519 = vadd.f32 %v511, %v515
        %v520 = vadd.f32 %v512, %v516
        %v521 = vadd.f32 %v513, %v517
        %v522 = vadd.f32 %v514, %v518
        %523 = vst [vmem:[%s282] sm:$0xff] %v519
        %524 = vst [vmem:[%s282 + $0x8] sm:$0xff] %v520
        %525 = vst [vmem:[%s282 + $0x10] sm:$0xff] %v521
        %526 = vst [vmem:[%s282 + $0x18] sm:$0xff] %v522
        %v527 = vrot.slane %v519, 4
        %v528 = vadd.f32 %v519, %v527
        %v529 = vrot.slane %v528, 2
        %v530 = vadd.f32 %v528, %v529
        %v531 = vrot.slane %v530, 1
        %v532 = vadd.f32 %v530, %v531
        %v533 = vrot.slane %v520, 4
        %v534 = vadd.f32 %v520, %v533
        %v535 = vrot.slane %v534, 2
        %v536 = vadd.f32 %v534, %v535
        %v537 = vrot.slane %v536, 1
        %v538 = vadd.f32 %v536, %v537
        %v539 = vrot.slane %v521, 4
        %v540 = vadd.f32 %v521, %v539
        %v541 = vrot.slane %v540, 2
        %v542 = vadd.f32 %v540, %v541
        %v543 = vrot.slane %v542, 1
        %v544 = vadd.f32 %v542, %v543
        %v545 = vrot.slane %v522, 4
        %v546 = vadd.f32 %v522, %v545
        %v547 = vrot.slane %v546, 2
        %v548 = vadd.f32 %v546, %v547
        %v549 = vrot.slane %v548, 1
        %v550 = vadd.f32 %v548, %v549
        %v555 = vcombine.low %v532, %v538
        %v556 = vcombine.low %v544, %v550
        %v558 = vunpack.c.l.s4 1966171168
        %v559 = vunpack.c.0.s8 %v558
        %v560 = vlaneseq
        %v561 = vshrl.u32 %v560, 7
        %v562 = vsub.s32 %v559, %v561
        %v563 = vrot.slane %v555, %v562
        %v565 = vunpack.c.l.s4 1966171168
        %v566 = vunpack.c.0.s8 %v565
        %v567 = vlaneseq
        %v568 = vshrl.u32 %v567, 7
        %v569 = vsub.s32 %v566, %v568
        %v570 = vrot.slane %v556, %v569
        %v571 = vcombine.low %v563, %v570
        %v573 = vunpack.c.l.s4 1966171168
        %v574 = vunpack.c.0.s8 %v573
        %v575 = vlaneseq
        %v576 = vshrl.u32 %v575, 7
        %v577 = vsub.s32 %v574, %v576
        %v578 = vrot.slane %v571, %v577
        %v580 = vlaneseq
        %vm581 = vcmp.ge.s32.totalorder %v580, 0
        %vm582 = vcmp.lt.s32.totalorder %v580, 512
        %vm583 = vmand %vm581, %vm582
        %584 = vst.msk [vmem:[%s288] sm:$0xf] %vm583, %v578
        %v585 = vmul.f32 %v519, %v519
        %v586 = vmul.f32 %v520, %v520
        %v587 = vmul.f32 %v521, %v521
        %v588 = vmul.f32 %v522, %v522
        %v589 = vrot.slane %v585, 4
        %v590 = vadd.f32 %v585, %v589
        %v591 = vrot.slane %v590, 2
        %v592 = vadd.f32 %v590, %v591
        %v593 = vrot.slane %v592, 1
        %v594 = vadd.f32 %v592, %v593
        %v595 = vrot.slane %v586, 4
        %v596 = vadd.f32 %v586, %v595
        %v597 = vrot.slane %v596, 2
        %v598 = vadd.f32 %v596, %v597
        %v599 = vrot.slane %v598, 1
        %v600 = vadd.f32 %v598, %v599
        %v601 = vrot.slane %v587, 4
        %v602 = vadd.f32 %v587, %v601
        %v603 = vrot.slane %v602, 2
        %v604 = vadd.f32 %v602, %v603
        %v605 = vrot.slane %v604, 1
        %v606 = vadd.f32 %v604, %v605
        %v607 = vrot.slane %v588, 4
        %v608 = vadd.f32 %v588, %v607
        %v609 = vrot.slane %v608, 2
        %v610 = vadd.f32 %v608, %v609
        %v611 = vrot.slane %v610, 1
        %v612 = vadd.f32 %v610, %v611
        %v617 = vcombine.low %v594, %v600
        %v618 = vcombine.low %v606, %v612
        %v620 = vunpack.c.l.s4 1966171168
        %v621 = vunpack.c.0.s8 %v620
        %v622 = vlaneseq
        %v623 = vshrl.u32 %v622, 7
        %v624 = vsub.s32 %v621, %v623
        %v625 = vrot.slane %v617, %v624
        %v627 = vunpack.c.l.s4 1966171168
        %v628 = vunpack.c.0.s8 %v627
        %v629 = vlaneseq
        %v630 = vshrl.u32 %v629, 7
        %v631 = vsub.s32 %v628, %v630
        %v632 = vrot.slane %v618, %v631
        %v633 = vcombine.low %v625, %v632
        %v635 = vunpack.c.l.s4 1966171168
        %v636 = vunpack.c.0.s8 %v635
        %v637 = vlaneseq
        %v638 = vshrl.u32 %v637, 7
        %v639 = vsub.s32 %v636, %v638
        %v640 = vrot.slane %v633, %v639
        %642 = vst.msk [vmem:[%s294] sm:$0xf] %vm583, %v640
        %s643 = sand.u32 %s120, 1
        %s644 = sand.u32 %s120, 1
        %s645 = smul.addr %s644, 32
        %s646 = scalar_lea.vmem [#allocation2], %s645
        %s647 = sand.u32 %s146, 1
        %s648 = sand.u32 %s146, 1
        %s649 = smul.addr %s648, 4
        %s650 = scalar_lea.vmem [#allocation3], %s649
        %s651 = sand.u32 %s172, 1
        %s652 = sand.u32 %s172, 1
        %s653 = smul.addr %s652, 4
        %s654 = scalar_lea.vmem [#allocation4], %s653
        // Predicated region
        $region37: #{gcn_layer_st_forward.3} parent=35 // pred_check
          %p655 = pneg %p130
        $region38: #{gcn_layer_st_forward.3} parent=35 // pred_check_branch
          %657 = sbr.rel (%p655) target = $region40
        $region39: #{gcn_layer_st_forward.3} parent=35 // pred_region
          %s658 = smul.u32 4, %s18
          %s659 = ssub.s32 7, %s658
          %p660 = scmp.lt.s32.totalorder %s659, 4
          %s661 = scalar_select %p660, %s659, 4
          %s662 = smul.u32 128, %s661
          %p663 = scmp.ne.s32.totalorder 0, %s662
          %s664 = smul.addr %s658, 8
          %s665 = scalar_lea.vmem %s4, %s664
          %s666 = smul.u32 %s661, 8
          // Predicated region
          $region41: #{gcn_layer_st_forward.3} parent=39 // pred_check
            %p667 = pneg %p663
          $region42: #{gcn_layer_st_forward.3} parent=39 // pred_check_branch
            %669 = sbr.rel (%p667) target = $region44
          $region43: #{gcn_layer_st_forward.3} parent=39 // pred_region
            %p670 = scmp.lt.u32.totalorder %s666, 8
            %p671 = pneg %p670
            // Predicated region
            $region45: #{gcn_layer_st_forward.3} parent=43 // pred_check
              _
            $region46: #{gcn_layer_st_forward.3} parent=43 // pred_check_branch
              %673 = sbr.rel (%p670) target = $region48
            $region47: #{gcn_layer_st_forward.3} parent=43 // pred_region
              %s688 = sand.u32 %s666, 7
              %p689 = scmp.eq.s32.totalorder %s688, 0
              // Predicated region
              $region60: #{gcn_layer_st_forward.3} parent=47 // pred_check
                %p690 = pneg %p689
              $region61: #{gcn_layer_st_forward.3} parent=47 // pred_check_branch
                %692 = sbr.rel (%p690) target = $region63
              $region62: #{gcn_layer_st_forward.3} parent=47 // pred_region
                %s693 = sshrl.u32 %s666, 3
                %s694 = sshrl.u32 %s693, 6
                // While loop
                $region64: #{gcn_layer_st_forward.3} parent=62 // loop_pre_header
                  _
                $region65: #{gcn_layer_st_forward.3} parent=62 // loop_header
                  %s698 = sphi 0, %s700
                  %p699 = scmp.ge.s32.totalorder %s698, %s694
                  %s703 = sphi 0, %s836
                  %s704 = sphi %s646, %s839
                  %s705 = sphi %s665, %s840
                $region66: #{gcn_layer_st_forward.3} parent=62 // loop_header_branch
                  %702 = sbr.rel (%p699) target = $region70
                $region67: #{gcn_layer_st_forward.3} parent=62 // loop_body
                  %v706 = vld [vmem:[%s704] sm:$0xff]
                  %707 = vst [vmem:[%s705] sm:$0xff] %v706
                  %v708 = vld [vmem:[%s704 + $0x8] sm:$0xff]
                  %709 = vst [vmem:[%s705 + $0x8] sm:$0xff] %v708
                  %v710 = vld [vmem:[%s704 + $0x10] sm:$0xff]
                  %711 = vst [vmem:[%s705 + $0x10] sm:$0xff] %v710
                  %v712 = vld [vmem:[%s704 + $0x18] sm:$0xff]
                  %713 = vst [vmem:[%s705 + $0x18] sm:$0xff] %v712
                  %v714 = vld [vmem:[%s704 + $0x20] sm:$0xff]
                  %715 = vst [vmem:[%s705 + $0x20] sm:$0xff] %v714
                  %v716 = vld [vmem:[%s704 + $0x28] sm:$0xff]
                  %717 = vst [vmem:[%s705 + $0x28] sm:$0xff] %v716
                  %v718 = vld [vmem:[%s704 + $0x30] sm:$0xff]
                  %719 = vst [vmem:[%s705 + $0x30] sm:$0xff] %v718
                  %v720 = vld [vmem:[%s704 + $0x38] sm:$0xff]
                  %721 = vst [vmem:[%s705 + $0x38] sm:$0xff] %v720
                  %v722 = vld [vmem:[%s704 + $0x40] sm:$0xff]
                  %723 = vst [vmem:[%s705 + $0x40] sm:$0xff] %v722
                  %v724 = vld [vmem:[%s704 + $0x48] sm:$0xff]
                  %725 = vst [vmem:[%s705 + $0x48] sm:$0xff] %v724
                  %v726 = vld [vmem:[%s704 + $0x50] sm:$0xff]
                  %727 = vst [vmem:[%s705 + $0x50] sm:$0xff] %v726
                  %v728 = vld [vmem:[%s704 + $0x58] sm:$0xff]
                  %729 = vst [vmem:[%s705 + $0x58] sm:$0xff] %v728
                  %v730 = vld [vmem:[%s704 + $0x60] sm:$0xff]
                  %731 = vst [vmem:[%s705 + $0x60] sm:$0xff] %v730
                  %v732 = vld [vmem:[%s704 + $0x68] sm:$0xff]
                  %733 = vst [vmem:[%s705 + $0x68] sm:$0xff] %v732
                  %v734 = vld [vmem:[%s704 + $0x70] sm:$0xff]
                  %735 = vst [vmem:[%s705 + $0x70] sm:$0xff] %v734
                  %v736 = vld [vmem:[%s704 + $0x78] sm:$0xff]
                  %737 = vst [vmem:[%s705 + $0x78] sm:$0xff] %v736
                  %v738 = vld [vmem:[%s704 + $0x80] sm:$0xff]
                  %739 = vst [vmem:[%s705 + $0x80] sm:$0xff] %v738
                  %v740 = vld [vmem:[%s704 + $0x88] sm:$0xff]
                  %741 = vst [vmem:[%s705 + $0x88] sm:$0xff] %v740
                  %v742 = vld [vmem:[%s704 + $0x90] sm:$0xff]
                  %743 = vst [vmem:[%s705 + $0x90] sm:$0xff] %v742
                  %v744 = vld [vmem:[%s704 + $0x98] sm:$0xff]
                  %745 = vst [vmem:[%s705 + $0x98] sm:$0xff] %v744
                  %v746 = vld [vmem:[%s704 + $0xa0] sm:$0xff]
                  %747 = vst [vmem:[%s705 + $0xa0] sm:$0xff] %v746
                  %v748 = vld [vmem:[%s704 + $0xa8] sm:$0xff]
                  %749 = vst [vmem:[%s705 + $0xa8] sm:$0xff] %v748
                  %v750 = vld [vmem:[%s704 + $0xb0] sm:$0xff]
                  %751 = vst [vmem:[%s705 + $0xb0] sm:$0xff] %v750
                  %v752 = vld [vmem:[%s704 + $0xb8] sm:$0xff]
                  %753 = vst [vmem:[%s705 + $0xb8] sm:$0xff] %v752
                  %v754 = vld [vmem:[%s704 + $0xc0] sm:$0xff]
                  %755 = vst [vmem:[%s705 + $0xc0] sm:$0xff] %v754
                  %v756 = vld [vmem:[%s704 + $0xc8] sm:$0xff]
                  %757 = vst [vmem:[%s705 + $0xc8] sm:$0xff] %v756
                  %v758 = vld [vmem:[%s704 + $0xd0] sm:$0xff]
                  %759 = vst [vmem:[%s705 + $0xd0] sm:$0xff] %v758
                  %v760 = vld [vmem:[%s704 + $0xd8] sm:$0xff]
                  %761 = vst [vmem:[%s705 + $0xd8] sm:$0xff] %v760
                  %v762 = vld [vmem:[%s704 + $0xe0] sm:$0xff]
                  %763 = vst [vmem:[%s705 + $0xe0] sm:$0xff] %v762
                  %v764 = vld [vmem:[%s704 + $0xe8] sm:$0xff]
                  %765 = vst [vmem:[%s705 + $0xe8] sm:$0xff] %v764
                  %v766 = vld [vmem:[%s704 + $0xf0] sm:$0xff]
                  %767 = vst [vmem:[%s705 + $0xf0] sm:$0xff] %v766
                  %v768 = vld [vmem:[%s704 + $0xf8] sm:$0xff]
                  %769 = vst [vmem:[%s705 + $0xf8] sm:$0xff] %v768
                  %v770 = vld [vmem:[%s704 + $0x100] sm:$0xff]
                  %771 = vst [vmem:[%s705 + $0x100] sm:$0xff] %v770
                  %v772 = vld [vmem:[%s704 + $0x108] sm:$0xff]
                  %773 = vst [vmem:[%s705 + $0x108] sm:$0xff] %v772
                  %v774 = vld [vmem:[%s704 + $0x110] sm:$0xff]
                  %775 = vst [vmem:[%s705 + $0x110] sm:$0xff] %v774
                  %v776 = vld [vmem:[%s704 + $0x118] sm:$0xff]
                  %777 = vst [vmem:[%s705 + $0x118] sm:$0xff] %v776
                  %v778 = vld [vmem:[%s704 + $0x120] sm:$0xff]
                  %779 = vst [vmem:[%s705 + $0x120] sm:$0xff] %v778
                  %v780 = vld [vmem:[%s704 + $0x128] sm:$0xff]
                  %781 = vst [vmem:[%s705 + $0x128] sm:$0xff] %v780
                  %v782 = vld [vmem:[%s704 + $0x130] sm:$0xff]
                  %783 = vst [vmem:[%s705 + $0x130] sm:$0xff] %v782
                  %v784 = vld [vmem:[%s704 + $0x138] sm:$0xff]
                  %785 = vst [vmem:[%s705 + $0x138] sm:$0xff] %v784
                  %v786 = vld [vmem:[%s704 + $0x140] sm:$0xff]
                  %787 = vst [vmem:[%s705 + $0x140] sm:$0xff] %v786
                  %v788 = vld [vmem:[%s704 + $0x148] sm:$0xff]
                  %789 = vst [vmem:[%s705 + $0x148] sm:$0xff] %v788
                  %v790 = vld [vmem:[%s704 + $0x150] sm:$0xff]
                  %791 = vst [vmem:[%s705 + $0x150] sm:$0xff] %v790
                  %v792 = vld [vmem:[%s704 + $0x158] sm:$0xff]
                  %793 = vst [vmem:[%s705 + $0x158] sm:$0xff] %v792
                  %v794 = vld [vmem:[%s704 + $0x160] sm:$0xff]
                  %795 = vst [vmem:[%s705 + $0x160] sm:$0xff] %v794
                  %v796 = vld [vmem:[%s704 + $0x168] sm:$0xff]
                  %797 = vst [vmem:[%s705 + $0x168] sm:$0xff] %v796
                  %v798 = vld [vmem:[%s704 + $0x170] sm:$0xff]
                  %799 = vst [vmem:[%s705 + $0x170] sm:$0xff] %v798
                  %v800 = vld [vmem:[%s704 + $0x178] sm:$0xff]
                  %801 = vst [vmem:[%s705 + $0x178] sm:$0xff] %v800
                  %v802 = vld [vmem:[%s704 + $0x180] sm:$0xff]
                  %803 = vst [vmem:[%s705 + $0x180] sm:$0xff] %v802
                  %v804 = vld [vmem:[%s704 + $0x188] sm:$0xff]
                  %805 = vst [vmem:[%s705 + $0x188] sm:$0xff] %v804
                  %v806 = vld [vmem:[%s704 + $0x190] sm:$0xff]
                  %807 = vst [vmem:[%s705 + $0x190] sm:$0xff] %v806
                  %v808 = vld [vmem:[%s704 + $0x198] sm:$0xff]
                  %809 = vst [vmem:[%s705 + $0x198] sm:$0xff] %v808
                  %v810 = vld [vmem:[%s704 + $0x1a0] sm:$0xff]
                  %811 = vst [vmem:[%s705 + $0x1a0] sm:$0xff] %v810
                  %v812 = vld [vmem:[%s704 + $0x1a8] sm:$0xff]
                  %813 = vst [vmem:[%s705 + $0x1a8] sm:$0xff] %v812
                  %v814 = vld [vmem:[%s704 + $0x1b0] sm:$0xff]
                  %815 = vst [vmem:[%s705 + $0x1b0] sm:$0xff] %v814
                  %v816 = vld [vmem:[%s704 + $0x1b8] sm:$0xff]
                  %817 = vst [vmem:[%s705 + $0x1b8] sm:$0xff] %v816
                  %v818 = vld [vmem:[%s704 + $0x1c0] sm:$0xff]
                  %819 = vst [vmem:[%s705 + $0x1c0] sm:$0xff] %v818
                  %v820 = vld [vmem:[%s704 + $0x1c8] sm:$0xff]
                  %821 = vst [vmem:[%s705 + $0x1c8] sm:$0xff] %v820
                  %v822 = vld [vmem:[%s704 + $0x1d0] sm:$0xff]
                  %823 = vst [vmem:[%s705 + $0x1d0] sm:$0xff] %v822
                  %v824 = vld [vmem:[%s704 + $0x1d8] sm:$0xff]
                  %825 = vst [vmem:[%s705 + $0x1d8] sm:$0xff] %v824
                  %v826 = vld [vmem:[%s704 + $0x1e0] sm:$0xff]
                  %827 = vst [vmem:[%s705 + $0x1e0] sm:$0xff] %v826
                  %v828 = vld [vmem:[%s704 + $0x1e8] sm:$0xff]
                  %829 = vst [vmem:[%s705 + $0x1e8] sm:$0xff] %v828
                  %v830 = vld [vmem:[%s704 + $0x1f0] sm:$0xff]
                  %831 = vst [vmem:[%s705 + $0x1f0] sm:$0xff] %v830
                  %v832 = vld [vmem:[%s704 + $0x1f8] sm:$0xff]
                  %833 = vst [vmem:[%s705 + $0x1f8] sm:$0xff] %v832
                  %s834 = sadd.s32 1, %s703
                  %p835 = scmp.ge.s32.totalorder %s834, %s694
                  %s836 = scalar_select %p835, 0, %s834
                  %s837 = smul.u32 %s836, 512
                  %s838 = smul.u32 %s836, 512
                  %s839 = scalar_lea.vmem %s646, %s837 [#allocation2]
                  %s840 = scalar_lea.vmem %s665, %s838
                $region68: #{gcn_layer_st_forward.3} parent=62 // loop_footer
                  %s700 = sadd.s32 %s698, 1
                $region69: #{gcn_layer_st_forward.3} parent=62 // loop_footer_branch
                  %697 = sbr.rel target = $region65
                $region70: #{gcn_layer_st_forward.3} parent=62 // loop_exit
                  _
                %s841 = sshrl.u32 %s693, 6
                %s842 = sand.u32 %s693, 63
                %s843 = smul.u32 %s841, 64
                %s844 = smul.u32 128, %s843
                %s845 = sshra.s32 %s844, 4
                %s846 = scalar_lea.vmem %s646, %s845 [#allocation2]
                %s847 = smul.u32 128, %s843
                %s848 = sshra.s32 %s847, 4
                %s849 = scalar_lea.vmem %s665, %s848
                // While loop
                $region71: #{gcn_layer_st_forward.3} parent=62 // loop_pre_header
                  _
                $region72: #{gcn_layer_st_forward.3} parent=62 // loop_header
                  %s853 = sphi 0, %s855
                  %p854 = scmp.ge.s32.totalorder %s853, %s842
                  %s858 = sphi 0, %s865
                  %s859 = sphi %s846, %s868
                  %s860 = sphi %s849, %s869
                $region73: #{gcn_layer_st_forward.3} parent=62 // loop_header_branch
                  %857 = sbr.rel (%p854) target = $region77
                $region74: #{gcn_layer_st_forward.3} parent=62 // loop_body
                  %v861 = vld [vmem:[%s859] sm:$0xff]
                  %862 = vst [vmem:[%s860] sm:$0xff] %v861
                  %s863 = sadd.s32 1, %s858
                  %p864 = scmp.ge.s32.totalorder %s863, %s842
                  %s865 = scalar_select %p864, 0, %s863
                  %s866 = smul.u32 %s865, 8
                  %s867 = smul.u32 %s865, 8
                  %s868 = scalar_lea.vmem %s846, %s866 [#allocation2]
                  %s869 = scalar_lea.vmem %s849, %s867
                $region75: #{gcn_layer_st_forward.3} parent=62 // loop_footer
                  %s855 = sadd.s32 %s853, 1
                $region76: #{gcn_layer_st_forward.3} parent=62 // loop_footer_branch
                  %852 = sbr.rel target = $region72
                $region77: #{gcn_layer_st_forward.3} parent=62 // loop_exit
                  _
              $region63: #{gcn_layer_st_forward.3} parent=47 // pred_fallthru
                _
              %p870 = pneg %p689
              // Predicated region
              $region78: #{gcn_layer_st_forward.3} parent=47 // pred_check
                _
              $region79: #{gcn_layer_st_forward.3} parent=47 // pred_check_branch
                %872 = sbr.rel (%p689) target = $region81
              $region80: #{gcn_layer_st_forward.3} parent=47 // pred_region
                %s873 = sand.u32 %s666, 7
                %s874 = ssub.s32 %s666, %s873
                %s875 = scalar_lea.vmem %s646, %s874 [#allocation2]
                %s876 = ssub.s32 %s666, %s873
                %s877 = scalar_lea.vmem %s665, %s876
                %s878 = sshrl.u32 %s666, 3
                %s879 = sshrl.u32 %s878, 6
                // While loop
                $region82: #{gcn_layer_st_forward.3} parent=80 // loop_pre_header
                  _
                $region83: #{gcn_layer_st_forward.3} parent=80 // loop_header
                  %s883 = sphi 0, %s885
                  %p884 = scmp.ge.s32.totalorder %s883, %s879
                  %s888 = sphi 0, %s1021
                  %s889 = sphi %s646, %s1024
                  %s890 = sphi %s665, %s1025
                $region84: #{gcn_layer_st_forward.3} parent=80 // loop_header_branch
                  %887 = sbr.rel (%p884) target = $region88
                $region85: #{gcn_layer_st_forward.3} parent=80 // loop_body
                  %v891 = vld [vmem:[%s889] sm:$0xff]
                  %892 = vst [vmem:[%s890] sm:$0xff] %v891
                  %v893 = vld [vmem:[%s889 + $0x8] sm:$0xff]
                  %894 = vst [vmem:[%s890 + $0x8] sm:$0xff] %v893
                  %v895 = vld [vmem:[%s889 + $0x10] sm:$0xff]
                  %896 = vst [vmem:[%s890 + $0x10] sm:$0xff] %v895
                  %v897 = vld [vmem:[%s889 + $0x18] sm:$0xff]
                  %898 = vst [vmem:[%s890 + $0x18] sm:$0xff] %v897
                  %v899 = vld [vmem:[%s889 + $0x20] sm:$0xff]
                  %900 = vst [vmem:[%s890 + $0x20] sm:$0xff] %v899
                  %v901 = vld [vmem:[%s889 + $0x28] sm:$0xff]
                  %902 = vst [vmem:[%s890 + $0x28] sm:$0xff] %v901
                  %v903 = vld [vmem:[%s889 + $0x30] sm:$0xff]
                  %904 = vst [vmem:[%s890 + $0x30] sm:$0xff] %v903
                  %v905 = vld [vmem:[%s889 + $0x38] sm:$0xff]
                  %906 = vst [vmem:[%s890 + $0x38] sm:$0xff] %v905
                  %v907 = vld [vmem:[%s889 + $0x40] sm:$0xff]
                  %908 = vst [vmem:[%s890 + $0x40] sm:$0xff] %v907
                  %v909 = vld [vmem:[%s889 + $0x48] sm:$0xff]
                  %910 = vst [vmem:[%s890 + $0x48] sm:$0xff] %v909
                  %v911 = vld [vmem:[%s889 + $0x50] sm:$0xff]
                  %912 = vst [vmem:[%s890 + $0x50] sm:$0xff] %v911
                  %v913 = vld [vmem:[%s889 + $0x58] sm:$0xff]
                  %914 = vst [vmem:[%s890 + $0x58] sm:$0xff] %v913
                  %v915 = vld [vmem:[%s889 + $0x60] sm:$0xff]
                  %916 = vst [vmem:[%s890 + $0x60] sm:$0xff] %v915
                  %v917 = vld [vmem:[%s889 + $0x68] sm:$0xff]
                  %918 = vst [vmem:[%s890 + $0x68] sm:$0xff] %v917
                  %v919 = vld [vmem:[%s889 + $0x70] sm:$0xff]
                  %920 = vst [vmem:[%s890 + $0x70] sm:$0xff] %v919
                  %v921 = vld [vmem:[%s889 + $0x78] sm:$0xff]
                  %922 = vst [vmem:[%s890 + $0x78] sm:$0xff] %v921
                  %v923 = vld [vmem:[%s889 + $0x80] sm:$0xff]
                  %924 = vst [vmem:[%s890 + $0x80] sm:$0xff] %v923
                  %v925 = vld [vmem:[%s889 + $0x88] sm:$0xff]
                  %926 = vst [vmem:[%s890 + $0x88] sm:$0xff] %v925
                  %v927 = vld [vmem:[%s889 + $0x90] sm:$0xff]
                  %928 = vst [vmem:[%s890 + $0x90] sm:$0xff] %v927
                  %v929 = vld [vmem:[%s889 + $0x98] sm:$0xff]
                  %930 = vst [vmem:[%s890 + $0x98] sm:$0xff] %v929
                  %v931 = vld [vmem:[%s889 + $0xa0] sm:$0xff]
                  %932 = vst [vmem:[%s890 + $0xa0] sm:$0xff] %v931
                  %v933 = vld [vmem:[%s889 + $0xa8] sm:$0xff]
                  %934 = vst [vmem:[%s890 + $0xa8] sm:$0xff] %v933
                  %v935 = vld [vmem:[%s889 + $0xb0] sm:$0xff]
                  %936 = vst [vmem:[%s890 + $0xb0] sm:$0xff] %v935
                  %v937 = vld [vmem:[%s889 + $0xb8] sm:$0xff]
                  %938 = vst [vmem:[%s890 + $0xb8] sm:$0xff] %v937
                  %v939 = vld [vmem:[%s889 + $0xc0] sm:$0xff]
                  %940 = vst [vmem:[%s890 + $0xc0] sm:$0xff] %v939
                  %v941 = vld [vmem:[%s889 + $0xc8] sm:$0xff]
                  %942 = vst [vmem:[%s890 + $0xc8] sm:$0xff] %v941
                  %v943 = vld [vmem:[%s889 + $0xd0] sm:$0xff]
                  %944 = vst [vmem:[%s890 + $0xd0] sm:$0xff] %v943
                  %v945 = vld [vmem:[%s889 + $0xd8] sm:$0xff]
                  %946 = vst [vmem:[%s890 + $0xd8] sm:$0xff] %v945
                  %v947 = vld [vmem:[%s889 + $0xe0] sm:$0xff]
                  %948 = vst [vmem:[%s890 + $0xe0] sm:$0xff] %v947
                  %v949 = vld [vmem:[%s889 + $0xe8] sm:$0xff]
                  %950 = vst [vmem:[%s890 + $0xe8] sm:$0xff] %v949
                  %v951 = vld [vmem:[%s889 + $0xf0] sm:$0xff]
                  %952 = vst [vmem:[%s890 + $0xf0] sm:$0xff] %v951
                  %v953 = vld [vmem:[%s889 + $0xf8] sm:$0xff]
                  %954 = vst [vmem:[%s890 + $0xf8] sm:$0xff] %v953
                  %v955 = vld [vmem:[%s889 + $0x100] sm:$0xff]
                  %956 = vst [vmem:[%s890 + $0x100] sm:$0xff] %v955
                  %v957 = vld [vmem:[%s889 + $0x108] sm:$0xff]
                  %958 = vst [vmem:[%s890 + $0x108] sm:$0xff] %v957
                  %v959 = vld [vmem:[%s889 + $0x110] sm:$0xff]
                  %960 = vst [vmem:[%s890 + $0x110] sm:$0xff] %v959
                  %v961 = vld [vmem:[%s889 + $0x118] sm:$0xff]
                  %962 = vst [vmem:[%s890 + $0x118] sm:$0xff] %v961
                  %v963 = vld [vmem:[%s889 + $0x120] sm:$0xff]
                  %964 = vst [vmem:[%s890 + $0x120] sm:$0xff] %v963
                  %v965 = vld [vmem:[%s889 + $0x128] sm:$0xff]
                  %966 = vst [vmem:[%s890 + $0x128] sm:$0xff] %v965
                  %v967 = vld [vmem:[%s889 + $0x130] sm:$0xff]
                  %968 = vst [vmem:[%s890 + $0x130] sm:$0xff] %v967
                  %v969 = vld [vmem:[%s889 + $0x138] sm:$0xff]
                  %970 = vst [vmem:[%s890 + $0x138] sm:$0xff] %v969
                  %v971 = vld [vmem:[%s889 + $0x140] sm:$0xff]
                  %972 = vst [vmem:[%s890 + $0x140] sm:$0xff] %v971
                  %v973 = vld [vmem:[%s889 + $0x148] sm:$0xff]
                  %974 = vst [vmem:[%s890 + $0x148] sm:$0xff] %v973
                  %v975 = vld [vmem:[%s889 + $0x150] sm:$0xff]
                  %976 = vst [vmem:[%s890 + $0x150] sm:$0xff] %v975
                  %v977 = vld [vmem:[%s889 + $0x158] sm:$0xff]
                  %978 = vst [vmem:[%s890 + $0x158] sm:$0xff] %v977
                  %v979 = vld [vmem:[%s889 + $0x160] sm:$0xff]
                  %980 = vst [vmem:[%s890 + $0x160] sm:$0xff] %v979
                  %v981 = vld [vmem:[%s889 + $0x168] sm:$0xff]
                  %982 = vst [vmem:[%s890 + $0x168] sm:$0xff] %v981
                  %v983 = vld [vmem:[%s889 + $0x170] sm:$0xff]
                  %984 = vst [vmem:[%s890 + $0x170] sm:$0xff] %v983
                  %v985 = vld [vmem:[%s889 + $0x178] sm:$0xff]
                  %986 = vst [vmem:[%s890 + $0x178] sm:$0xff] %v985
                  %v987 = vld [vmem:[%s889 + $0x180] sm:$0xff]
                  %988 = vst [vmem:[%s890 + $0x180] sm:$0xff] %v987
                  %v989 = vld [vmem:[%s889 + $0x188] sm:$0xff]
                  %990 = vst [vmem:[%s890 + $0x188] sm:$0xff] %v989
                  %v991 = vld [vmem:[%s889 + $0x190] sm:$0xff]
                  %992 = vst [vmem:[%s890 + $0x190] sm:$0xff] %v991
                  %v993 = vld [vmem:[%s889 + $0x198] sm:$0xff]
                  %994 = vst [vmem:[%s890 + $0x198] sm:$0xff] %v993
                  %v995 = vld [vmem:[%s889 + $0x1a0] sm:$0xff]
                  %996 = vst [vmem:[%s890 + $0x1a0] sm:$0xff] %v995
                  %v997 = vld [vmem:[%s889 + $0x1a8] sm:$0xff]
                  %998 = vst [vmem:[%s890 + $0x1a8] sm:$0xff] %v997
                  %v999 = vld [vmem:[%s889 + $0x1b0] sm:$0xff]
                  %1000 = vst [vmem:[%s890 + $0x1b0] sm:$0xff] %v999
                  %v1001 = vld [vmem:[%s889 + $0x1b8] sm:$0xff]
                  %1002 = vst [vmem:[%s890 + $0x1b8] sm:$0xff] %v1001
                  %v1003 = vld [vmem:[%s889 + $0x1c0] sm:$0xff]
                  %1004 = vst [vmem:[%s890 + $0x1c0] sm:$0xff] %v1003
                  %v1005 = vld [vmem:[%s889 + $0x1c8] sm:$0xff]
                  %1006 = vst [vmem:[%s890 + $0x1c8] sm:$0xff] %v1005
                  %v1007 = vld [vmem:[%s889 + $0x1d0] sm:$0xff]
                  %1008 = vst [vmem:[%s890 + $0x1d0] sm:$0xff] %v1007
                  %v1009 = vld [vmem:[%s889 + $0x1d8] sm:$0xff]
                  %1010 = vst [vmem:[%s890 + $0x1d8] sm:$0xff] %v1009
                  %v1011 = vld [vmem:[%s889 + $0x1e0] sm:$0xff]
                  %1012 = vst [vmem:[%s890 + $0x1e0] sm:$0xff] %v1011
                  %v1013 = vld [vmem:[%s889 + $0x1e8] sm:$0xff]
                  %1014 = vst [vmem:[%s890 + $0x1e8] sm:$0xff] %v1013
                  %v1015 = vld [vmem:[%s889 + $0x1f0] sm:$0xff]
                  %1016 = vst [vmem:[%s890 + $0x1f0] sm:$0xff] %v1015
                  %v1017 = vld [vmem:[%s889 + $0x1f8] sm:$0xff]
                  %1018 = vst [vmem:[%s890 + $0x1f8] sm:$0xff] %v1017
                  %s1019 = sadd.s32 1, %s888
                  %p1020 = scmp.ge.s32.totalorder %s1019, %s879
                  %s1021 = scalar_select %p1020, 0, %s1019
                  %s1022 = smul.u32 %s1021, 512
                  %s1023 = smul.u32 %s1021, 512
                  %s1024 = scalar_lea.vmem %s646, %s1022 [#allocation2]
                  %s1025 = scalar_lea.vmem %s665, %s1023
                $region86: #{gcn_layer_st_forward.3} parent=80 // loop_footer
                  %s885 = sadd.s32 %s883, 1
                $region87: #{gcn_layer_st_forward.3} parent=80 // loop_footer_branch
                  %882 = sbr.rel target = $region83
                $region88: #{gcn_layer_st_forward.3} parent=80 // loop_exit
                  _
                %s1026 = sshrl.u32 %s878, 6
                %s1027 = sand.u32 %s878, 63
                %s1028 = smul.u32 %s1026, 64
                %s1029 = smul.u32 128, %s1028
                %s1030 = sshra.s32 %s1029, 4
                %s1031 = scalar_lea.vmem %s646, %s1030 [#allocation2]
                %s1032 = smul.u32 128, %s1028
                %s1033 = sshra.s32 %s1032, 4
                %s1034 = scalar_lea.vmem %s665, %s1033
                // While loop
                $region89: #{gcn_layer_st_forward.3} parent=80 // loop_pre_header
                  _
                $region90: #{gcn_layer_st_forward.3} parent=80 // loop_header
                  %s1038 = sphi 0, %s1040
                  %p1039 = scmp.ge.s32.totalorder %s1038, %s1027
                  %s1043 = sphi 0, %s1050
                  %s1044 = sphi %s1031, %s1053
                  %s1045 = sphi %s1034, %s1054
                $region91: #{gcn_layer_st_forward.3} parent=80 // loop_header_branch
                  %1042 = sbr.rel (%p1039) target = $region95
                $region92: #{gcn_layer_st_forward.3} parent=80 // loop_body
                  %v1046 = vld [vmem:[%s1044] sm:$0xff]
                  %1047 = vst [vmem:[%s1045] sm:$0xff] %v1046
                  %s1048 = sadd.s32 1, %s1043
                  %p1049 = scmp.ge.s32.totalorder %s1048, %s1027
                  %s1050 = scalar_select %p1049, 0, %s1048
                  %s1051 = smul.u32 %s1050, 8
                  %s1052 = smul.u32 %s1050, 8
                  %s1053 = scalar_lea.vmem %s1031, %s1051 [#allocation2]
                  %s1054 = scalar_lea.vmem %s1034, %s1052
                $region93: #{gcn_layer_st_forward.3} parent=80 // loop_footer
                  %s1040 = sadd.s32 %s1038, 1
                $region94: #{gcn_layer_st_forward.3} parent=80 // loop_footer_branch
                  %1037 = sbr.rel target = $region90
                $region95: #{gcn_layer_st_forward.3} parent=80 // loop_exit
                  _
                %s1055 = sshllo.u32 0, %s873
                loop: start=0, step=1, limit=1
                $region96: #{gcn_layer_st_forward.3} parent=80 // loop_pre_header
                  _
                $region97: #{gcn_layer_st_forward.3} parent=80 // loop_header
                  %s1057 = sphi 0, %s1061
                  %p1058 = scmp.ge.s32.totalorder %s1057, 1
                  %s1062 = sphi %s875, %s875
                  %s1063 = sphi %s877, %s877
                $region98: #{gcn_layer_st_forward.3} parent=80 // loop_header_branch
                  %1060 = sbr.rel (%p1058) target = $region102
                $region99: #{gcn_layer_st_forward.3} parent=80 // loop_body
                  %v1064 = vld [vmem:[%s1062] sm:%s1055]
                  %1065 = vst [vmem:[%s1063] sm:%s1055] %v1064
                $region100: #{gcn_layer_st_forward.3} parent=80 // loop_footer
                  %s1061 = sadd.s32 1, %s1057
                $region101: #{gcn_layer_st_forward.3} parent=80 // loop_footer_branch
                  %1056 = sbr.rel target = $region97
                $region102: #{gcn_layer_st_forward.3} parent=80 // loop_exit
                  _
              $region81: #{gcn_layer_st_forward.3} parent=47 // pred_fallthru
                _
            $region48: #{gcn_layer_st_forward.3} parent=43 // pred_fallthru
              _
            // Predicated region
            $region49: #{gcn_layer_st_forward.3} parent=43 // pred_check
              %p674 = pneg %p670
            $region50: #{gcn_layer_st_forward.3} parent=43 // pred_check_branch
              %676 = sbr.rel (%p674) target = $region52
            $region51: #{gcn_layer_st_forward.3} parent=43 // pred_region
              %s677 = sshllo.u32 0, %s666
              loop: start=0, step=1, limit=1
              $region53: #{gcn_layer_st_forward.3} parent=51 // loop_pre_header
                _
              $region54: #{gcn_layer_st_forward.3} parent=51 // loop_header
                %s679 = sphi 0, %s683
                %p680 = scmp.ge.s32.totalorder %s679, 1
                %s684 = sphi %s646, %s646
                %s685 = sphi %s665, %s665
              $region55: #{gcn_layer_st_forward.3} parent=51 // loop_header_branch
                %682 = sbr.rel (%p680) target = $region59
              $region56: #{gcn_layer_st_forward.3} parent=51 // loop_body
                %v686 = vld [vmem:[%s684] sm:%s677]
                %687 = vst [vmem:[%s685] sm:%s677] %v686
              $region57: #{gcn_layer_st_forward.3} parent=51 // loop_footer
                %s683 = sadd.s32 1, %s679
              $region58: #{gcn_layer_st_forward.3} parent=51 // loop_footer_branch
                %678 = sbr.rel target = $region54
              $region59: #{gcn_layer_st_forward.3} parent=51 // loop_exit
                _
            $region52: #{gcn_layer_st_forward.3} parent=43 // pred_fallthru
              _
          $region44: #{gcn_layer_st_forward.3} parent=39 // pred_fallthru
            _
          %1066 = vnop
        $region40: #{gcn_layer_st_forward.3} parent=35 // pred_fallthru
          _
        // Predicated region
        $region103: #{gcn_layer_st_forward.3} parent=35 // pred_check
          %p1067 = pneg %p156
        $region104: #{gcn_layer_st_forward.3} parent=35 // pred_check_branch
          %1069 = sbr.rel (%p1067) target = $region106
        $region105: #{gcn_layer_st_forward.3} parent=35 // pred_region
          %s1070 = smul.u32 4, %s18
          %s1071 = ssub.s32 7, %s1070
          %p1072 = scmp.lt.s32.totalorder %s1071, 4
          %s1073 = scalar_select %p1072, %s1071, 4
          %s1074 = smul.u32 16, %s1073
          %p1075 = scmp.ne.s32.totalorder 0, %s1074
          %s1076 = scalar_lea.vmem %s5, %s1070
          // Predicated region
          $region107: #{gcn_layer_st_forward.3} parent=105 // pred_check
            %p1077 = pneg %p1075
          $region108: #{gcn_layer_st_forward.3} parent=105 // pred_check_branch
            %1079 = sbr.rel (%p1077) target = $region110
          $region109: #{gcn_layer_st_forward.3} parent=105 // pred_region
            %p1080 = scmp.lt.u32.totalorder %s1073, 8
            %p1081 = pneg %p1080
            // Predicated region
            $region111: #{gcn_layer_st_forward.3} parent=109 // pred_check
              _
            $region112: #{gcn_layer_st_forward.3} parent=109 // pred_check_branch
              %1083 = sbr.rel (%p1080) target = $region114
            $region113: #{gcn_layer_st_forward.3} parent=109 // pred_region
              %s1098 = sand.u32 %s1073, 7
              %p1099 = scmp.eq.s32.totalorder %s1098, 0
              // Predicated region
              $region126: #{gcn_layer_st_forward.3} parent=113 // pred_check
                %p1100 = pneg %p1099
              $region127: #{gcn_layer_st_forward.3} parent=113 // pred_check_branch
                %1102 = sbr.rel (%p1100) target = $region129
              $region128: #{gcn_layer_st_forward.3} parent=113 // pred_region
                %s1103 = sshrl.u32 %s1073, 3
                %s1104 = sshrl.u32 %s1103, 6
                // While loop
                $region130: #{gcn_layer_st_forward.3} parent=128 // loop_pre_header
                  _
                $region131: #{gcn_layer_st_forward.3} parent=128 // loop_header
                  %s1108 = sphi 0, %s1110
                  %p1109 = scmp.ge.s32.totalorder %s1108, %s1104
                  %s1113 = sphi 0, %s1246
                  %s1114 = sphi %s650, %s1249
                  %s1115 = sphi %s1076, %s1250
                $region132: #{gcn_layer_st_forward.3} parent=128 // loop_header_branch
                  %1112 = sbr.rel (%p1109) target = $region136
                $region133: #{gcn_layer_st_forward.3} parent=128 // loop_body
                  %v1116 = vld [vmem:[%s1114] sm:$0xff]
                  %1117 = vst [vmem:[%s1115] sm:$0xff] %v1116
                  %v1118 = vld [vmem:[%s1114 + $0x8] sm:$0xff]
                  %1119 = vst [vmem:[%s1115 + $0x8] sm:$0xff] %v1118
                  %v1120 = vld [vmem:[%s1114 + $0x10] sm:$0xff]
                  %1121 = vst [vmem:[%s1115 + $0x10] sm:$0xff] %v1120
                  %v1122 = vld [vmem:[%s1114 + $0x18] sm:$0xff]
                  %1123 = vst [vmem:[%s1115 + $0x18] sm:$0xff] %v1122
                  %v1124 = vld [vmem:[%s1114 + $0x20] sm:$0xff]
                  %1125 = vst [vmem:[%s1115 + $0x20] sm:$0xff] %v1124
                  %v1126 = vld [vmem:[%s1114 + $0x28] sm:$0xff]
                  %1127 = vst [vmem:[%s1115 + $0x28] sm:$0xff] %v1126
                  %v1128 = vld [vmem:[%s1114 + $0x30] sm:$0xff]
                  %1129 = vst [vmem:[%s1115 + $0x30] sm:$0xff] %v1128
                  %v1130 = vld [vmem:[%s1114 + $0x38] sm:$0xff]
                  %1131 = vst [vmem:[%s1115 + $0x38] sm:$0xff] %v1130
                  %v1132 = vld [vmem:[%s1114 + $0x40] sm:$0xff]
                  %1133 = vst [vmem:[%s1115 + $0x40] sm:$0xff] %v1132
                  %v1134 = vld [vmem:[%s1114 + $0x48] sm:$0xff]
                  %1135 = vst [vmem:[%s1115 + $0x48] sm:$0xff] %v1134
                  %v1136 = vld [vmem:[%s1114 + $0x50] sm:$0xff]
                  %1137 = vst [vmem:[%s1115 + $0x50] sm:$0xff] %v1136
                  %v1138 = vld [vmem:[%s1114 + $0x58] sm:$0xff]
                  %1139 = vst [vmem:[%s1115 + $0x58] sm:$0xff] %v1138
                  %v1140 = vld [vmem:[%s1114 + $0x60] sm:$0xff]
                  %1141 = vst [vmem:[%s1115 + $0x60] sm:$0xff] %v1140
                  %v1142 = vld [vmem:[%s1114 + $0x68] sm:$0xff]
                  %1143 = vst [vmem:[%s1115 + $0x68] sm:$0xff] %v1142
                  %v1144 = vld [vmem:[%s1114 + $0x70] sm:$0xff]
                  %1145 = vst [vmem:[%s1115 + $0x70] sm:$0xff] %v1144
                  %v1146 = vld [vmem:[%s1114 + $0x78] sm:$0xff]
                  %1147 = vst [vmem:[%s1115 + $0x78] sm:$0xff] %v1146
                  %v1148 = vld [vmem:[%s1114 + $0x80] sm:$0xff]
                  %1149 = vst [vmem:[%s1115 + $0x80] sm:$0xff] %v1148
                  %v1150 = vld [vmem:[%s1114 + $0x88] sm:$0xff]
                  %1151 = vst [vmem:[%s1115 + $0x88] sm:$0xff] %v1150
                  %v1152 = vld [vmem:[%s1114 + $0x90] sm:$0xff]
                  %1153 = vst [vmem:[%s1115 + $0x90] sm:$0xff] %v1152
                  %v1154 = vld [vmem:[%s1114 + $0x98] sm:$0xff]
                  %1155 = vst [vmem:[%s1115 + $0x98] sm:$0xff] %v1154
                  %v1156 = vld [vmem:[%s1114 + $0xa0] sm:$0xff]
                  %1157 = vst [vmem:[%s1115 + $0xa0] sm:$0xff] %v1156
                  %v1158 = vld [vmem:[%s1114 + $0xa8] sm:$0xff]
                  %1159 = vst [vmem:[%s1115 + $0xa8] sm:$0xff] %v1158
                  %v1160 = vld [vmem:[%s1114 + $0xb0] sm:$0xff]
                  %1161 = vst [vmem:[%s1115 + $0xb0] sm:$0xff] %v1160
                  %v1162 = vld [vmem:[%s1114 + $0xb8] sm:$0xff]
                  %1163 = vst [vmem:[%s1115 + $0xb8] sm:$0xff] %v1162
                  %v1164 = vld [vmem:[%s1114 + $0xc0] sm:$0xff]
                  %1165 = vst [vmem:[%s1115 + $0xc0] sm:$0xff] %v1164
                  %v1166 = vld [vmem:[%s1114 + $0xc8] sm:$0xff]
                  %1167 = vst [vmem:[%s1115 + $0xc8] sm:$0xff] %v1166
                  %v1168 = vld [vmem:[%s1114 + $0xd0] sm:$0xff]
                  %1169 = vst [vmem:[%s1115 + $0xd0] sm:$0xff] %v1168
                  %v1170 = vld [vmem:[%s1114 + $0xd8] sm:$0xff]
                  %1171 = vst [vmem:[%s1115 + $0xd8] sm:$0xff] %v1170
                  %v1172 = vld [vmem:[%s1114 + $0xe0] sm:$0xff]
                  %1173 = vst [vmem:[%s1115 + $0xe0] sm:$0xff] %v1172
                  %v1174 = vld [vmem:[%s1114 + $0xe8] sm:$0xff]
                  %1175 = vst [vmem:[%s1115 + $0xe8] sm:$0xff] %v1174
                  %v1176 = vld [vmem:[%s1114 + $0xf0] sm:$0xff]
                  %1177 = vst [vmem:[%s1115 + $0xf0] sm:$0xff] %v1176
                  %v1178 = vld [vmem:[%s1114 + $0xf8] sm:$0xff]
                  %1179 = vst [vmem:[%s1115 + $0xf8] sm:$0xff] %v1178
                  %v1180 = vld [vmem:[%s1114 + $0x100] sm:$0xff]
                  %1181 = vst [vmem:[%s1115 + $0x100] sm:$0xff] %v1180
                  %v1182 = vld [vmem:[%s1114 + $0x108] sm:$0xff]
                  %1183 = vst [vmem:[%s1115 + $0x108] sm:$0xff] %v1182
                  %v1184 = vld [vmem:[%s1114 + $0x110] sm:$0xff]
                  %1185 = vst [vmem:[%s1115 + $0x110] sm:$0xff] %v1184
                  %v1186 = vld [vmem:[%s1114 + $0x118] sm:$0xff]
                  %1187 = vst [vmem:[%s1115 + $0x118] sm:$0xff] %v1186
                  %v1188 = vld [vmem:[%s1114 + $0x120] sm:$0xff]
                  %1189 = vst [vmem:[%s1115 + $0x120] sm:$0xff] %v1188
                  %v1190 = vld [vmem:[%s1114 + $0x128] sm:$0xff]
                  %1191 = vst [vmem:[%s1115 + $0x128] sm:$0xff] %v1190
                  %v1192 = vld [vmem:[%s1114 + $0x130] sm:$0xff]
                  %1193 = vst [vmem:[%s1115 + $0x130] sm:$0xff] %v1192
                  %v1194 = vld [vmem:[%s1114 + $0x138] sm:$0xff]
                  %1195 = vst [vmem:[%s1115 + $0x138] sm:$0xff] %v1194
                  %v1196 = vld [vmem:[%s1114 + $0x140] sm:$0xff]
                  %1197 = vst [vmem:[%s1115 + $0x140] sm:$0xff] %v1196
                  %v1198 = vld [vmem:[%s1114 + $0x148] sm:$0xff]
                  %1199 = vst [vmem:[%s1115 + $0x148] sm:$0xff] %v1198
                  %v1200 = vld [vmem:[%s1114 + $0x150] sm:$0xff]
                  %1201 = vst [vmem:[%s1115 + $0x150] sm:$0xff] %v1200
                  %v1202 = vld [vmem:[%s1114 + $0x158] sm:$0xff]
                  %1203 = vst [vmem:[%s1115 + $0x158] sm:$0xff] %v1202
                  %v1204 = vld [vmem:[%s1114 + $0x160] sm:$0xff]
                  %1205 = vst [vmem:[%s1115 + $0x160] sm:$0xff] %v1204
                  %v1206 = vld [vmem:[%s1114 + $0x168] sm:$0xff]
                  %1207 = vst [vmem:[%s1115 + $0x168] sm:$0xff] %v1206
                  %v1208 = vld [vmem:[%s1114 + $0x170] sm:$0xff]
                  %1209 = vst [vmem:[%s1115 + $0x170] sm:$0xff] %v1208
                  %v1210 = vld [vmem:[%s1114 + $0x178] sm:$0xff]
                  %1211 = vst [vmem:[%s1115 + $0x178] sm:$0xff] %v1210
                  %v1212 = vld [vmem:[%s1114 + $0x180] sm:$0xff]
                  %1213 = vst [vmem:[%s1115 + $0x180] sm:$0xff] %v1212
                  %v1214 = vld [vmem:[%s1114 + $0x188] sm:$0xff]
                  %1215 = vst [vmem:[%s1115 + $0x188] sm:$0xff] %v1214
                  %v1216 = vld [vmem:[%s1114 + $0x190] sm:$0xff]
                  %1217 = vst [vmem:[%s1115 + $0x190] sm:$0xff] %v1216
                  %v1218 = vld [vmem:[%s1114 + $0x198] sm:$0xff]
                  %1219 = vst [vmem:[%s1115 + $0x198] sm:$0xff] %v1218
                  %v1220 = vld [vmem:[%s1114 + $0x1a0] sm:$0xff]
                  %1221 = vst [vmem:[%s1115 + $0x1a0] sm:$0xff] %v1220
                  %v1222 = vld [vmem:[%s1114 + $0x1a8] sm:$0xff]
                  %1223 = vst [vmem:[%s1115 + $0x1a8] sm:$0xff] %v1222
                  %v1224 = vld [vmem:[%s1114 + $0x1b0] sm:$0xff]
                  %1225 = vst [vmem:[%s1115 + $0x1b0] sm:$0xff] %v1224
                  %v1226 = vld [vmem:[%s1114 + $0x1b8] sm:$0xff]
                  %1227 = vst [vmem:[%s1115 + $0x1b8] sm:$0xff] %v1226
                  %v1228 = vld [vmem:[%s1114 + $0x1c0] sm:$0xff]
                  %1229 = vst [vmem:[%s1115 + $0x1c0] sm:$0xff] %v1228
                  %v1230 = vld [vmem:[%s1114 + $0x1c8] sm:$0xff]
                  %1231 = vst [vmem:[%s1115 + $0x1c8] sm:$0xff] %v1230
                  %v1232 = vld [vmem:[%s1114 + $0x1d0] sm:$0xff]
                  %1233 = vst [vmem:[%s1115 + $0x1d0] sm:$0xff] %v1232
                  %v1234 = vld [vmem:[%s1114 + $0x1d8] sm:$0xff]
                  %1235 = vst [vmem:[%s1115 + $0x1d8] sm:$0xff] %v1234
                  %v1236 = vld [vmem:[%s1114 + $0x1e0] sm:$0xff]
                  %1237 = vst [vmem:[%s1115 + $0x1e0] sm:$0xff] %v1236
                  %v1238 = vld [vmem:[%s1114 + $0x1e8] sm:$0xff]
                  %1239 = vst [vmem:[%s1115 + $0x1e8] sm:$0xff] %v1238
                  %v1240 = vld [vmem:[%s1114 + $0x1f0] sm:$0xff]
                  %1241 = vst [vmem:[%s1115 + $0x1f0] sm:$0xff] %v1240
                  %v1242 = vld [vmem:[%s1114 + $0x1f8] sm:$0xff]
                  %1243 = vst [vmem:[%s1115 + $0x1f8] sm:$0xff] %v1242
                  %s1244 = sadd.s32 1, %s1113
                  %p1245 = scmp.ge.s32.totalorder %s1244, %s1104
                  %s1246 = scalar_select %p1245, 0, %s1244
                  %s1247 = smul.u32 %s1246, 512
                  %s1248 = smul.u32 %s1246, 512
                  %s1249 = scalar_lea.vmem %s650, %s1247 [#allocation3]
                  %s1250 = scalar_lea.vmem %s1076, %s1248
                $region134: #{gcn_layer_st_forward.3} parent=128 // loop_footer
                  %s1110 = sadd.s32 %s1108, 1
                $region135: #{gcn_layer_st_forward.3} parent=128 // loop_footer_branch
                  %1107 = sbr.rel target = $region131
                $region136: #{gcn_layer_st_forward.3} parent=128 // loop_exit
                  _
                %s1251 = sshrl.u32 %s1103, 6
                %s1252 = sand.u32 %s1103, 63
                %s1253 = smul.u32 %s1251, 64
                %s1254 = smul.u32 128, %s1253
                %s1255 = sshra.s32 %s1254, 4
                %s1256 = scalar_lea.vmem %s650, %s1255 [#allocation3]
                %s1257 = smul.u32 128, %s1253
                %s1258 = sshra.s32 %s1257, 4
                %s1259 = scalar_lea.vmem %s1076, %s1258
                // While loop
                $region137: #{gcn_layer_st_forward.3} parent=128 // loop_pre_header
                  _
                $region138: #{gcn_layer_st_forward.3} parent=128 // loop_header
                  %s1263 = sphi 0, %s1265
                  %p1264 = scmp.ge.s32.totalorder %s1263, %s1252
                  %s1268 = sphi 0, %s1275
                  %s1269 = sphi %s1256, %s1278
                  %s1270 = sphi %s1259, %s1279
                $region139: #{gcn_layer_st_forward.3} parent=128 // loop_header_branch
                  %1267 = sbr.rel (%p1264) target = $region143
                $region140: #{gcn_layer_st_forward.3} parent=128 // loop_body
                  %v1271 = vld [vmem:[%s1269] sm:$0xff]
                  %1272 = vst [vmem:[%s1270] sm:$0xff] %v1271
                  %s1273 = sadd.s32 1, %s1268
                  %p1274 = scmp.ge.s32.totalorder %s1273, %s1252
                  %s1275 = scalar_select %p1274, 0, %s1273
                  %s1276 = smul.u32 %s1275, 8
                  %s1277 = smul.u32 %s1275, 8
                  %s1278 = scalar_lea.vmem %s1256, %s1276 [#allocation3]
                  %s1279 = scalar_lea.vmem %s1259, %s1277
                $region141: #{gcn_layer_st_forward.3} parent=128 // loop_footer
                  %s1265 = sadd.s32 %s1263, 1
                $region142: #{gcn_layer_st_forward.3} parent=128 // loop_footer_branch
                  %1262 = sbr.rel target = $region138
                $region143: #{gcn_layer_st_forward.3} parent=128 // loop_exit
                  _
              $region129: #{gcn_layer_st_forward.3} parent=113 // pred_fallthru
                _
              %p1280 = pneg %p1099
              // Predicated region
              $region144: #{gcn_layer_st_forward.3} parent=113 // pred_check
                _
              $region145: #{gcn_layer_st_forward.3} parent=113 // pred_check_branch
                %1282 = sbr.rel (%p1099) target = $region147
              $region146: #{gcn_layer_st_forward.3} parent=113 // pred_region
                %s1283 = sand.u32 %s1073, 7
                %s1284 = ssub.s32 %s1073, %s1283
                %s1285 = scalar_lea.vmem %s650, %s1284 [#allocation3]
                %s1286 = ssub.s32 %s1073, %s1283
                %s1287 = scalar_lea.vmem %s1076, %s1286
                %s1288 = sshrl.u32 %s1073, 3
                %s1289 = sshrl.u32 %s1288, 6
                // While loop
                $region148: #{gcn_layer_st_forward.3} parent=146 // loop_pre_header
                  _
                $region149: #{gcn_layer_st_forward.3} parent=146 // loop_header
                  %s1293 = sphi 0, %s1295
                  %p1294 = scmp.ge.s32.totalorder %s1293, %s1289
                  %s1298 = sphi 0, %s1431
                  %s1299 = sphi %s650, %s1434
                  %s1300 = sphi %s1076, %s1435
                $region150: #{gcn_layer_st_forward.3} parent=146 // loop_header_branch
                  %1297 = sbr.rel (%p1294) target = $region154
                $region151: #{gcn_layer_st_forward.3} parent=146 // loop_body
                  %v1301 = vld [vmem:[%s1299] sm:$0xff]
                  %1302 = vst [vmem:[%s1300] sm:$0xff] %v1301
                  %v1303 = vld [vmem:[%s1299 + $0x8] sm:$0xff]
                  %1304 = vst [vmem:[%s1300 + $0x8] sm:$0xff] %v1303
                  %v1305 = vld [vmem:[%s1299 + $0x10] sm:$0xff]
                  %1306 = vst [vmem:[%s1300 + $0x10] sm:$0xff] %v1305
                  %v1307 = vld [vmem:[%s1299 + $0x18] sm:$0xff]
                  %1308 = vst [vmem:[%s1300 + $0x18] sm:$0xff] %v1307
                  %v1309 = vld [vmem:[%s1299 + $0x20] sm:$0xff]
                  %1310 = vst [vmem:[%s1300 + $0x20] sm:$0xff] %v1309
                  %v1311 = vld [vmem:[%s1299 + $0x28] sm:$0xff]
                  %1312 = vst [vmem:[%s1300 + $0x28] sm:$0xff] %v1311
                  %v1313 = vld [vmem:[%s1299 + $0x30] sm:$0xff]
                  %1314 = vst [vmem:[%s1300 + $0x30] sm:$0xff] %v1313
                  %v1315 = vld [vmem:[%s1299 + $0x38] sm:$0xff]
                  %1316 = vst [vmem:[%s1300 + $0x38] sm:$0xff] %v1315
                  %v1317 = vld [vmem:[%s1299 + $0x40] sm:$0xff]
                  %1318 = vst [vmem:[%s1300 + $0x40] sm:$0xff] %v1317
                  %v1319 = vld [vmem:[%s1299 + $0x48] sm:$0xff]
                  %1320 = vst [vmem:[%s1300 + $0x48] sm:$0xff] %v1319
                  %v1321 = vld [vmem:[%s1299 + $0x50] sm:$0xff]
                  %1322 = vst [vmem:[%s1300 + $0x50] sm:$0xff] %v1321
                  %v1323 = vld [vmem:[%s1299 + $0x58] sm:$0xff]
                  %1324 = vst [vmem:[%s1300 + $0x58] sm:$0xff] %v1323
                  %v1325 = vld [vmem:[%s1299 + $0x60] sm:$0xff]
                  %1326 = vst [vmem:[%s1300 + $0x60] sm:$0xff] %v1325
                  %v1327 = vld [vmem:[%s1299 + $0x68] sm:$0xff]
                  %1328 = vst [vmem:[%s1300 + $0x68] sm:$0xff] %v1327
                  %v1329 = vld [vmem:[%s1299 + $0x70] sm:$0xff]
                  %1330 = vst [vmem:[%s1300 + $0x70] sm:$0xff] %v1329
                  %v1331 = vld [vmem:[%s1299 + $0x78] sm:$0xff]
                  %1332 = vst [vmem:[%s1300 + $0x78] sm:$0xff] %v1331
                  %v1333 = vld [vmem:[%s1299 + $0x80] sm:$0xff]
                  %1334 = vst [vmem:[%s1300 + $0x80] sm:$0xff] %v1333
                  %v1335 = vld [vmem:[%s1299 + $0x88] sm:$0xff]
                  %1336 = vst [vmem:[%s1300 + $0x88] sm:$0xff] %v1335
                  %v1337 = vld [vmem:[%s1299 + $0x90] sm:$0xff]
                  %1338 = vst [vmem:[%s1300 + $0x90] sm:$0xff] %v1337
                  %v1339 = vld [vmem:[%s1299 + $0x98] sm:$0xff]
                  %1340 = vst [vmem:[%s1300 + $0x98] sm:$0xff] %v1339
                  %v1341 = vld [vmem:[%s1299 + $0xa0] sm:$0xff]
                  %1342 = vst [vmem:[%s1300 + $0xa0] sm:$0xff] %v1341
                  %v1343 = vld [vmem:[%s1299 + $0xa8] sm:$0xff]
                  %1344 = vst [vmem:[%s1300 + $0xa8] sm:$0xff] %v1343
                  %v1345 = vld [vmem:[%s1299 + $0xb0] sm:$0xff]
                  %1346 = vst [vmem:[%s1300 + $0xb0] sm:$0xff] %v1345
                  %v1347 = vld [vmem:[%s1299 + $0xb8] sm:$0xff]
                  %1348 = vst [vmem:[%s1300 + $0xb8] sm:$0xff] %v1347
                  %v1349 = vld [vmem:[%s1299 + $0xc0] sm:$0xff]
                  %1350 = vst [vmem:[%s1300 + $0xc0] sm:$0xff] %v1349
                  %v1351 = vld [vmem:[%s1299 + $0xc8] sm:$0xff]
                  %1352 = vst [vmem:[%s1300 + $0xc8] sm:$0xff] %v1351
                  %v1353 = vld [vmem:[%s1299 + $0xd0] sm:$0xff]
                  %1354 = vst [vmem:[%s1300 + $0xd0] sm:$0xff] %v1353
                  %v1355 = vld [vmem:[%s1299 + $0xd8] sm:$0xff]
                  %1356 = vst [vmem:[%s1300 + $0xd8] sm:$0xff] %v1355
                  %v1357 = vld [vmem:[%s1299 + $0xe0] sm:$0xff]
                  %1358 = vst [vmem:[%s1300 + $0xe0] sm:$0xff] %v1357
                  %v1359 = vld [vmem:[%s1299 + $0xe8] sm:$0xff]
                  %1360 = vst [vmem:[%s1300 + $0xe8] sm:$0xff] %v1359
                  %v1361 = vld [vmem:[%s1299 + $0xf0] sm:$0xff]
                  %1362 = vst [vmem:[%s1300 + $0xf0] sm:$0xff] %v1361
                  %v1363 = vld [vmem:[%s1299 + $0xf8] sm:$0xff]
                  %1364 = vst [vmem:[%s1300 + $0xf8] sm:$0xff] %v1363
                  %v1365 = vld [vmem:[%s1299 + $0x100] sm:$0xff]
                  %1366 = vst [vmem:[%s1300 + $0x100] sm:$0xff] %v1365
                  %v1367 = vld [vmem:[%s1299 + $0x108] sm:$0xff]
                  %1368 = vst [vmem:[%s1300 + $0x108] sm:$0xff] %v1367
                  %v1369 = vld [vmem:[%s1299 + $0x110] sm:$0xff]
                  %1370 = vst [vmem:[%s1300 + $0x110] sm:$0xff] %v1369
                  %v1371 = vld [vmem:[%s1299 + $0x118] sm:$0xff]
                  %1372 = vst [vmem:[%s1300 + $0x118] sm:$0xff] %v1371
                  %v1373 = vld [vmem:[%s1299 + $0x120] sm:$0xff]
                  %1374 = vst [vmem:[%s1300 + $0x120] sm:$0xff] %v1373
                  %v1375 = vld [vmem:[%s1299 + $0x128] sm:$0xff]
                  %1376 = vst [vmem:[%s1300 + $0x128] sm:$0xff] %v1375
                  %v1377 = vld [vmem:[%s1299 + $0x130] sm:$0xff]
                  %1378 = vst [vmem:[%s1300 + $0x130] sm:$0xff] %v1377
                  %v1379 = vld [vmem:[%s1299 + $0x138] sm:$0xff]
                  %1380 = vst [vmem:[%s1300 + $0x138] sm:$0xff] %v1379
                  %v1381 = vld [vmem:[%s1299 + $0x140] sm:$0xff]
                  %1382 = vst [vmem:[%s1300 + $0x140] sm:$0xff] %v1381
                  %v1383 = vld [vmem:[%s1299 + $0x148] sm:$0xff]
                  %1384 = vst [vmem:[%s1300 + $0x148] sm:$0xff] %v1383
                  %v1385 = vld [vmem:[%s1299 + $0x150] sm:$0xff]
                  %1386 = vst [vmem:[%s1300 + $0x150] sm:$0xff] %v1385
                  %v1387 = vld [vmem:[%s1299 + $0x158] sm:$0xff]
                  %1388 = vst [vmem:[%s1300 + $0x158] sm:$0xff] %v1387
                  %v1389 = vld [vmem:[%s1299 + $0x160] sm:$0xff]
                  %1390 = vst [vmem:[%s1300 + $0x160] sm:$0xff] %v1389
                  %v1391 = vld [vmem:[%s1299 + $0x168] sm:$0xff]
                  %1392 = vst [vmem:[%s1300 + $0x168] sm:$0xff] %v1391
                  %v1393 = vld [vmem:[%s1299 + $0x170] sm:$0xff]
                  %1394 = vst [vmem:[%s1300 + $0x170] sm:$0xff] %v1393
                  %v1395 = vld [vmem:[%s1299 + $0x178] sm:$0xff]
                  %1396 = vst [vmem:[%s1300 + $0x178] sm:$0xff] %v1395
                  %v1397 = vld [vmem:[%s1299 + $0x180] sm:$0xff]
                  %1398 = vst [vmem:[%s1300 + $0x180] sm:$0xff] %v1397
                  %v1399 = vld [vmem:[%s1299 + $0x188] sm:$0xff]
                  %1400 = vst [vmem:[%s1300 + $0x188] sm:$0xff] %v1399
                  %v1401 = vld [vmem:[%s1299 + $0x190] sm:$0xff]
                  %1402 = vst [vmem:[%s1300 + $0x190] sm:$0xff] %v1401
                  %v1403 = vld [vmem:[%s1299 + $0x198] sm:$0xff]
                  %1404 = vst [vmem:[%s1300 + $0x198] sm:$0xff] %v1403
                  %v1405 = vld [vmem:[%s1299 + $0x1a0] sm:$0xff]
                  %1406 = vst [vmem:[%s1300 + $0x1a0] sm:$0xff] %v1405
                  %v1407 = vld [vmem:[%s1299 + $0x1a8] sm:$0xff]
                  %1408 = vst [vmem:[%s1300 + $0x1a8] sm:$0xff] %v1407
                  %v1409 = vld [vmem:[%s1299 + $0x1b0] sm:$0xff]
                  %1410 = vst [vmem:[%s1300 + $0x1b0] sm:$0xff] %v1409
                  %v1411 = vld [vmem:[%s1299 + $0x1b8] sm:$0xff]
                  %1412 = vst [vmem:[%s1300 + $0x1b8] sm:$0xff] %v1411
                  %v1413 = vld [vmem:[%s1299 + $0x1c0] sm:$0xff]
                  %1414 = vst [vmem:[%s1300 + $0x1c0] sm:$0xff] %v1413
                  %v1415 = vld [vmem:[%s1299 + $0x1c8] sm:$0xff]
                  %1416 = vst [vmem:[%s1300 + $0x1c8] sm:$0xff] %v1415
                  %v1417 = vld [vmem:[%s1299 + $0x1d0] sm:$0xff]
                  %1418 = vst [vmem:[%s1300 + $0x1d0] sm:$0xff] %v1417
                  %v1419 = vld [vmem:[%s1299 + $0x1d8] sm:$0xff]
                  %1420 = vst [vmem:[%s1300 + $0x1d8] sm:$0xff] %v1419
                  %v1421 = vld [vmem:[%s1299 + $0x1e0] sm:$0xff]
                  %1422 = vst [vmem:[%s1300 + $0x1e0] sm:$0xff] %v1421
                  %v1423 = vld [vmem:[%s1299 + $0x1e8] sm:$0xff]
                  %1424 = vst [vmem:[%s1300 + $0x1e8] sm:$0xff] %v1423
                  %v1425 = vld [vmem:[%s1299 + $0x1f0] sm:$0xff]
                  %1426 = vst [vmem:[%s1300 + $0x1f0] sm:$0xff] %v1425
                  %v1427 = vld [vmem:[%s1299 + $0x1f8] sm:$0xff]
                  %1428 = vst [vmem:[%s1300 + $0x1f8] sm:$0xff] %v1427
                  %s1429 = sadd.s32 1, %s1298
                  %p1430 = scmp.ge.s32.totalorder %s1429, %s1289
                  %s1431 = scalar_select %p1430, 0, %s1429
                  %s1432 = smul.u32 %s1431, 512
                  %s1433 = smul.u32 %s1431, 512
                  %s1434 = scalar_lea.vmem %s650, %s1432 [#allocation3]
                  %s1435 = scalar_lea.vmem %s1076, %s1433
                $region152: #{gcn_layer_st_forward.3} parent=146 // loop_footer
                  %s1295 = sadd.s32 %s1293, 1
                $region153: #{gcn_layer_st_forward.3} parent=146 // loop_footer_branch
                  %1292 = sbr.rel target = $region149
                $region154: #{gcn_layer_st_forward.3} parent=146 // loop_exit
                  _
                %s1436 = sshrl.u32 %s1288, 6
                %s1437 = sand.u32 %s1288, 63
                %s1438 = smul.u32 %s1436, 64
                %s1439 = smul.u32 128, %s1438
                %s1440 = sshra.s32 %s1439, 4
                %s1441 = scalar_lea.vmem %s650, %s1440 [#allocation3]
                %s1442 = smul.u32 128, %s1438
                %s1443 = sshra.s32 %s1442, 4
                %s1444 = scalar_lea.vmem %s1076, %s1443
                // While loop
                $region155: #{gcn_layer_st_forward.3} parent=146 // loop_pre_header
                  _
                $region156: #{gcn_layer_st_forward.3} parent=146 // loop_header
                  %s1448 = sphi 0, %s1450
                  %p1449 = scmp.ge.s32.totalorder %s1448, %s1437
                  %s1453 = sphi 0, %s1460
                  %s1454 = sphi %s1441, %s1463
                  %s1455 = sphi %s1444, %s1464
                $region157: #{gcn_layer_st_forward.3} parent=146 // loop_header_branch
                  %1452 = sbr.rel (%p1449) target = $region161
                $region158: #{gcn_layer_st_forward.3} parent=146 // loop_body
                  %v1456 = vld [vmem:[%s1454] sm:$0xff]
                  %1457 = vst [vmem:[%s1455] sm:$0xff] %v1456
                  %s1458 = sadd.s32 1, %s1453
                  %p1459 = scmp.ge.s32.totalorder %s1458, %s1437
                  %s1460 = scalar_select %p1459, 0, %s1458
                  %s1461 = smul.u32 %s1460, 8
                  %s1462 = smul.u32 %s1460, 8
                  %s1463 = scalar_lea.vmem %s1441, %s1461 [#allocation3]
                  %s1464 = scalar_lea.vmem %s1444, %s1462
                $region159: #{gcn_layer_st_forward.3} parent=146 // loop_footer
                  %s1450 = sadd.s32 %s1448, 1
                $region160: #{gcn_layer_st_forward.3} parent=146 // loop_footer_branch
                  %1447 = sbr.rel target = $region156
                $region161: #{gcn_layer_st_forward.3} parent=146 // loop_exit
                  _
                %s1465 = sshllo.u32 0, %s1283
                loop: start=0, step=1, limit=1
                $region162: #{gcn_layer_st_forward.3} parent=146 // loop_pre_header
                  _
                $region163: #{gcn_layer_st_forward.3} parent=146 // loop_header
                  %s1467 = sphi 0, %s1471
                  %p1468 = scmp.ge.s32.totalorder %s1467, 1
                  %s1472 = sphi %s1285, %s1285
                  %s1473 = sphi %s1287, %s1287
                $region164: #{gcn_layer_st_forward.3} parent=146 // loop_header_branch
                  %1470 = sbr.rel (%p1468) target = $region168
                $region165: #{gcn_layer_st_forward.3} parent=146 // loop_body
                  %v1474 = vld [vmem:[%s1472] sm:%s1465]
                  %1475 = vst [vmem:[%s1473] sm:%s1465] %v1474
                $region166: #{gcn_layer_st_forward.3} parent=146 // loop_footer
                  %s1471 = sadd.s32 1, %s1467
                $region167: #{gcn_layer_st_forward.3} parent=146 // loop_footer_branch
                  %1466 = sbr.rel target = $region163
                $region168: #{gcn_layer_st_forward.3} parent=146 // loop_exit
                  _
              $region147: #{gcn_layer_st_forward.3} parent=113 // pred_fallthru
                _
            $region114: #{gcn_layer_st_forward.3} parent=109 // pred_fallthru
              _
            // Predicated region
            $region115: #{gcn_layer_st_forward.3} parent=109 // pred_check
              %p1084 = pneg %p1080
            $region116: #{gcn_layer_st_forward.3} parent=109 // pred_check_branch
              %1086 = sbr.rel (%p1084) target = $region118
            $region117: #{gcn_layer_st_forward.3} parent=109 // pred_region
              %s1087 = sshllo.u32 0, %s1073
              loop: start=0, step=1, limit=1
              $region119: #{gcn_layer_st_forward.3} parent=117 // loop_pre_header
                _
              $region120: #{gcn_layer_st_forward.3} parent=117 // loop_header
                %s1089 = sphi 0, %s1093
                %p1090 = scmp.ge.s32.totalorder %s1089, 1
                %s1094 = sphi %s650, %s650
                %s1095 = sphi %s1076, %s1076
              $region121: #{gcn_layer_st_forward.3} parent=117 // loop_header_branch
                %1092 = sbr.rel (%p1090) target = $region125
              $region122: #{gcn_layer_st_forward.3} parent=117 // loop_body
                %v1096 = vld [vmem:[%s1094] sm:%s1087]
                %1097 = vst [vmem:[%s1095] sm:%s1087] %v1096
              $region123: #{gcn_layer_st_forward.3} parent=117 // loop_footer
                %s1093 = sadd.s32 1, %s1089
              $region124: #{gcn_layer_st_forward.3} parent=117 // loop_footer_branch
                %1088 = sbr.rel target = $region120
              $region125: #{gcn_layer_st_forward.3} parent=117 // loop_exit
                _
            $region118: #{gcn_layer_st_forward.3} parent=109 // pred_fallthru
              _
          $region110: #{gcn_layer_st_forward.3} parent=105 // pred_fallthru
            _
          %1476 = vnop
        $region106: #{gcn_layer_st_forward.3} parent=35 // pred_fallthru
          _
        // Predicated region
        $region169: #{gcn_layer_st_forward.3} parent=35 // pred_check
          %p1477 = pneg %p182
        $region170: #{gcn_layer_st_forward.3} parent=35 // pred_check_branch
          %1479 = sbr.rel (%p1477) target = $region172
        $region171: #{gcn_layer_st_forward.3} parent=35 // pred_region
          %s1480 = smul.u32 4, %s18
          %s1481 = ssub.s32 7, %s1480
          %p1482 = scmp.lt.s32.totalorder %s1481, 4
          %s1483 = scalar_select %p1482, %s1481, 4
          %s1484 = smul.u32 16, %s1483
          %p1485 = scmp.ne.s32.totalorder 0, %s1484
          %s1486 = scalar_lea.vmem %s6, %s1480
          // Predicated region
          $region173: #{gcn_layer_st_forward.3} parent=171 // pred_check
            %p1487 = pneg %p1485
          $region174: #{gcn_layer_st_forward.3} parent=171 // pred_check_branch
            %1489 = sbr.rel (%p1487) target = $region176
          $region175: #{gcn_layer_st_forward.3} parent=171 // pred_region
            %p1490 = scmp.lt.u32.totalorder %s1483, 8
            %p1491 = pneg %p1490
            // Predicated region
            $region177: #{gcn_layer_st_forward.3} parent=175 // pred_check
              _
            $region178: #{gcn_layer_st_forward.3} parent=175 // pred_check_branch
              %1493 = sbr.rel (%p1490) target = $region180
            $region179: #{gcn_layer_st_forward.3} parent=175 // pred_region
              %s1508 = sand.u32 %s1483, 7
              %p1509 = scmp.eq.s32.totalorder %s1508, 0
              // Predicated region
              $region192: #{gcn_layer_st_forward.3} parent=179 // pred_check
                %p1510 = pneg %p1509
              $region193: #{gcn_layer_st_forward.3} parent=179 // pred_check_branch
                %1512 = sbr.rel (%p1510) target = $region195
              $region194: #{gcn_layer_st_forward.3} parent=179 // pred_region
                %s1513 = sshrl.u32 %s1483, 3
                %s1514 = sshrl.u32 %s1513, 6
                // While loop
                $region196: #{gcn_layer_st_forward.3} parent=194 // loop_pre_header
                  _
                $region197: #{gcn_layer_st_forward.3} parent=194 // loop_header
                  %s1518 = sphi 0, %s1520
                  %p1519 = scmp.ge.s32.totalorder %s1518, %s1514
                  %s1523 = sphi 0, %s1656
                  %s1524 = sphi %s654, %s1659
                  %s1525 = sphi %s1486, %s1660
                $region198: #{gcn_layer_st_forward.3} parent=194 // loop_header_branch
                  %1522 = sbr.rel (%p1519) target = $region202
                $region199: #{gcn_layer_st_forward.3} parent=194 // loop_body
                  %v1526 = vld [vmem:[%s1524] sm:$0xff]
                  %1527 = vst [vmem:[%s1525] sm:$0xff] %v1526
                  %v1528 = vld [vmem:[%s1524 + $0x8] sm:$0xff]
                  %1529 = vst [vmem:[%s1525 + $0x8] sm:$0xff] %v1528
                  %v1530 = vld [vmem:[%s1524 + $0x10] sm:$0xff]
                  %1531 = vst [vmem:[%s1525 + $0x10] sm:$0xff] %v1530
                  %v1532 = vld [vmem:[%s1524 + $0x18] sm:$0xff]
                  %1533 = vst [vmem:[%s1525 + $0x18] sm:$0xff] %v1532
                  %v1534 = vld [vmem:[%s1524 + $0x20] sm:$0xff]
                  %1535 = vst [vmem:[%s1525 + $0x20] sm:$0xff] %v1534
                  %v1536 = vld [vmem:[%s1524 + $0x28] sm:$0xff]
                  %1537 = vst [vmem:[%s1525 + $0x28] sm:$0xff] %v1536
                  %v1538 = vld [vmem:[%s1524 + $0x30] sm:$0xff]
                  %1539 = vst [vmem:[%s1525 + $0x30] sm:$0xff] %v1538
                  %v1540 = vld [vmem:[%s1524 + $0x38] sm:$0xff]
                  %1541 = vst [vmem:[%s1525 + $0x38] sm:$0xff] %v1540
                  %v1542 = vld [vmem:[%s1524 + $0x40] sm:$0xff]
                  %1543 = vst [vmem:[%s1525 + $0x40] sm:$0xff] %v1542
                  %v1544 = vld [vmem:[%s1524 + $0x48] sm:$0xff]
                  %1545 = vst [vmem:[%s1525 + $0x48] sm:$0xff] %v1544
                  %v1546 = vld [vmem:[%s1524 + $0x50] sm:$0xff]
                  %1547 = vst [vmem:[%s1525 + $0x50] sm:$0xff] %v1546
                  %v1548 = vld [vmem:[%s1524 + $0x58] sm:$0xff]
                  %1549 = vst [vmem:[%s1525 + $0x58] sm:$0xff] %v1548
                  %v1550 = vld [vmem:[%s1524 + $0x60] sm:$0xff]
                  %1551 = vst [vmem:[%s1525 + $0x60] sm:$0xff] %v1550
                  %v1552 = vld [vmem:[%s1524 + $0x68] sm:$0xff]
                  %1553 = vst [vmem:[%s1525 + $0x68] sm:$0xff] %v1552
                  %v1554 = vld [vmem:[%s1524 + $0x70] sm:$0xff]
                  %1555 = vst [vmem:[%s1525 + $0x70] sm:$0xff] %v1554
                  %v1556 = vld [vmem:[%s1524 + $0x78] sm:$0xff]
                  %1557 = vst [vmem:[%s1525 + $0x78] sm:$0xff] %v1556
                  %v1558 = vld [vmem:[%s1524 + $0x80] sm:$0xff]
                  %1559 = vst [vmem:[%s1525 + $0x80] sm:$0xff] %v1558
                  %v1560 = vld [vmem:[%s1524 + $0x88] sm:$0xff]
                  %1561 = vst [vmem:[%s1525 + $0x88] sm:$0xff] %v1560
                  %v1562 = vld [vmem:[%s1524 + $0x90] sm:$0xff]
                  %1563 = vst [vmem:[%s1525 + $0x90] sm:$0xff] %v1562
                  %v1564 = vld [vmem:[%s1524 + $0x98] sm:$0xff]
                  %1565 = vst [vmem:[%s1525 + $0x98] sm:$0xff] %v1564
                  %v1566 = vld [vmem:[%s1524 + $0xa0] sm:$0xff]
                  %1567 = vst [vmem:[%s1525 + $0xa0] sm:$0xff] %v1566
                  %v1568 = vld [vmem:[%s1524 + $0xa8] sm:$0xff]
                  %1569 = vst [vmem:[%s1525 + $0xa8] sm:$0xff] %v1568
                  %v1570 = vld [vmem:[%s1524 + $0xb0] sm:$0xff]
                  %1571 = vst [vmem:[%s1525 + $0xb0] sm:$0xff] %v1570
                  %v1572 = vld [vmem:[%s1524 + $0xb8] sm:$0xff]
                  %1573 = vst [vmem:[%s1525 + $0xb8] sm:$0xff] %v1572
                  %v1574 = vld [vmem:[%s1524 + $0xc0] sm:$0xff]
                  %1575 = vst [vmem:[%s1525 + $0xc0] sm:$0xff] %v1574
                  %v1576 = vld [vmem:[%s1524 + $0xc8] sm:$0xff]
                  %1577 = vst [vmem:[%s1525 + $0xc8] sm:$0xff] %v1576
                  %v1578 = vld [vmem:[%s1524 + $0xd0] sm:$0xff]
                  %1579 = vst [vmem:[%s1525 + $0xd0] sm:$0xff] %v1578
                  %v1580 = vld [vmem:[%s1524 + $0xd8] sm:$0xff]
                  %1581 = vst [vmem:[%s1525 + $0xd8] sm:$0xff] %v1580
                  %v1582 = vld [vmem:[%s1524 + $0xe0] sm:$0xff]
                  %1583 = vst [vmem:[%s1525 + $0xe0] sm:$0xff] %v1582
                  %v1584 = vld [vmem:[%s1524 + $0xe8] sm:$0xff]
                  %1585 = vst [vmem:[%s1525 + $0xe8] sm:$0xff] %v1584
                  %v1586 = vld [vmem:[%s1524 + $0xf0] sm:$0xff]
                  %1587 = vst [vmem:[%s1525 + $0xf0] sm:$0xff] %v1586
                  %v1588 = vld [vmem:[%s1524 + $0xf8] sm:$0xff]
                  %1589 = vst [vmem:[%s1525 + $0xf8] sm:$0xff] %v1588
                  %v1590 = vld [vmem:[%s1524 + $0x100] sm:$0xff]
                  %1591 = vst [vmem:[%s1525 + $0x100] sm:$0xff] %v1590
                  %v1592 = vld [vmem:[%s1524 + $0x108] sm:$0xff]
                  %1593 = vst [vmem:[%s1525 + $0x108] sm:$0xff] %v1592
                  %v1594 = vld [vmem:[%s1524 + $0x110] sm:$0xff]
                  %1595 = vst [vmem:[%s1525 + $0x110] sm:$0xff] %v1594
                  %v1596 = vld [vmem:[%s1524 + $0x118] sm:$0xff]
                  %1597 = vst [vmem:[%s1525 + $0x118] sm:$0xff] %v1596
                  %v1598 = vld [vmem:[%s1524 + $0x120] sm:$0xff]
                  %1599 = vst [vmem:[%s1525 + $0x120] sm:$0xff] %v1598
                  %v1600 = vld [vmem:[%s1524 + $0x128] sm:$0xff]
                  %1601 = vst [vmem:[%s1525 + $0x128] sm:$0xff] %v1600
                  %v1602 = vld [vmem:[%s1524 + $0x130] sm:$0xff]
                  %1603 = vst [vmem:[%s1525 + $0x130] sm:$0xff] %v1602
                  %v1604 = vld [vmem:[%s1524 + $0x138] sm:$0xff]
                  %1605 = vst [vmem:[%s1525 + $0x138] sm:$0xff] %v1604
                  %v1606 = vld [vmem:[%s1524 + $0x140] sm:$0xff]
                  %1607 = vst [vmem:[%s1525 + $0x140] sm:$0xff] %v1606
                  %v1608 = vld [vmem:[%s1524 + $0x148] sm:$0xff]
                  %1609 = vst [vmem:[%s1525 + $0x148] sm:$0xff] %v1608
                  %v1610 = vld [vmem:[%s1524 + $0x150] sm:$0xff]
                  %1611 = vst [vmem:[%s1525 + $0x150] sm:$0xff] %v1610
                  %v1612 = vld [vmem:[%s1524 + $0x158] sm:$0xff]
                  %1613 = vst [vmem:[%s1525 + $0x158] sm:$0xff] %v1612
                  %v1614 = vld [vmem:[%s1524 + $0x160] sm:$0xff]
                  %1615 = vst [vmem:[%s1525 + $0x160] sm:$0xff] %v1614
                  %v1616 = vld [vmem:[%s1524 + $0x168] sm:$0xff]
                  %1617 = vst [vmem:[%s1525 + $0x168] sm:$0xff] %v1616
                  %v1618 = vld [vmem:[%s1524 + $0x170] sm:$0xff]
                  %1619 = vst [vmem:[%s1525 + $0x170] sm:$0xff] %v1618
                  %v1620 = vld [vmem:[%s1524 + $0x178] sm:$0xff]
                  %1621 = vst [vmem:[%s1525 + $0x178] sm:$0xff] %v1620
                  %v1622 = vld [vmem:[%s1524 + $0x180] sm:$0xff]
                  %1623 = vst [vmem:[%s1525 + $0x180] sm:$0xff] %v1622
                  %v1624 = vld [vmem:[%s1524 + $0x188] sm:$0xff]
                  %1625 = vst [vmem:[%s1525 + $0x188] sm:$0xff] %v1624
                  %v1626 = vld [vmem:[%s1524 + $0x190] sm:$0xff]
                  %1627 = vst [vmem:[%s1525 + $0x190] sm:$0xff] %v1626
                  %v1628 = vld [vmem:[%s1524 + $0x198] sm:$0xff]
                  %1629 = vst [vmem:[%s1525 + $0x198] sm:$0xff] %v1628
                  %v1630 = vld [vmem:[%s1524 + $0x1a0] sm:$0xff]
                  %1631 = vst [vmem:[%s1525 + $0x1a0] sm:$0xff] %v1630
                  %v1632 = vld [vmem:[%s1524 + $0x1a8] sm:$0xff]
                  %1633 = vst [vmem:[%s1525 + $0x1a8] sm:$0xff] %v1632
                  %v1634 = vld [vmem:[%s1524 + $0x1b0] sm:$0xff]
                  %1635 = vst [vmem:[%s1525 + $0x1b0] sm:$0xff] %v1634
                  %v1636 = vld [vmem:[%s1524 + $0x1b8] sm:$0xff]
                  %1637 = vst [vmem:[%s1525 + $0x1b8] sm:$0xff] %v1636
                  %v1638 = vld [vmem:[%s1524 + $0x1c0] sm:$0xff]
                  %1639 = vst [vmem:[%s1525 + $0x1c0] sm:$0xff] %v1638
                  %v1640 = vld [vmem:[%s1524 + $0x1c8] sm:$0xff]
                  %1641 = vst [vmem:[%s1525 + $0x1c8] sm:$0xff] %v1640
                  %v1642 = vld [vmem:[%s1524 + $0x1d0] sm:$0xff]
                  %1643 = vst [vmem:[%s1525 + $0x1d0] sm:$0xff] %v1642
                  %v1644 = vld [vmem:[%s1524 + $0x1d8] sm:$0xff]
                  %1645 = vst [vmem:[%s1525 + $0x1d8] sm:$0xff] %v1644
                  %v1646 = vld [vmem:[%s1524 + $0x1e0] sm:$0xff]
                  %1647 = vst [vmem:[%s1525 + $0x1e0] sm:$0xff] %v1646
                  %v1648 = vld [vmem:[%s1524 + $0x1e8] sm:$0xff]
                  %1649 = vst [vmem:[%s1525 + $0x1e8] sm:$0xff] %v1648
                  %v1650 = vld [vmem:[%s1524 + $0x1f0] sm:$0xff]
                  %1651 = vst [vmem:[%s1525 + $0x1f0] sm:$0xff] %v1650
                  %v1652 = vld [vmem:[%s1524 + $0x1f8] sm:$0xff]
                  %1653 = vst [vmem:[%s1525 + $0x1f8] sm:$0xff] %v1652
                  %s1654 = sadd.s32 1, %s1523
                  %p1655 = scmp.ge.s32.totalorder %s1654, %s1514
                  %s1656 = scalar_select %p1655, 0, %s1654
                  %s1657 = smul.u32 %s1656, 512
                  %s1658 = smul.u32 %s1656, 512
                  %s1659 = scalar_lea.vmem %s654, %s1657 [#allocation4]
                  %s1660 = scalar_lea.vmem %s1486, %s1658
                $region200: #{gcn_layer_st_forward.3} parent=194 // loop_footer
                  %s1520 = sadd.s32 %s1518, 1
                $region201: #{gcn_layer_st_forward.3} parent=194 // loop_footer_branch
                  %1517 = sbr.rel target = $region197
                $region202: #{gcn_layer_st_forward.3} parent=194 // loop_exit
                  _
                %s1661 = sshrl.u32 %s1513, 6
                %s1662 = sand.u32 %s1513, 63
                %s1663 = smul.u32 %s1661, 64
                %s1664 = smul.u32 128, %s1663
                %s1665 = sshra.s32 %s1664, 4
                %s1666 = scalar_lea.vmem %s654, %s1665 [#allocation4]
                %s1667 = smul.u32 128, %s1663
                %s1668 = sshra.s32 %s1667, 4
                %s1669 = scalar_lea.vmem %s1486, %s1668
                // While loop
                $region203: #{gcn_layer_st_forward.3} parent=194 // loop_pre_header
                  _
                $region204: #{gcn_layer_st_forward.3} parent=194 // loop_header
                  %s1673 = sphi 0, %s1675
                  %p1674 = scmp.ge.s32.totalorder %s1673, %s1662
                  %s1678 = sphi 0, %s1685
                  %s1679 = sphi %s1666, %s1688
                  %s1680 = sphi %s1669, %s1689
                $region205: #{gcn_layer_st_forward.3} parent=194 // loop_header_branch
                  %1677 = sbr.rel (%p1674) target = $region209
                $region206: #{gcn_layer_st_forward.3} parent=194 // loop_body
                  %v1681 = vld [vmem:[%s1679] sm:$0xff]
                  %1682 = vst [vmem:[%s1680] sm:$0xff] %v1681
                  %s1683 = sadd.s32 1, %s1678
                  %p1684 = scmp.ge.s32.totalorder %s1683, %s1662
                  %s1685 = scalar_select %p1684, 0, %s1683
                  %s1686 = smul.u32 %s1685, 8
                  %s1687 = smul.u32 %s1685, 8
                  %s1688 = scalar_lea.vmem %s1666, %s1686 [#allocation4]
                  %s1689 = scalar_lea.vmem %s1669, %s1687
                $region207: #{gcn_layer_st_forward.3} parent=194 // loop_footer
                  %s1675 = sadd.s32 %s1673, 1
                $region208: #{gcn_layer_st_forward.3} parent=194 // loop_footer_branch
                  %1672 = sbr.rel target = $region204
                $region209: #{gcn_layer_st_forward.3} parent=194 // loop_exit
                  _
              $region195: #{gcn_layer_st_forward.3} parent=179 // pred_fallthru
                _
              %p1690 = pneg %p1509
              // Predicated region
              $region210: #{gcn_layer_st_forward.3} parent=179 // pred_check
                _
              $region211: #{gcn_layer_st_forward.3} parent=179 // pred_check_branch
                %1692 = sbr.rel (%p1509) target = $region213
              $region212: #{gcn_layer_st_forward.3} parent=179 // pred_region
                %s1693 = sand.u32 %s1483, 7
                %s1694 = ssub.s32 %s1483, %s1693
                %s1695 = scalar_lea.vmem %s654, %s1694 [#allocation4]
                %s1696 = ssub.s32 %s1483, %s1693
                %s1697 = scalar_lea.vmem %s1486, %s1696
                %s1698 = sshrl.u32 %s1483, 3
                %s1699 = sshrl.u32 %s1698, 6
                // While loop
                $region214: #{gcn_layer_st_forward.3} parent=212 // loop_pre_header
                  _
                $region215: #{gcn_layer_st_forward.3} parent=212 // loop_header
                  %s1703 = sphi 0, %s1705
                  %p1704 = scmp.ge.s32.totalorder %s1703, %s1699
                  %s1708 = sphi 0, %s1841
                  %s1709 = sphi %s654, %s1844
                  %s1710 = sphi %s1486, %s1845
                $region216: #{gcn_layer_st_forward.3} parent=212 // loop_header_branch
                  %1707 = sbr.rel (%p1704) target = $region220
                $region217: #{gcn_layer_st_forward.3} parent=212 // loop_body
                  %v1711 = vld [vmem:[%s1709] sm:$0xff]
                  %1712 = vst [vmem:[%s1710] sm:$0xff] %v1711
                  %v1713 = vld [vmem:[%s1709 + $0x8] sm:$0xff]
                  %1714 = vst [vmem:[%s1710 + $0x8] sm:$0xff] %v1713
                  %v1715 = vld [vmem:[%s1709 + $0x10] sm:$0xff]
                  %1716 = vst [vmem:[%s1710 + $0x10] sm:$0xff] %v1715
                  %v1717 = vld [vmem:[%s1709 + $0x18] sm:$0xff]
                  %1718 = vst [vmem:[%s1710 + $0x18] sm:$0xff] %v1717
                  %v1719 = vld [vmem:[%s1709 + $0x20] sm:$0xff]
                  %1720 = vst [vmem:[%s1710 + $0x20] sm:$0xff] %v1719
                  %v1721 = vld [vmem:[%s1709 + $0x28] sm:$0xff]
                  %1722 = vst [vmem:[%s1710 + $0x28] sm:$0xff] %v1721
                  %v1723 = vld [vmem:[%s1709 + $0x30] sm:$0xff]
                  %1724 = vst [vmem:[%s1710 + $0x30] sm:$0xff] %v1723
                  %v1725 = vld [vmem:[%s1709 + $0x38] sm:$0xff]
                  %1726 = vst [vmem:[%s1710 + $0x38] sm:$0xff] %v1725
                  %v1727 = vld [vmem:[%s1709 + $0x40] sm:$0xff]
                  %1728 = vst [vmem:[%s1710 + $0x40] sm:$0xff] %v1727
                  %v1729 = vld [vmem:[%s1709 + $0x48] sm:$0xff]
                  %1730 = vst [vmem:[%s1710 + $0x48] sm:$0xff] %v1729
                  %v1731 = vld [vmem:[%s1709 + $0x50] sm:$0xff]
                  %1732 = vst [vmem:[%s1710 + $0x50] sm:$0xff] %v1731
                  %v1733 = vld [vmem:[%s1709 + $0x58] sm:$0xff]
                  %1734 = vst [vmem:[%s1710 + $0x58] sm:$0xff] %v1733
                  %v1735 = vld [vmem:[%s1709 + $0x60] sm:$0xff]
                  %1736 = vst [vmem:[%s1710 + $0x60] sm:$0xff] %v1735
                  %v1737 = vld [vmem:[%s1709 + $0x68] sm:$0xff]
                  %1738 = vst [vmem:[%s1710 + $0x68] sm:$0xff] %v1737
                  %v1739 = vld [vmem:[%s1709 + $0x70] sm:$0xff]
                  %1740 = vst [vmem:[%s1710 + $0x70] sm:$0xff] %v1739
                  %v1741 = vld [vmem:[%s1709 + $0x78] sm:$0xff]
                  %1742 = vst [vmem:[%s1710 + $0x78] sm:$0xff] %v1741
                  %v1743 = vld [vmem:[%s1709 + $0x80] sm:$0xff]
                  %1744 = vst [vmem:[%s1710 + $0x80] sm:$0xff] %v1743
                  %v1745 = vld [vmem:[%s1709 + $0x88] sm:$0xff]
                  %1746 = vst [vmem:[%s1710 + $0x88] sm:$0xff] %v1745
                  %v1747 = vld [vmem:[%s1709 + $0x90] sm:$0xff]
                  %1748 = vst [vmem:[%s1710 + $0x90] sm:$0xff] %v1747
                  %v1749 = vld [vmem:[%s1709 + $0x98] sm:$0xff]
                  %1750 = vst [vmem:[%s1710 + $0x98] sm:$0xff] %v1749
                  %v1751 = vld [vmem:[%s1709 + $0xa0] sm:$0xff]
                  %1752 = vst [vmem:[%s1710 + $0xa0] sm:$0xff] %v1751
                  %v1753 = vld [vmem:[%s1709 + $0xa8] sm:$0xff]
                  %1754 = vst [vmem:[%s1710 + $0xa8] sm:$0xff] %v1753
                  %v1755 = vld [vmem:[%s1709 + $0xb0] sm:$0xff]
                  %1756 = vst [vmem:[%s1710 + $0xb0] sm:$0xff] %v1755
                  %v1757 = vld [vmem:[%s1709 + $0xb8] sm:$0xff]
                  %1758 = vst [vmem:[%s1710 + $0xb8] sm:$0xff] %v1757
                  %v1759 = vld [vmem:[%s1709 + $0xc0] sm:$0xff]
                  %1760 = vst [vmem:[%s1710 + $0xc0] sm:$0xff] %v1759
                  %v1761 = vld [vmem:[%s1709 + $0xc8] sm:$0xff]
                  %1762 = vst [vmem:[%s1710 + $0xc8] sm:$0xff] %v1761
                  %v1763 = vld [vmem:[%s1709 + $0xd0] sm:$0xff]
                  %1764 = vst [vmem:[%s1710 + $0xd0] sm:$0xff] %v1763
                  %v1765 = vld [vmem:[%s1709 + $0xd8] sm:$0xff]
                  %1766 = vst [vmem:[%s1710 + $0xd8] sm:$0xff] %v1765
                  %v1767 = vld [vmem:[%s1709 + $0xe0] sm:$0xff]
                  %1768 = vst [vmem:[%s1710 + $0xe0] sm:$0xff] %v1767
                  %v1769 = vld [vmem:[%s1709 + $0xe8] sm:$0xff]
                  %1770 = vst [vmem:[%s1710 + $0xe8] sm:$0xff] %v1769
                  %v1771 = vld [vmem:[%s1709 + $0xf0] sm:$0xff]
                  %1772 = vst [vmem:[%s1710 + $0xf0] sm:$0xff] %v1771
                  %v1773 = vld [vmem:[%s1709 + $0xf8] sm:$0xff]
                  %1774 = vst [vmem:[%s1710 + $0xf8] sm:$0xff] %v1773
                  %v1775 = vld [vmem:[%s1709 + $0x100] sm:$0xff]
                  %1776 = vst [vmem:[%s1710 + $0x100] sm:$0xff] %v1775
                  %v1777 = vld [vmem:[%s1709 + $0x108] sm:$0xff]
                  %1778 = vst [vmem:[%s1710 + $0x108] sm:$0xff] %v1777
                  %v1779 = vld [vmem:[%s1709 + $0x110] sm:$0xff]
                  %1780 = vst [vmem:[%s1710 + $0x110] sm:$0xff] %v1779
                  %v1781 = vld [vmem:[%s1709 + $0x118] sm:$0xff]
                  %1782 = vst [vmem:[%s1710 + $0x118] sm:$0xff] %v1781
                  %v1783 = vld [vmem:[%s1709 + $0x120] sm:$0xff]
                  %1784 = vst [vmem:[%s1710 + $0x120] sm:$0xff] %v1783
                  %v1785 = vld [vmem:[%s1709 + $0x128] sm:$0xff]
                  %1786 = vst [vmem:[%s1710 + $0x128] sm:$0xff] %v1785
                  %v1787 = vld [vmem:[%s1709 + $0x130] sm:$0xff]
                  %1788 = vst [vmem:[%s1710 + $0x130] sm:$0xff] %v1787
                  %v1789 = vld [vmem:[%s1709 + $0x138] sm:$0xff]
                  %1790 = vst [vmem:[%s1710 + $0x138] sm:$0xff] %v1789
                  %v1791 = vld [vmem:[%s1709 + $0x140] sm:$0xff]
                  %1792 = vst [vmem:[%s1710 + $0x140] sm:$0xff] %v1791
                  %v1793 = vld [vmem:[%s1709 + $0x148] sm:$0xff]
                  %1794 = vst [vmem:[%s1710 + $0x148] sm:$0xff] %v1793
                  %v1795 = vld [vmem:[%s1709 + $0x150] sm:$0xff]
                  %1796 = vst [vmem:[%s1710 + $0x150] sm:$0xff] %v1795
                  %v1797 = vld [vmem:[%s1709 + $0x158] sm:$0xff]
                  %1798 = vst [vmem:[%s1710 + $0x158] sm:$0xff] %v1797
                  %v1799 = vld [vmem:[%s1709 + $0x160] sm:$0xff]
                  %1800 = vst [vmem:[%s1710 + $0x160] sm:$0xff] %v1799
                  %v1801 = vld [vmem:[%s1709 + $0x168] sm:$0xff]
                  %1802 = vst [vmem:[%s1710 + $0x168] sm:$0xff] %v1801
                  %v1803 = vld [vmem:[%s1709 + $0x170] sm:$0xff]
                  %1804 = vst [vmem:[%s1710 + $0x170] sm:$0xff] %v1803
                  %v1805 = vld [vmem:[%s1709 + $0x178] sm:$0xff]
                  %1806 = vst [vmem:[%s1710 + $0x178] sm:$0xff] %v1805
                  %v1807 = vld [vmem:[%s1709 + $0x180] sm:$0xff]
                  %1808 = vst [vmem:[%s1710 + $0x180] sm:$0xff] %v1807
                  %v1809 = vld [vmem:[%s1709 + $0x188] sm:$0xff]
                  %1810 = vst [vmem:[%s1710 + $0x188] sm:$0xff] %v1809
                  %v1811 = vld [vmem:[%s1709 + $0x190] sm:$0xff]
                  %1812 = vst [vmem:[%s1710 + $0x190] sm:$0xff] %v1811
                  %v1813 = vld [vmem:[%s1709 + $0x198] sm:$0xff]
                  %1814 = vst [vmem:[%s1710 + $0x198] sm:$0xff] %v1813
                  %v1815 = vld [vmem:[%s1709 + $0x1a0] sm:$0xff]
                  %1816 = vst [vmem:[%s1710 + $0x1a0] sm:$0xff] %v1815
                  %v1817 = vld [vmem:[%s1709 + $0x1a8] sm:$0xff]
                  %1818 = vst [vmem:[%s1710 + $0x1a8] sm:$0xff] %v1817
                  %v1819 = vld [vmem:[%s1709 + $0x1b0] sm:$0xff]
                  %1820 = vst [vmem:[%s1710 + $0x1b0] sm:$0xff] %v1819
                  %v1821 = vld [vmem:[%s1709 + $0x1b8] sm:$0xff]
                  %1822 = vst [vmem:[%s1710 + $0x1b8] sm:$0xff] %v1821
                  %v1823 = vld [vmem:[%s1709 + $0x1c0] sm:$0xff]
                  %1824 = vst [vmem:[%s1710 + $0x1c0] sm:$0xff] %v1823
                  %v1825 = vld [vmem:[%s1709 + $0x1c8] sm:$0xff]
                  %1826 = vst [vmem:[%s1710 + $0x1c8] sm:$0xff] %v1825
                  %v1827 = vld [vmem:[%s1709 + $0x1d0] sm:$0xff]
                  %1828 = vst [vmem:[%s1710 + $0x1d0] sm:$0xff] %v1827
                  %v1829 = vld [vmem:[%s1709 + $0x1d8] sm:$0xff]
                  %1830 = vst [vmem:[%s1710 + $0x1d8] sm:$0xff] %v1829
                  %v1831 = vld [vmem:[%s1709 + $0x1e0] sm:$0xff]
                  %1832 = vst [vmem:[%s1710 + $0x1e0] sm:$0xff] %v1831
                  %v1833 = vld [vmem:[%s1709 + $0x1e8] sm:$0xff]
                  %1834 = vst [vmem:[%s1710 + $0x1e8] sm:$0xff] %v1833
                  %v1835 = vld [vmem:[%s1709 + $0x1f0] sm:$0xff]
                  %1836 = vst [vmem:[%s1710 + $0x1f0] sm:$0xff] %v1835
                  %v1837 = vld [vmem:[%s1709 + $0x1f8] sm:$0xff]
                  %1838 = vst [vmem:[%s1710 + $0x1f8] sm:$0xff] %v1837
                  %s1839 = sadd.s32 1, %s1708
                  %p1840 = scmp.ge.s32.totalorder %s1839, %s1699
                  %s1841 = scalar_select %p1840, 0, %s1839
                  %s1842 = smul.u32 %s1841, 512
                  %s1843 = smul.u32 %s1841, 512
                  %s1844 = scalar_lea.vmem %s654, %s1842 [#allocation4]
                  %s1845 = scalar_lea.vmem %s1486, %s1843
                $region218: #{gcn_layer_st_forward.3} parent=212 // loop_footer
                  %s1705 = sadd.s32 %s1703, 1
                $region219: #{gcn_layer_st_forward.3} parent=212 // loop_footer_branch
                  %1702 = sbr.rel target = $region215
                $region220: #{gcn_layer_st_forward.3} parent=212 // loop_exit
                  _
                %s1846 = sshrl.u32 %s1698, 6
                %s1847 = sand.u32 %s1698, 63
                %s1848 = smul.u32 %s1846, 64
                %s1849 = smul.u32 128, %s1848
                %s1850 = sshra.s32 %s1849, 4
                %s1851 = scalar_lea.vmem %s654, %s1850 [#allocation4]
                %s1852 = smul.u32 128, %s1848
                %s1853 = sshra.s32 %s1852, 4
                %s1854 = scalar_lea.vmem %s1486, %s1853
                // While loop
                $region221: #{gcn_layer_st_forward.3} parent=212 // loop_pre_header
                  _
                $region222: #{gcn_layer_st_forward.3} parent=212 // loop_header
                  %s1858 = sphi 0, %s1860
                  %p1859 = scmp.ge.s32.totalorder %s1858, %s1847
                  %s1863 = sphi 0, %s1870
                  %s1864 = sphi %s1851, %s1873
                  %s1865 = sphi %s1854, %s1874
                $region223: #{gcn_layer_st_forward.3} parent=212 // loop_header_branch
                  %1862 = sbr.rel (%p1859) target = $region227
                $region224: #{gcn_layer_st_forward.3} parent=212 // loop_body
                  %v1866 = vld [vmem:[%s1864] sm:$0xff]
                  %1867 = vst [vmem:[%s1865] sm:$0xff] %v1866
                  %s1868 = sadd.s32 1, %s1863
                  %p1869 = scmp.ge.s32.totalorder %s1868, %s1847
                  %s1870 = scalar_select %p1869, 0, %s1868
                  %s1871 = smul.u32 %s1870, 8
                  %s1872 = smul.u32 %s1870, 8
                  %s1873 = scalar_lea.vmem %s1851, %s1871 [#allocation4]
                  %s1874 = scalar_lea.vmem %s1854, %s1872
                $region225: #{gcn_layer_st_forward.3} parent=212 // loop_footer
                  %s1860 = sadd.s32 %s1858, 1
                $region226: #{gcn_layer_st_forward.3} parent=212 // loop_footer_branch
                  %1857 = sbr.rel target = $region222
                $region227: #{gcn_layer_st_forward.3} parent=212 // loop_exit
                  _
                %s1875 = sshllo.u32 0, %s1693
                loop: start=0, step=1, limit=1
                $region228: #{gcn_layer_st_forward.3} parent=212 // loop_pre_header
                  _
                $region229: #{gcn_layer_st_forward.3} parent=212 // loop_header
                  %s1877 = sphi 0, %s1881
                  %p1878 = scmp.ge.s32.totalorder %s1877, 1
                  %s1882 = sphi %s1695, %s1695
                  %s1883 = sphi %s1697, %s1697
                $region230: #{gcn_layer_st_forward.3} parent=212 // loop_header_branch
                  %1880 = sbr.rel (%p1878) target = $region234
                $region231: #{gcn_layer_st_forward.3} parent=212 // loop_body
                  %v1884 = vld [vmem:[%s1882] sm:%s1875]
                  %1885 = vst [vmem:[%s1883] sm:%s1875] %v1884
                $region232: #{gcn_layer_st_forward.3} parent=212 // loop_footer
                  %s1881 = sadd.s32 1, %s1877
                $region233: #{gcn_layer_st_forward.3} parent=212 // loop_footer_branch
                  %1876 = sbr.rel target = $region229
                $region234: #{gcn_layer_st_forward.3} parent=212 // loop_exit
                  _
              $region213: #{gcn_layer_st_forward.3} parent=179 // pred_fallthru
                _
            $region180: #{gcn_layer_st_forward.3} parent=175 // pred_fallthru
              _
            // Predicated region
            $region181: #{gcn_layer_st_forward.3} parent=175 // pred_check
              %p1494 = pneg %p1490
            $region182: #{gcn_layer_st_forward.3} parent=175 // pred_check_branch
              %1496 = sbr.rel (%p1494) target = $region184
            $region183: #{gcn_layer_st_forward.3} parent=175 // pred_region
              %s1497 = sshllo.u32 0, %s1483
              loop: start=0, step=1, limit=1
              $region185: #{gcn_layer_st_forward.3} parent=183 // loop_pre_header
                _
              $region186: #{gcn_layer_st_forward.3} parent=183 // loop_header
                %s1499 = sphi 0, %s1503
                %p1500 = scmp.ge.s32.totalorder %s1499, 1
                %s1504 = sphi %s654, %s654
                %s1505 = sphi %s1486, %s1486
              $region187: #{gcn_layer_st_forward.3} parent=183 // loop_header_branch
                %1502 = sbr.rel (%p1500) target = $region191
              $region188: #{gcn_layer_st_forward.3} parent=183 // loop_body
                %v1506 = vld [vmem:[%s1504] sm:%s1497]
                %1507 = vst [vmem:[%s1505] sm:%s1497] %v1506
              $region189: #{gcn_layer_st_forward.3} parent=183 // loop_footer
                %s1503 = sadd.s32 1, %s1499
              $region190: #{gcn_layer_st_forward.3} parent=183 // loop_footer_branch
                %1498 = sbr.rel target = $region186
              $region191: #{gcn_layer_st_forward.3} parent=183 // loop_exit
                _
            $region184: #{gcn_layer_st_forward.3} parent=175 // pred_fallthru
              _
          $region176: #{gcn_layer_st_forward.3} parent=171 // pred_fallthru
            _
          %1886 = vnop
        $region172: #{gcn_layer_st_forward.3} parent=35 // pred_fallthru
          _
      $region36: #{gcn_layer_st_forward.3} parent=5 // pred_fallthru
        _
      %p1887 = scmp.le.s32.totalorder 2, %s13
      // Predicated region
      $region235: #{gcn_layer_st_forward.3} parent=5 // pred_check
        %p1888 = pneg %p1887
      $region236: #{gcn_layer_st_forward.3} parent=5 // pred_check_branch
        %1890 = sbr.rel (%p1888) target = $region238
      $region237: #{gcn_layer_st_forward.3} parent=5 // pred_region
        %s1891 = ssub.s32 %s13, 2
        // Predicated region
        $region239: #{gcn_layer_st_forward.3} parent=237 // pred_check
          %p1892 = pneg %p136
        $region240: #{gcn_layer_st_forward.3} parent=237 // pred_check_branch
          %1894 = sbr.rel (%p1892) target = $region242
        $region241: #{gcn_layer_st_forward.3} parent=237 // pred_region
          %s1895 = sand.u32 %s121, 1
          %s1896 = sand.u32 %s121, 1
          %s1897 = smul.addr %s1896, 32
          %s1898 = scalar_lea.vmem [#allocation2], %s1897
        $region242: #{gcn_layer_st_forward.3} parent=237 // pred_fallthru
          _
        // Predicated region
        $region243: #{gcn_layer_st_forward.3} parent=237 // pred_check
          %p1899 = pneg %p162
        $region244: #{gcn_layer_st_forward.3} parent=237 // pred_check_branch
          %1901 = sbr.rel (%p1899) target = $region246
        $region245: #{gcn_layer_st_forward.3} parent=237 // pred_region
          %s1902 = sand.u32 %s147, 1
          %s1903 = sand.u32 %s147, 1
          %s1904 = smul.addr %s1903, 4
          %s1905 = scalar_lea.vmem [#allocation3], %s1904
        $region246: #{gcn_layer_st_forward.3} parent=237 // pred_fallthru
          _
        // Predicated region
        $region247: #{gcn_layer_st_forward.3} parent=237 // pred_check
          %p1906 = pneg %p188
        $region248: #{gcn_layer_st_forward.3} parent=237 // pred_check_branch
          %1908 = sbr.rel (%p1906) target = $region250
        $region249: #{gcn_layer_st_forward.3} parent=237 // pred_region
          %s1909 = sand.u32 %s173, 1
          %s1910 = sand.u32 %s173, 1
          %s1911 = smul.addr %s1910, 4
          %s1912 = scalar_lea.vmem [#allocation4], %s1911
        $region250: #{gcn_layer_st_forward.3} parent=237 // pred_fallthru
          _
      $region238: #{gcn_layer_st_forward.3} parent=5 // pred_fallthru
        _
    $region6: #{gcn_layer_st_forward.3} parent=1 // loop_footer
      %s17 = sadd.s32 1, %s13
    $region7: #{gcn_layer_st_forward.3} parent=1 // loop_footer_branch
      %12 = sbr.rel target = $region3
    $region8: #{gcn_layer_st_forward.3} parent=1 // loop_exit
      _

// kernel: gcn_layer_st_forward.2
$region0: #{gcn_layer_st_forward.2}
  #allocation0 [shape = 'u32[]', space=smem, size = 0x4, offset = 0x4, fixed_abs, tag = 'smem constant byte address 0x4 - core index']
  #allocation1 [shape = 'u32[144,128]{1,0:T(1,128)}', space=vmem, size = 0x12000, scoped, tag = 'internal scratch']
  %s0 = inlined_call_operand.vmem [shape: f32[224,32], index: 0, kind: input, shape index: {}]
  %s1 = inlined_call_operand.vmem [shape: f32[224,32], index: 1, kind: input, shape index: {}]
  %s2 = inlined_call_operand.vmem [shape: f32[32,64], index: 2, kind: input, shape index: {}]
  %s3 = inlined_call_operand.vmem [shape: f32[32,64], index: 3, kind: input, shape index: {}]
  %s4 = inlined_call_operand.vmem [shape: f32[1,64], index: 4, kind: input, shape index: {}]
  %s5 = inlined_call_operand.vmem [shape: f32[32,64], index: 5, kind: input, shape index: {}]
  %s6 = inlined_call_operand.vmem [shape: f32[1,64], index: 6, kind: input, shape index: {}]
  %s7 = inlined_call_operand.vmem [shape: f32[224,32], index: 7, kind: output, shape index: {0}]
  %s8 = inlined_call_operand.vmem [shape: f32[224,32], index: 8, kind: output, shape index: {1}]
  %9 = xla_tuple %s7, %s8
  %s10 = sld [smem:[#allocation0]]
  $region69: #{gcn_layer_st_forward.2} parent=0
    _
  %s12 = ssub.s32 1, %s10
  %s13 = scalar_select 0, %s12, %s10
  loop: start=0, step=1, limit=4
  $region2: #{gcn_layer_st_forward.2} parent=0 // loop_pre_header
    _
  $region3: #{gcn_layer_st_forward.2} parent=0 // loop_header
    %s15 = sphi 0, %s19
    %p16 = scmp.ge.s32.totalorder %s15, 4
    %s25 = sphi 0, %s27
    %s28 = sphi 0, %s25
    %s29 = sphi 0, %s28
    %s45 = sphi 0, %s29
    %s51 = sphi 0, %s53
    %s54 = sphi 0, %s51
    %s55 = sphi 0, %s54
    %s71 = sphi 0, %s55
    %s75 = sphi 0, %s75
    %s77 = sphi 0, %s75
    %s78 = sphi 0, %s77
    %s92 = sphi 0, %s78
    %s96 = sphi 0, %s96
    %s98 = sphi 0, %s96
    %s99 = sphi 0, %s98
    %s113 = sphi 0, %s99
    %s117 = sphi 0, %s117
    %s119 = sphi 0, %s117
    %s120 = sphi 0, %s119
    %s134 = sphi 0, %s120
    %s138 = sphi 0, %s138
    %s140 = sphi 0, %s138
    %s141 = sphi 0, %s140
    %s155 = sphi 0, %s141
    %s159 = sphi 0, %s159
    %s161 = sphi 0, %s159
    %s162 = sphi 0, %s161
    %s176 = sphi 0, %s162
    %s182 = sphi 0, %s184
    %s185 = sphi 0, %s182
    %s186 = sphi 0, %s185
    %s202 = sphi 0, %s186
    %s208 = sphi 0, %s210
    %s211 = sphi 0, %s208
    %s212 = sphi 0, %s211
    %s228 = sphi 0, %s212
  $region4: #{gcn_layer_st_forward.2} parent=0 // loop_header_branch
    %18 = sbr.rel (%p16) target = $region8
  $region5: #{gcn_layer_st_forward.2} parent=0 // loop_body
    %s20 = ssub.s32 %s15, 1
    %s21 = ssub.s32 %s15, 2
    %s22 = sadd.s32 %s15, 1
    %s23 = ssub.s32 %s15, %s22
    %p24 = scmp.eq.s32.totalorder %s23, 0
    %s26 = sadd.s32 %s25, 1
    %s27 = scalar_select %p24, %s25, %s26
    %p30 = pneg %p24
    %p31 = scmp.eq.s32.totalorder %s15, 1
    %p32 = por %p30, %p31
    %p33 = scmp.ne.s32.totalorder %s25, %s28
    %p34 = scmp.eq.s32.totalorder %s15, 0
    %p35 = por %p33, %p34
    %p36 = scmp.ne.s32.totalorder %s25, %s28
    %p37 = scmp.eq.s32.totalorder %s20, 1
    %p38 = por %p36, %p37
    %p39 = scmp.ne.s32.totalorder %s28, %s29
    %p40 = scmp.eq.s32.totalorder %s20, 0
    %p41 = por %p39, %p40
    %p42 = scmp.ne.s32.totalorder %s28, %s29
    %p43 = scmp.eq.s32.totalorder %s21, 1
    %p44 = por %p42, %p43
    %p46 = scmp.ne.s32.totalorder %s29, %s45
    %p47 = scmp.eq.s32.totalorder %s21, 0
    %p48 = por %p46, %p47
    %s49 = ssub.s32 %s15, %s22
    %p50 = scmp.eq.s32.totalorder %s49, 0
    %s52 = sadd.s32 %s51, 1
    %s53 = scalar_select %p50, %s51, %s52
    %p56 = pneg %p50
    %p57 = scmp.eq.s32.totalorder %s15, 1
    %p58 = por %p56, %p57
    %p59 = scmp.ne.s32.totalorder %s51, %s54
    %p60 = scmp.eq.s32.totalorder %s15, 0
    %p61 = por %p59, %p60
    %p62 = scmp.ne.s32.totalorder %s51, %s54
    %p63 = scmp.eq.s32.totalorder %s20, 1
    %p64 = por %p62, %p63
    %p65 = scmp.ne.s32.totalorder %s54, %s55
    %p66 = scmp.eq.s32.totalorder %s20, 0
    %p67 = por %p65, %p66
    %p68 = scmp.ne.s32.totalorder %s54, %s55
    %p69 = scmp.eq.s32.totalorder %s21, 1
    %p70 = por %p68, %p69
    %p72 = scmp.ne.s32.totalorder %s55, %s71
    %p73 = scmp.eq.s32.totalorder %s21, 0
    %p74 = por %p72, %p73
    %s76 = sadd.s32 %s75, 1
    %p79 = scmp.eq.s32.totalorder %s15, 1
    %p80 = scmp.ne.s32.totalorder %s75, %s77
    %p81 = scmp.eq.s32.totalorder %s15, 0
    %p82 = por %p80, %p81
    %p83 = scmp.ne.s32.totalorder %s75, %s77
    %p84 = scmp.eq.s32.totalorder %s20, 1
    %p85 = por %p83, %p84
    %p86 = scmp.ne.s32.totalorder %s77, %s78
    %p87 = scmp.eq.s32.totalorder %s20, 0
    %p88 = por %p86, %p87
    %p89 = scmp.ne.s32.totalorder %s77, %s78
    %p90 = scmp.eq.s32.totalorder %s21, 1
    %p91 = por %p89, %p90
    %p93 = scmp.ne.s32.totalorder %s78, %s92
    %p94 = scmp.eq.s32.totalorder %s21, 0
    %p95 = por %p93, %p94
    %s97 = sadd.s32 %s96, 1
    %p100 = scmp.eq.s32.totalorder %s15, 1
    %p101 = scmp.ne.s32.totalorder %s96, %s98
    %p102 = scmp.eq.s32.totalorder %s15, 0
    %p103 = por %p101, %p102
    %p104 = scmp.ne.s32.totalorder %s96, %s98
    %p105 = scmp.eq.s32.totalorder %s20, 1
    %p106 = por %p104, %p105
    %p107 = scmp.ne.s32.totalorder %s98, %s99
    %p108 = scmp.eq.s32.totalorder %s20, 0
    %p109 = por %p107, %p108
    %p110 = scmp.ne.s32.totalorder %s98, %s99
    %p111 = scmp.eq.s32.totalorder %s21, 1
    %p112 = por %p110, %p111
    %p114 = scmp.ne.s32.totalorder %s99, %s113
    %p115 = scmp.eq.s32.totalorder %s21, 0
    %p116 = por %p114, %p115
    %s118 = sadd.s32 %s117, 1
    %p121 = scmp.eq.s32.totalorder %s15, 1
    %p122 = scmp.ne.s32.totalorder %s117, %s119
    %p123 = scmp.eq.s32.totalorder %s15, 0
    %p124 = por %p122, %p123
    %p125 = scmp.ne.s32.totalorder %s117, %s119
    %p126 = scmp.eq.s32.totalorder %s20, 1
    %p127 = por %p125, %p126
    %p128 = scmp.ne.s32.totalorder %s119, %s120
    %p129 = scmp.eq.s32.totalorder %s20, 0
    %p130 = por %p128, %p129
    %p131 = scmp.ne.s32.totalorder %s119, %s120
    %p132 = scmp.eq.s32.totalorder %s21, 1
    %p133 = por %p131, %p132
    %p135 = scmp.ne.s32.totalorder %s120, %s134
    %p136 = scmp.eq.s32.totalorder %s21, 0
    %p137 = por %p135, %p136
    %s139 = sadd.s32 %s138, 1
    %p142 = scmp.eq.s32.totalorder %s15, 1
    %p143 = scmp.ne.s32.totalorder %s138, %s140
    %p144 = scmp.eq.s32.totalorder %s15, 0
    %p145 = por %p143, %p144
    %p146 = scmp.ne.s32.totalorder %s138, %s140
    %p147 = scmp.eq.s32.totalorder %s20, 1
    %p148 = por %p146, %p147
    %p149 = scmp.ne.s32.totalorder %s140, %s141
    %p150 = scmp.eq.s32.totalorder %s20, 0
    %p151 = por %p149, %p150
    %p152 = scmp.ne.s32.totalorder %s140, %s141
    %p153 = scmp.eq.s32.totalorder %s21, 1
    %p154 = por %p152, %p153
    %p156 = scmp.ne.s32.totalorder %s141, %s155
    %p157 = scmp.eq.s32.totalorder %s21, 0
    %p158 = por %p156, %p157
    %s160 = sadd.s32 %s159, 1
    %p163 = scmp.eq.s32.totalorder %s15, 1
    %p164 = scmp.ne.s32.totalorder %s159, %s161
    %p165 = scmp.eq.s32.totalorder %s15, 0
    %p166 = por %p164, %p165
    %p167 = scmp.ne.s32.totalorder %s159, %s161
    %p168 = scmp.eq.s32.totalorder %s20, 1
    %p169 = por %p167, %p168
    %p170 = scmp.ne.s32.totalorder %s161, %s162
    %p171 = scmp.eq.s32.totalorder %s20, 0
    %p172 = por %p170, %p171
    %p173 = scmp.ne.s32.totalorder %s161, %s162
    %p174 = scmp.eq.s32.totalorder %s21, 1
    %p175 = por %p173, %p174
    %p177 = scmp.ne.s32.totalorder %s162, %s176
    %p178 = scmp.eq.s32.totalorder %s21, 0
    %p179 = por %p177, %p178
    %s180 = ssub.s32 %s15, %s22
    %p181 = scmp.eq.s32.totalorder %s180, 0
    %s183 = sadd.s32 %s182, 1
    %s184 = scalar_select %p181, %s182, %s183
    %p187 = pneg %p181
    %p188 = scmp.eq.s32.totalorder %s15, 1
    %p189 = por %p187, %p188
    %p190 = scmp.ne.s32.totalorder %s182, %s185
    %p191 = scmp.eq.s32.totalorder %s15, 0
    %p192 = por %p190, %p191
    %p193 = scmp.ne.s32.totalorder %s182, %s185
    %p194 = scmp.eq.s32.totalorder %s20, 1
    %p195 = por %p193, %p194
    %p196 = scmp.ne.s32.totalorder %s185, %s186
    %p197 = scmp.eq.s32.totalorder %s20, 0
    %p198 = por %p196, %p197
    %p199 = scmp.ne.s32.totalorder %s185, %s186
    %p200 = scmp.eq.s32.totalorder %s21, 1
    %p201 = por %p199, %p200
    %p203 = scmp.ne.s32.totalorder %s186, %s202
    %p204 = scmp.eq.s32.totalorder %s21, 0
    %p205 = por %p203, %p204
    %s206 = ssub.s32 %s15, %s22
    %p207 = scmp.eq.s32.totalorder %s206, 0
    %s209 = sadd.s32 %s208, 1
    %s210 = scalar_select %p207, %s208, %s209
    %p213 = pneg %p207
    %p214 = scmp.eq.s32.totalorder %s15, 1
    %p215 = por %p213, %p214
    %p216 = scmp.ne.s32.totalorder %s208, %s211
    %p217 = scmp.eq.s32.totalorder %s15, 0
    %p218 = por %p216, %p217
    %p219 = scmp.ne.s32.totalorder %s208, %s211
    %p220 = scmp.eq.s32.totalorder %s20, 1
    %p221 = por %p219, %p220
    %p222 = scmp.ne.s32.totalorder %s211, %s212
    %p223 = scmp.eq.s32.totalorder %s20, 0
    %p224 = por %p222, %p223
    %p225 = scmp.ne.s32.totalorder %s211, %s212
    %p226 = scmp.eq.s32.totalorder %s21, 1
    %p227 = por %p225, %p226
    %p229 = scmp.ne.s32.totalorder %s212, %s228
    %p230 = scmp.eq.s32.totalorder %s21, 0
    %p231 = por %p229, %p230
    %p232 = scmp.le.s32.totalorder 1, %s15
    %p233 = scmp.lt.s32.totalorder %s15, 3
    %p234 = pnand %p232, %p233
    %p235 = pneg %p234
    // Predicated region
    $region9: #{gcn_layer_st_forward.2} parent=5 // pred_check
      _
    $region10: #{gcn_layer_st_forward.2} parent=5 // pred_check_branch
      %237 = sbr.rel (%p234) target = $region12
    $region11: #{gcn_layer_st_forward.2} parent=5 // pred_region
      %s238 = ssub.s32 %s15, 1
      // Predicated region
      $region13: #{gcn_layer_st_forward.2} parent=11 // pred_check
        %p239 = pneg %p88
      $region14: #{gcn_layer_st_forward.2} parent=11 // pred_check_branch
        %241 = sbr.rel (%p239) target = $region16
      $region15: #{gcn_layer_st_forward.2} parent=11 // pred_region
        _
      $region16: #{gcn_layer_st_forward.2} parent=11 // pred_fallthru
        _
      // Predicated region
      $region17: #{gcn_layer_st_forward.2} parent=11 // pred_check
        %p242 = pneg %p109
      $region18: #{gcn_layer_st_forward.2} parent=11 // pred_check_branch
        %244 = sbr.rel (%p242) target = $region20
      $region19: #{gcn_layer_st_forward.2} parent=11 // pred_region
        _
      $region20: #{gcn_layer_st_forward.2} parent=11 // pred_fallthru
        _
      // Predicated region
      $region21: #{gcn_layer_st_forward.2} parent=11 // pred_check
        %p245 = pneg %p130
      $region22: #{gcn_layer_st_forward.2} parent=11 // pred_check_branch
        %247 = sbr.rel (%p245) target = $region24
      $region23: #{gcn_layer_st_forward.2} parent=11 // pred_region
        _
      $region24: #{gcn_layer_st_forward.2} parent=11 // pred_fallthru
        _
      // Predicated region
      $region25: #{gcn_layer_st_forward.2} parent=11 // pred_check
        %p248 = pneg %p151
      $region26: #{gcn_layer_st_forward.2} parent=11 // pred_check_branch
        %250 = sbr.rel (%p248) target = $region28
      $region27: #{gcn_layer_st_forward.2} parent=11 // pred_region
        _
      $region28: #{gcn_layer_st_forward.2} parent=11 // pred_fallthru
        _
      // Predicated region
      $region29: #{gcn_layer_st_forward.2} parent=11 // pred_check
        %p251 = pneg %p172
      $region30: #{gcn_layer_st_forward.2} parent=11 // pred_check_branch
        %253 = sbr.rel (%p251) target = $region32
      $region31: #{gcn_layer_st_forward.2} parent=11 // pred_region
        _
      $region32: #{gcn_layer_st_forward.2} parent=11 // pred_fallthru
        _
    $region12: #{gcn_layer_st_forward.2} parent=5 // pred_fallthru
      _
    %p254 = scmp.lt.s32.totalorder %s15, 2
    // Predicated region
    $region33: #{gcn_layer_st_forward.2} parent=5 // pred_check
      %p255 = pneg %p254
    $region34: #{gcn_layer_st_forward.2} parent=5 // pred_check_branch
      %257 = sbr.rel (%p255) target = $region36
    $region35: #{gcn_layer_st_forward.2} parent=5 // pred_region
      // Predicated region
      $region37: #{gcn_layer_st_forward.2} parent=35 // pred_check
        %p258 = pneg %p35
      $region38: #{gcn_layer_st_forward.2} parent=35 // pred_check_branch
        %260 = sbr.rel (%p258) target = $region40
      $region39: #{gcn_layer_st_forward.2} parent=35 // pred_region
        %s261 = smul.u32 14, %s15
        %p262 = scmp.lt.s32.totalorder %s261, 27
        %s263 = scalar_select %p262, %s261, 27
        %s264 = smul.addr %s263, 8
        %s265 = scalar_lea.vmem %s0, %s264
        %s266 = smul.u32 14, %s15
      $region40: #{gcn_layer_st_forward.2} parent=35 // pred_fallthru
        _
      // Predicated region
      $region41: #{gcn_layer_st_forward.2} parent=35 // pred_check
        %p267 = pneg %p61
      $region42: #{gcn_layer_st_forward.2} parent=35 // pred_check_branch
        %269 = sbr.rel (%p267) target = $region44
      $region43: #{gcn_layer_st_forward.2} parent=35 // pred_region
        %s270 = smul.u32 14, %s15
        %p271 = scmp.lt.s32.totalorder %s270, 27
        %s272 = scalar_select %p271, %s270, 27
        %s273 = smul.addr %s272, 8
        %s274 = scalar_lea.vmem %s1, %s273
        %s275 = smul.u32 14, %s15
      $region44: #{gcn_layer_st_forward.2} parent=35 // pred_fallthru
        _
    $region36: #{gcn_layer_st_forward.2} parent=5 // pred_fallthru
      _
    %p276 = scmp.le.s32.totalorder 1, %s15
    %p277 = scmp.lt.s32.totalorder %s15, 3
    %p278 = pnand %p276, %p277
    %p279 = pneg %p278
    // Predicated region
    $region45: #{gcn_layer_st_forward.2} parent=5 // pred_check
      _
    $region46: #{gcn_layer_st_forward.2} parent=5 // pred_check_branch
      %281 = sbr.rel (%p278) target = $region48
    $region47: #{gcn_layer_st_forward.2} parent=5 // pred_region
      %s282 = ssub.s32 %s15, 1
      %s283 = smul.u32 14, %s20
      %p284 = scmp.lt.s32.totalorder %s283, 27
      %s285 = scalar_select %p284, %s283, 27
      %s286 = smul.addr %s285, 8
      %s287 = scalar_lea.vmem %s0, %s286
      %p288 = pneg %p41
      %p289 = pneg %p38
      %s290 = smul.u32 14, %s20
      %p291 = scmp.lt.s32.totalorder %s290, 27
      %s292 = scalar_select %p291, %s290, 27
      %s293 = smul.addr %s292, 8
      %s294 = scalar_lea.vmem %s1, %s293
      %p295 = pneg %p67
      %p296 = pneg %p64
      %p297 = pneg %p88
      %p298 = pneg %p85
      %p299 = pneg %p109
      %p300 = pneg %p106
      %p301 = pneg %p130
      %p302 = pneg %p127
      %p303 = pneg %p151
      %p304 = pneg %p148
      %p305 = pneg %p172
      %p306 = pneg %p169
      %p307 = pneg %p198
      %p308 = pneg %p195
      %s309 = smul.u32 14, %s20
      %p310 = scmp.lt.s32.totalorder %s309, 27
      %s311 = scalar_select %p310, %s309, 27
      %s312 = smul.addr %s311, 8
      %s313 = scalar_lea.vmem %s7, %s312
      %p314 = pneg %p224
      %p315 = pneg %p221
      %s316 = smul.u32 14, %s20
      %p317 = scmp.lt.s32.totalorder %s316, 27
      %s318 = scalar_select %p317, %s316, 27
      %s319 = smul.addr %s318, 8
      %s320 = scalar_lea.vmem %s8, %s319
      %s321 = smul.u32 14, %s20
      %p322 = scmp.lt.s32.totalorder %s321, 27
      %s323 = scalar_select %p322, %s321, 27
      %s324 = smul.addr %s323, 8
      %s325 = scalar_lea.vmem %s0, %s324
      %s326 = smul.u32 14, %s20
      %s327 = smul.u32 14, %s20
      %p328 = scmp.lt.s32.totalorder %s327, 27
      %s329 = scalar_select %p328, %s327, 27
      %s330 = smul.addr %s329, 8
      %s331 = scalar_lea.vmem %s1, %s330
      %s332 = smul.u32 14, %s20
      %s333 = smul.u32 14, %s20
      %p334 = scmp.lt.s32.totalorder %s333, 27
      %s335 = scalar_select %p334, %s333, 27
      %s336 = smul.addr %s335, 8
      %s337 = scalar_lea.vmem %s7, %s336
      %s338 = smul.u32 14, %s20
      %s339 = smul.u32 14, %s20
      %p340 = scmp.lt.s32.totalorder %s339, 27
      %s341 = scalar_select %p340, %s339, 27
      %s342 = smul.addr %s341, 8
      %s343 = scalar_lea.vmem %s8, %s342
      %s344 = smul.u32 14, %s20
      %v345 = vld [vmem:[%s325] sm:$0xff]
      %v346 = vld [vmem:[%s325 + $0x8] sm:$0xff]
      %v347 = vld [vmem:[%s325 + $0x10] sm:$0xff]
      %v348 = vld [vmem:[%s325 + $0x18] sm:$0xff]
      %v349 = vld [vmem:[%s325 + $0x20] sm:$0xff]
      %v350 = vld [vmem:[%s325 + $0x28] sm:$0xff]
      %v351 = vld [vmem:[%s325 + $0x30] sm:$0xff]
      %v352 = vld [vmem:[%s325 + $0x38] sm:$0xff]
      %v353 = vld [vmem:[%s325 + $0x40] sm:$0xff]
      %v354 = vld [vmem:[%s325 + $0x48] sm:$0xff]
      %v355 = vld [vmem:[%s325 + $0x50] sm:$0xff]
      %v356 = vld [vmem:[%s325 + $0x58] sm:$0xff]
      %v357 = vld [vmem:[%s325 + $0x60] sm:$0xff]
      %v358 = vld [vmem:[%s325 + $0x68] sm:$0xff]
      %v359 = vld [vmem:[%s2] sm:$0xff]
      %v360 = vld [vmem:[%s2 + $0x8] sm:$0xff]
      %v361 = vld [vmem:[%s2 + $0x10] sm:$0xff]
      %v362 = vld [vmem:[%s2 + $0x18] sm:$0xff]
      %v363 = vld [vmem:[%s331] sm:$0xff]
      %v364 = vld [vmem:[%s331 + $0x8] sm:$0xff]
      %v365 = vld [vmem:[%s331 + $0x10] sm:$0xff]
      %v366 = vld [vmem:[%s331 + $0x18] sm:$0xff]
      %v367 = vld [vmem:[%s331 + $0x20] sm:$0xff]
      %v368 = vld [vmem:[%s331 + $0x28] sm:$0xff]
      %v369 = vld [vmem:[%s331 + $0x30] sm:$0xff]
      %v370 = vld [vmem:[%s331 + $0x38] sm:$0xff]
      %v371 = vld [vmem:[%s331 + $0x40] sm:$0xff]
      %v372 = vld [vmem:[%s331 + $0x48] sm:$0xff]
      %v373 = vld [vmem:[%s331 + $0x50] sm:$0xff]
      %v374 = vld [vmem:[%s331 + $0x58] sm:$0xff]
      %v375 = vld [vmem:[%s331 + $0x60] sm:$0xff]
      %v376 = vld [vmem:[%s331 + $0x68] sm:$0xff]
      %v377 = vld [vmem:[%s3] sm:$0xff]
      %v378 = vld [vmem:[%s3 + $0x8] sm:$0xff]
      %v379 = vld [vmem:[%s3 + $0x10] sm:$0xff]
      %v380 = vld [vmem:[%s3 + $0x18] sm:$0xff]
      %vm381 = vcmask 261120
      %v383 = vsel %vm381, %v363, 0
      %v386 = vsel %vm381, %v364, 0
      %v389 = vsel %vm381, %v365, 0
      %v392 = vsel %vm381, %v366, 0
      %v395 = vsel %vm381, %v367, 0
      %v398 = vsel %vm381, %v368, 0
      %v401 = vsel %vm381, %v369, 0
      %v404 = vsel %vm381, %v370, 0
      %v407 = vsel %vm381, %v371, 0
      %v410 = vsel %vm381, %v372, 0
      %v413 = vsel %vm381, %v373, 0
      %v416 = vsel %vm381, %v374, 0
      %v419 = vsel %vm381, %v375, 0
      %v422 = vsel %vm381, %v376, 0
      %424 = vmatprep.subr.mxu0 0.0
      %425 = vmatpush1.msra.mxu0 %v377
      %426 = vmatprep.subr.mxu0 0.0
      %427 = vmatpush1.msra.mxu0 %v378
      %428 = vmatprep.subr.mxu0 0.0
      %429 = vmatpush1.msra.mxu0 %v379
      %430 = vmatprep.subr.mxu0 0.0
      %431 = vmatpush1.msra.mxu0 %v380
      %432 = vmatprep.subr.mxu0 0.0
      %433 = vmatpush1.msra.mxu0 0.0
      %434 = vmatprep.subr.mxu0 0.0
      %435 = vmatpush1.msra.mxu0 0.0
      %436 = vmatprep.subr.mxu0 0.0
      %437 = vmatpush1.msra.mxu0 0.0
      %438 = vmatprep.subr.mxu0 0.0
      %439 = vmatpush1.msra.mxu0 0.0
      %440 = vmatprep.subr.mxu0 0.0
      %441 = vmatpush1.msra.mxu0 0.0
      %442 = vmatprep.subr.mxu0 0.0
      %443 = vmatpush1.msra.mxu0 0.0
      %444 = vmatprep.subr.mxu0 0.0
      %445 = vmatpush1.msra.mxu0 0.0
      %446 = vmatprep.subr.mxu0 0.0
      %447 = vmatpush1.msra.mxu0 0.0
      %448 = vmatprep.subr.mxu0 0.0
      %449 = vmatpush1.msra.mxu0 0.0
      %450 = vmatprep.subr.mxu0 0.0
      %451 = vmatpush1.msra.mxu0 0.0
      %452 = vmatprep.subr.mxu0 0.0
      %453 = vmatpush1.msra.mxu0 0.0
      %454 = vmatprep.subr.mxu0 0.0
      %455 = vmatpush1.msra.mxu0 0.0
      %456 = vmatprep.subr.mxu0 0.0
      %457 = vmatpush1.msra.mxu0 0.0
      %458 = vmatprep.subr.mxu0 0.0
      %459 = vmatpush1.msra.mxu0 0.0
      %460 = vmatprep.subr.mxu0 0.0
      %461 = vmatpush1.msra.mxu0 0.0
      %462 = vmatprep.subr.mxu0 0.0
      %463 = vmatpush1.msra.mxu0 0.0
      %464 = vmatprep.subr.mxu0 0.0
      %465 = vmatpush1.msra.mxu0 0.0
      %466 = vmatprep.subr.mxu0 0.0
      %467 = vmatpush1.msra.mxu0 0.0
      %468 = vmatprep.subr.mxu0 0.0
      %469 = vmatpush1.msra.mxu0 0.0
      %470 = vmatprep.subr.mxu0 0.0
      %471 = vmatpush1.msra.mxu0 0.0
      %472 = vmatprep.subr.mxu0 0.0
      %473 = vmatpush1.msra.mxu0 0.0
      %474 = vmatprep.subr.mxu0 0.0
      %475 = vmatpush1.msra.mxu0 0.0
      %476 = vmatprep.subr.mxu0 0.0
      %477 = vmatpush1.msra.mxu0 0.0
      %478 = vmatprep.subr.mxu0 0.0
      %479 = vmatpush1.msra.mxu0 0.0
      %480 = vmatprep.subr.mxu0 0.0
      %481 = vmatpush1.msra.mxu0 0.0
      %482 = vmatprep.subr.mxu0 0.0
      %483 = vmatpush1.msra.mxu0 0.0
      %484 = vmatprep.subr.mxu0 0.0
      %485 = vmatpush1.msra.mxu0 0.0
      %486 = vmatprep.subr.mxu0 0.0
      %487 = vmatpush1.msra.mxu0 0.0
      %488 = vmatprep.mubr.f32.mxu0 0.0
      %489 = vmatmul.mubr.f32.gmra.mrb[0].mxu0 %v383
      %v490 = vpop.f32.mrb[0].mxu0
      %v491 = vadd.f32 0.0, %v490
      %v492 = vpop.f32.mrb[0].mxu0
      %493 = vmatprep.mubr.f32.mxu0 0.0
      %494 = vmatmul.mubr.f32.gmra.mrb[0].mxu0 %v386
      %v495 = vpop.f32.mrb[0].mxu0
      %v496 = vadd.f32 0.0, %v495
      %v497 = vpop.f32.mrb[0].mxu0
      %498 = vmatprep.mubr.f32.mxu0 0.0
      %499 = vmatmul.mubr.f32.gmra.mrb[0].mxu0 %v389
      %v500 = vpop.f32.mrb[0].mxu0
      %v501 = vadd.f32 0.0, %v500
      %v502 = vpop.f32.mrb[0].mxu0
      %503 = vmatprep.mubr.f32.mxu0 0.0
      %504 = vmatmul.mubr.f32.gmra.mrb[0].mxu0 %v392
      %v505 = vpop.f32.mrb[0].mxu0
      %v506 = vadd.f32 0.0, %v505
      %v507 = vpop.f32.mrb[0].mxu0
      %508 = vmatprep.mubr.f32.mxu0 0.0
      %509 = vmatmul.mubr.f32.gmra.mrb[0].mxu0 %v395
      %v510 = vpop.f32.mrb[0].mxu0
      %v511 = vadd.f32 0.0, %v510
      %v512 = vpop.f32.mrb[0].mxu0
      %513 = vmatprep.mubr.f32.mxu0 0.0
      %514 = vmatmul.mubr.f32.gmra.mrb[0].mxu0 %v398
      %v515 = vpop.f32.mrb[0].mxu0
      %v516 = vadd.f32 0.0, %v515
      %v517 = vpop.f32.mrb[0].mxu0
      %518 = vmatprep.mubr.f32.mxu0 0.0
      %519 = vmatmul.mubr.f32.gmra.mrb[0].mxu0 %v401
      %v520 = vpop.f32.mrb[0].mxu0
      %v521 = vadd.f32 0.0, %v520
      %v522 = vpop.f32.mrb[0].mxu0
      %523 = vmatprep.mubr.f32.mxu0 0.0
      %524 = vmatmul.mubr.f32.gmra.mrb[0].mxu0 %v404
      %v525 = vpop.f32.mrb[0].mxu0
      %v526 = vadd.f32 0.0, %v525
      %v527 = vpop.f32.mrb[0].mxu0
      %528 = vmatprep.mubr.f32.mxu0 0.0
      %529 = vmatmul.mubr.f32.gmra.mrb[0].mxu0 %v407
      %v530 = vpop.f32.mrb[0].mxu0
      %v531 = vadd.f32 0.0, %v530
      %v532 = vpop.f32.mrb[0].mxu0
      %533 = vmatprep.mubr.f32.mxu0 0.0
      %534 = vmatmul.mubr.f32.gmra.mrb[0].mxu0 %v410
      %v535 = vpop.f32.mrb[0].mxu0
      %v536 = vadd.f32 0.0, %v535
      %v537 = vpop.f32.mrb[0].mxu0
      %538 = vmatprep.mubr.f32.mxu0 0.0
      %539 = vmatmul.mubr.f32.gmra.mrb[0].mxu0 %v413
      %v540 = vpop.f32.mrb[0].mxu0
      %v541 = vadd.f32 0.0, %v540
      %v542 = vpop.f32.mrb[0].mxu0
      %543 = vmatprep.mubr.f32.mxu0 0.0
      %544 = vmatmul.mubr.f32.gmra.mrb[0].mxu0 %v416
      %v545 = vpop.f32.mrb[0].mxu0
      %v546 = vadd.f32 0.0, %v545
      %v547 = vpop.f32.mrb[0].mxu0
      %548 = vmatprep.mubr.f32.mxu0 0.0
      %549 = vmatmul.mubr.f32.gmra.mrb[0].mxu0 %v419
      %v550 = vpop.f32.mrb[0].mxu0
      %v551 = vadd.f32 0.0, %v550
      %v552 = vpop.f32.mrb[0].mxu0
      %553 = vmatprep.mubr.f32.mxu0 0.0
      %554 = vmatmul.mubr.f32.gmra.mrb[0].mxu0 %v422
      %v555 = vpop.f32.mrb[0].mxu0
      %v556 = vadd.f32 0.0, %v555
      %v557 = vpop.f32.mrb[0].mxu0
      %558 = vdwg.mxu0
      %v560 = vsel %vm381, %v345, 0
      %v563 = vsel %vm381, %v346, 0
      %v566 = vsel %vm381, %v347, 0
      %v569 = vsel %vm381, %v348, 0
      %v572 = vsel %vm381, %v349, 0
      %v575 = vsel %vm381, %v350, 0
      %v578 = vsel %vm381, %v351, 0
      %v581 = vsel %vm381, %v352, 0
      %v584 = vsel %vm381, %v353, 0
      %v587 = vsel %vm381, %v354, 0
      %v590 = vsel %vm381, %v355, 0
      %v593 = vsel %vm381, %v356, 0
      %v596 = vsel %vm381, %v357, 0
      %v599 = vsel %vm381, %v358, 0
      %601 = vmatprep.subr.mxu0 0.0
      %602 = vmatpush1.msra.mxu0 %v359
      %603 = vmatprep.subr.mxu0 0.0
      %604 = vmatpush1.msra.mxu0 %v360
      %605 = vmatprep.subr.mxu0 0.0
      %606 = vmatpush1.msra.mxu0 %v361
      %607 = vmatprep.subr.mxu0 0.0
      %608 = vmatpush1.msra.mxu0 %v362
      %609 = vmatprep.subr.mxu0 0.0
      %610 = vmatpush1.msra.mxu0 0.0
      %611 = vmatprep.subr.mxu0 0.0
      %612 = vmatpush1.msra.mxu0 0.0
      %613 = vmatprep.subr.mxu0 0.0
      %614 = vmatpush1.msra.mxu0 0.0
      %615 = vmatprep.subr.mxu0 0.0
      %616 = vmatpush1.msra.mxu0 0.0
      %617 = vmatprep.subr.mxu0 0.0
      %618 = vmatpush1.msra.mxu0 0.0
      %619 = vmatprep.subr.mxu0 0.0
      %620 = vmatpush1.msra.mxu0 0.0
      %621 = vmatprep.subr.mxu0 0.0
      %622 = vmatpush1.msra.mxu0 0.0
      %623 = vmatprep.subr.mxu0 0.0
      %624 = vmatpush1.msra.mxu0 0.0
      %625 = vmatprep.subr.mxu0 0.0
      %626 = vmatpush1.msra.mxu0 0.0
      %627 = vmatprep.subr.mxu0 0.0
      %628 = vmatpush1.msra.mxu0 0.0
      %629 = vmatprep.subr.mxu0 0.0
      %630 = vmatpush1.msra.mxu0 0.0
      %631 = vmatprep.subr.mxu0 0.0
      %632 = vmatpush1.msra.mxu0 0.0
      %633 = vmatprep.subr.mxu0 0.0
      %634 = vmatpush1.msra.mxu0 0.0
      %635 = vmatprep.subr.mxu0 0.0
      %636 = vmatpush1.msra.mxu0 0.0
      %637 = vmatprep.subr.mxu0 0.0
      %638 = vmatpush1.msra.mxu0 0.0
      %639 = vmatprep.subr.mxu0 0.0
      %640 = vmatpush1.msra.mxu0 0.0
      %641 = vmatprep.subr.mxu0 0.0
      %642 = vmatpush1.msra.mxu0 0.0
      %643 = vmatprep.subr.mxu0 0.0
      %644 = vmatpush1.msra.mxu0 0.0
      %645 = vmatprep.subr.mxu0 0.0
      %646 = vmatpush1.msra.mxu0 0.0
      %647 = vmatprep.subr.mxu0 0.0
      %648 = vmatpush1.msra.mxu0 0.0
      %649 = vmatprep.subr.mxu0 0.0
      %650 = vmatpush1.msra.mxu0 0.0
      %651 = vmatprep.subr.mxu0 0.0
      %652 = vmatpush1.msra.mxu0 0.0
      %653 = vmatprep.subr.mxu0 0.0
      %654 = vmatpush1.msra.mxu0 0.0
      %655 = vmatprep.subr.mxu0 0.0
      %656 = vmatpush1.msra.mxu0 0.0
      %657 = vmatprep.subr.mxu0 0.0
      %658 = vmatpush1.msra.mxu0 0.0
      %659 = vmatprep.subr.mxu0 0.0
      %660 = vmatpush1.msra.mxu0 0.0
      %661 = vmatprep.subr.mxu0 0.0
      %662 = vmatpush1.msra.mxu0 0.0
      %663 = vmatprep.subr.mxu0 0.0
      %664 = vmatpush1.msra.mxu0 0.0
      %665 = vmatprep.mubr.f32.mxu0 0.0
      %666 = vmatmul.mubr.f32.gmra.mrb[0].mxu0 %v560
      %v667 = vpop.f32.mrb[0].mxu0
      %v668 = vadd.f32 %v491, %v667
      %v669 = vpop.f32.mrb[0].mxu0
      %670 = vmatprep.mubr.f32.mxu0 0.0
      %671 = vmatmul.mubr.f32.gmra.mrb[0].mxu0 %v563
      %v672 = vpop.f32.mrb[0].mxu0
      %v673 = vadd.f32 %v496, %v672
      %v674 = vpop.f32.mrb[0].mxu0
      %675 = vmatprep.mubr.f32.mxu0 0.0
      %676 = vmatmul.mubr.f32.gmra.mrb[0].mxu0 %v566
      %v677 = vpop.f32.mrb[0].mxu0
      %v678 = vadd.f32 %v501, %v677
      %v679 = vpop.f32.mrb[0].mxu0
      %680 = vmatprep.mubr.f32.mxu0 0.0
      %681 = vmatmul.mubr.f32.gmra.mrb[0].mxu0 %v569
      %v682 = vpop.f32.mrb[0].mxu0
      %v683 = vadd.f32 %v506, %v682
      %v684 = vpop.f32.mrb[0].mxu0
      %685 = vmatprep.mubr.f32.mxu0 0.0
      %686 = vmatmul.mubr.f32.gmra.mrb[0].mxu0 %v572
      %v687 = vpop.f32.mrb[0].mxu0
      %v688 = vadd.f32 %v511, %v687
      %v689 = vpop.f32.mrb[0].mxu0
      %690 = vmatprep.mubr.f32.mxu0 0.0
      %691 = vmatmul.mubr.f32.gmra.mrb[0].mxu0 %v575
      %v692 = vpop.f32.mrb[0].mxu0
      %v693 = vadd.f32 %v516, %v692
      %v694 = vpop.f32.mrb[0].mxu0
      %695 = vmatprep.mubr.f32.mxu0 0.0
      %696 = vmatmul.mubr.f32.gmra.mrb[0].mxu0 %v578
      %v697 = vpop.f32.mrb[0].mxu0
      %v698 = vadd.f32 %v521, %v697
      %v699 = vpop.f32.mrb[0].mxu0
      %700 = vmatprep.mubr.f32.mxu0 0.0
      %701 = vmatmul.mubr.f32.gmra.mrb[0].mxu0 %v581
      %v702 = vpop.f32.mrb[0].mxu0
      %v703 = vadd.f32 %v526, %v702
      %v704 = vpop.f32.mrb[0].mxu0
      %705 = vmatprep.mubr.f32.mxu0 0.0
      %706 = vmatmul.mubr.f32.gmra.mrb[0].mxu0 %v584
      %v707 = vpop.f32.mrb[0].mxu0
      %v708 = vadd.f32 %v531, %v707
      %v709 = vpop.f32.mrb[0].mxu0
      %710 = vmatprep.mubr.f32.mxu0 0.0
      %711 = vmatmul.mubr.f32.gmra.mrb[0].mxu0 %v587
      %v712 = vpop.f32.mrb[0].mxu0
      %v713 = vadd.f32 %v536, %v712
      %v714 = vpop.f32.mrb[0].mxu0
      %715 = vmatprep.mubr.f32.mxu0 0.0
      %716 = vmatmul.mubr.f32.gmra.mrb[0].mxu0 %v590
      %v717 = vpop.f32.mrb[0].mxu0
      %v718 = vadd.f32 %v541, %v717
      %v719 = vpop.f32.mrb[0].mxu0
      %720 = vmatprep.mubr.f32.mxu0 0.0
      %721 = vmatmul.mubr.f32.gmra.mrb[0].mxu0 %v593
      %v722 = vpop.f32.mrb[0].mxu0
      %v723 = vadd.f32 %v546, %v722
      %v724 = vpop.f32.mrb[0].mxu0
      %725 = vmatprep.mubr.f32.mxu0 0.0
      %726 = vmatmul.mubr.f32.gmra.mrb[0].mxu0 %v596
      %v727 = vpop.f32.mrb[0].mxu0
      %v728 = vadd.f32 %v551, %v727
      %v729 = vpop.f32.mrb[0].mxu0
      %730 = vmatprep.mubr.f32.mxu0 0.0
      %731 = vmatmul.mubr.f32.gmra.mrb[0].mxu0 %v599
      %v732 = vpop.f32.mrb[0].mxu0
      %v733 = vadd.f32 %v556, %v732
      %v734 = vpop.f32.mrb[0].mxu0
      %735 = vdwg.mxu0
      %v736 = vld [vmem:[%s4] sm:$0x1]
      %v738 = vlaneseq
      %v739 = vshrl.u32 %v738, 7
      %v740 = vsub.s32 0, %v739
      %v741 = vrot.slane %v736, %v740
      %v743 = vadd.f32 %v668, %v741
      %v744 = vadd.f32 %v673, %v741
      %v745 = vadd.f32 %v678, %v741
      %v746 = vadd.f32 %v683, %v741
      %v747 = vadd.f32 %v688, %v741
      %v748 = vadd.f32 %v693, %v741
      %v749 = vadd.f32 %v698, %v741
      %v750 = vadd.f32 %v703, %v741
      %v751 = vadd.f32 %v708, %v741
      %v752 = vadd.f32 %v713, %v741
      %v753 = vadd.f32 %v718, %v741
      %v754 = vadd.f32 %v723, %v741
      %v755 = vadd.f32 %v728, %v741
      %v756 = vadd.f32 %v733, %v741
      %v757 = vtanh.pop %v743
      %v758 = vtanh.pop %v744
      %v759 = vtanh.pop %v745
      %v760 = vtanh.pop %v746
      %v761 = vtanh.pop %v747
      %v762 = vtanh.pop %v748
      %v763 = vtanh.pop %v749
      %v764 = vtanh.pop %v750
      %v765 = vtanh.pop %v751
      %v766 = vtanh.pop %v752
      %v767 = vtanh.pop %v753
      %v768 = vtanh.pop %v754
      %v769 = vtanh.pop %v755
      %v770 = vtanh.pop %v756
      %v771 = vxor.u32 %v743, 2147483648
      %v772 = vxor.u32 %v744, 2147483648
      %v773 = vxor.u32 %v745, 2147483648
      %v774 = vxor.u32 %v746, 2147483648
      %v775 = vxor.u32 %v747, 2147483648
      %v776 = vxor.u32 %v748, 2147483648
      %v777 = vxor.u32 %v749, 2147483648
      %v778 = vxor.u32 %v750, 2147483648
      %v779 = vxor.u32 %v751, 2147483648
      %v780 = vxor.u32 %v752, 2147483648
      %v781 = vxor.u32 %v753, 2147483648
      %v782 = vxor.u32 %v754, 2147483648
      %v783 = vxor.u32 %v755, 2147483648
      %v784 = vxor.u32 %v756, 2147483648
      %v785 = vmul.f32 %v771, 1.442695
      %v786 = vpow.pop %v785
      %v787 = vmul.f32 %v772, 1.442695
      %v788 = vpow.pop %v787
      %v789 = vmul.f32 %v773, 1.442695
      %v790 = vpow.pop %v789
      %v791 = vmul.f32 %v774, 1.442695
      %v792 = vpow.pop %v791
      %v793 = vmul.f32 %v775, 1.442695
      %v794 = vpow.pop %v793
      %v795 = vmul.f32 %v776, 1.442695
      %v796 = vpow.pop %v795
      %v797 = vmul.f32 %v777, 1.442695
      %v798 = vpow.pop %v797
      %v799 = vmul.f32 %v778, 1.442695
      %v800 = vpow.pop %v799
      %v801 = vmul.f32 %v779, 1.442695
      %v802 = vpow.pop %v801
      %v803 = vmul.f32 %v780, 1.442695
      %v804 = vpow.pop %v803
      %v805 = vmul.f32 %v781, 1.442695
      %v806 = vpow.pop %v805
      %v807 = vmul.f32 %v782, 1.442695
      %v808 = vpow.pop %v807
      %v809 = vmul.f32 %v783, 1.442695
      %v810 = vpow.pop %v809
      %v811 = vmul.f32 %v784, 1.442695
      %v812 = vpow.pop %v811
      %v813 = vadd.f32 %v786, 1.0
      %v814 = vadd.f32 %v788, 1.0
      %v815 = vadd.f32 %v790, 1.0
      %v816 = vadd.f32 %v792, 1.0
      %v817 = vadd.f32 %v794, 1.0
      %v818 = vadd.f32 %v796, 1.0
      %v819 = vadd.f32 %v798, 1.0
      %v820 = vadd.f32 %v800, 1.0
      %v821 = vadd.f32 %v802, 1.0
      %v822 = vadd.f32 %v804, 1.0
      %v823 = vadd.f32 %v806, 1.0
      %v824 = vadd.f32 %v808, 1.0
      %v825 = vadd.f32 %v810, 1.0
      %v826 = vadd.f32 %v812, 1.0
      %v827 = vrcp.pop %v813
      %v828 = vmul.f32 1.0, %v827
      %v829 = vrcp.pop %v814
      %v830 = vmul.f32 1.0, %v829
      %v831 = vrcp.pop %v815
      %v832 = vmul.f32 1.0, %v831
      %v833 = vrcp.pop %v816
      %v834 = vmul.f32 1.0, %v833
      %v835 = vrcp.pop %v817
      %v836 = vmul.f32 1.0, %v835
      %v837 = vrcp.pop %v818
      %v838 = vmul.f32 1.0, %v837
      %v839 = vrcp.pop %v819
      %v840 = vmul.f32 1.0, %v839
      %v841 = vrcp.pop %v820
      %v842 = vmul.f32 1.0, %v841
      %v843 = vrcp.pop %v821
      %v844 = vmul.f32 1.0, %v843
      %v845 = vrcp.pop %v822
      %v846 = vmul.f32 1.0, %v845
      %v847 = vrcp.pop %v823
      %v848 = vmul.f32 1.0, %v847
      %v849 = vrcp.pop %v824
      %v850 = vmul.f32 1.0, %v849
      %v851 = vrcp.pop %v825
      %v852 = vmul.f32 1.0, %v851
      %v853 = vrcp.pop %v826
      %v854 = vmul.f32 1.0, %v853
      %869 = vrot.lane.b32.xlu0 %v828, 96
      %v870 = vpop.permute.xlu0 %869
      %871 = vrot.lane.b32.xlu0 %v830, 96
      %v872 = vpop.permute.xlu0 %871
      %873 = vrot.lane.b32.xlu0 %v832, 96
      %v874 = vpop.permute.xlu0 %873
      %875 = vrot.lane.b32.xlu0 %v834, 96
      %v876 = vpop.permute.xlu0 %875
      %877 = vrot.lane.b32.xlu0 %v836, 96
      %v878 = vpop.permute.xlu0 %877
      %879 = vrot.lane.b32.xlu0 %v838, 96
      %v880 = vpop.permute.xlu0 %879
      %881 = vrot.lane.b32.xlu0 %v840, 96
      %v882 = vpop.permute.xlu0 %881
      %883 = vrot.lane.b32.xlu0 %v842, 96
      %v884 = vpop.permute.xlu0 %883
      %885 = vrot.lane.b32.xlu0 %v844, 96
      %v886 = vpop.permute.xlu0 %885
      %887 = vrot.lane.b32.xlu0 %v846, 96
      %v888 = vpop.permute.xlu0 %887
      %889 = vrot.lane.b32.xlu0 %v848, 96
      %v890 = vpop.permute.xlu0 %889
      %891 = vrot.lane.b32.xlu0 %v850, 96
      %v892 = vpop.permute.xlu0 %891
      %893 = vrot.lane.b32.xlu0 %v852, 96
      %v894 = vpop.permute.xlu0 %893
      %895 = vrot.lane.b32.xlu0 %v854, 96
      %v896 = vpop.permute.xlu0 %895
      %v911 = vmul.f32 %v757, %v870
      %v912 = vmul.f32 %v758, %v872
      %v913 = vmul.f32 %v759, %v874
      %v914 = vmul.f32 %v760, %v876
      %v915 = vmul.f32 %v761, %v878
      %v916 = vmul.f32 %v762, %v880
      %v917 = vmul.f32 %v763, %v882
      %v918 = vmul.f32 %v764, %v884
      %v919 = vmul.f32 %v765, %v886
      %v920 = vmul.f32 %v766, %v888
      %v921 = vmul.f32 %v767, %v890
      %v922 = vmul.f32 %v768, %v892
      %v923 = vmul.f32 %v769, %v894
      %v924 = vmul.f32 %v770, %v896
      %v925 = vld [vmem:[%s5] sm:$0xff]
      %v926 = vld [vmem:[%s5 + $0x8] sm:$0xff]
      %v927 = vld [vmem:[%s5 + $0x10] sm:$0xff]
      %v928 = vld [vmem:[%s5 + $0x18] sm:$0xff]
      %v929 = vld [vmem:[%s6] sm:$0x1]
      %v931 = vlaneseq
      %v932 = vshrl.u32 %v931, 7
      %v933 = vsub.s32 0, %v932
      %v934 = vrot.slane %v929, %v933
      %v937 = vsel %vm381, %v911, 0
      %v940 = vsel %vm381, %v912, 0
      %v943 = vsel %vm381, %v913, 0
      %v946 = vsel %vm381, %v914, 0
      %v949 = vsel %vm381, %v915, 0
      %v952 = vsel %vm381, %v916, 0
      %v955 = vsel %vm381, %v917, 0
      %v958 = vsel %vm381, %v918, 0
      %v961 = vsel %vm381, %v919, 0
      %v964 = vsel %vm381, %v920, 0
      %v967 = vsel %vm381, %v921, 0
      %v970 = vsel %vm381, %v922, 0
      %v973 = vsel %vm381, %v923, 0
      %v976 = vsel %vm381, %v924, 0
      %978 = vmatprep.subr.mxu0 0.0
      %979 = vmatpush1.msra.mxu0 %v925
      %980 = vmatprep.subr.mxu0 0.0
      %981 = vmatpush1.msra.mxu0 %v926
      %982 = vmatprep.subr.mxu0 0.0
      %983 = vmatpush1.msra.mxu0 %v927
      %984 = vmatprep.subr.mxu0 0.0
      %985 = vmatpush1.msra.mxu0 %v928
      %986 = vmatprep.subr.mxu0 0.0
      %987 = vmatpush1.msra.mxu0 0.0
      %988 = vmatprep.subr.mxu0 0.0
      %989 = vmatpush1.msra.mxu0 0.0
      %990 = vmatprep.subr.mxu0 0.0
      %991 = vmatpush1.msra.mxu0 0.0
      %992 = vmatprep.subr.mxu0 0.0
      %993 = vmatpush1.msra.mxu0 0.0
      %994 = vmatprep.subr.mxu0 0.0
      %995 = vmatpush1.msra.mxu0 0.0
      %996 = vmatprep.subr.mxu0 0.0
      %997 = vmatpush1.msra.mxu0 0.0
      %998 = vmatprep.subr.mxu0 0.0
      %999 = vmatpush1.msra.mxu0 0.0
      %1000 = vmatprep.subr.mxu0 0.0
      %1001 = vmatpush1.msra.mxu0 0.0
      %1002 = vmatprep.subr.mxu0 0.0
      %1003 = vmatpush1.msra.mxu0 0.0
      %1004 = vmatprep.subr.mxu0 0.0
      %1005 = vmatpush1.msra.mxu0 0.0
      %1006 = vmatprep.subr.mxu0 0.0
      %1007 = vmatpush1.msra.mxu0 0.0
      %1008 = vmatprep.subr.mxu0 0.0
      %1009 = vmatpush1.msra.mxu0 0.0
      %1010 = vmatprep.subr.mxu0 0.0
      %1011 = vmatpush1.msra.mxu0 0.0
      %1012 = vmatprep.subr.mxu0 0.0
      %1013 = vmatpush1.msra.mxu0 0.0
      %1014 = vmatprep.subr.mxu0 0.0
      %1015 = vmatpush1.msra.mxu0 0.0
      %1016 = vmatprep.subr.mxu0 0.0
      %1017 = vmatpush1.msra.mxu0 0.0
      %1018 = vmatprep.subr.mxu0 0.0
      %1019 = vmatpush1.msra.mxu0 0.0
      %1020 = vmatprep.subr.mxu0 0.0
      %1021 = vmatpush1.msra.mxu0 0.0
      %1022 = vmatprep.subr.mxu0 0.0
      %1023 = vmatpush1.msra.mxu0 0.0
      %1024 = vmatprep.subr.mxu0 0.0
      %1025 = vmatpush1.msra.mxu0 0.0
      %1026 = vmatprep.subr.mxu0 0.0
      %1027 = vmatpush1.msra.mxu0 0.0
      %1028 = vmatprep.subr.mxu0 0.0
      %1029 = vmatpush1.msra.mxu0 0.0
      %1030 = vmatprep.subr.mxu0 0.0
      %1031 = vmatpush1.msra.mxu0 0.0
      %1032 = vmatprep.subr.mxu0 0.0
      %1033 = vmatpush1.msra.mxu0 0.0
      %1034 = vmatprep.subr.mxu0 0.0
      %1035 = vmatpush1.msra.mxu0 0.0
      %1036 = vmatprep.subr.mxu0 0.0
      %1037 = vmatpush1.msra.mxu0 0.0
      %1038 = vmatprep.subr.mxu0 0.0
      %1039 = vmatpush1.msra.mxu0 0.0
      %1040 = vmatprep.subr.mxu0 0.0
      %1041 = vmatpush1.msra.mxu0 0.0
      %1042 = vmatprep.mubr.f32.mxu0 0.0
      %1043 = vmatmul.mubr.f32.gmra.mrb[0].mxu0 %v937
      %v1044 = vpop.f32.mrb[0].mxu0
      %v1045 = vadd.f32 %v934, %v1044
      %v1046 = vpop.f32.mrb[0].mxu0
      %1047 = vmatprep.mubr.f32.mxu0 0.0
      %1048 = vmatmul.mubr.f32.gmra.mrb[0].mxu0 %v940
      %v1049 = vpop.f32.mrb[0].mxu0
      %v1050 = vadd.f32 %v934, %v1049
      %v1051 = vpop.f32.mrb[0].mxu0
      %1052 = vmatprep.mubr.f32.mxu0 0.0
      %1053 = vmatmul.mubr.f32.gmra.mrb[0].mxu0 %v943
      %v1054 = vpop.f32.mrb[0].mxu0
      %v1055 = vadd.f32 %v934, %v1054
      %v1056 = vpop.f32.mrb[0].mxu0
      %1057 = vmatprep.mubr.f32.mxu0 0.0
      %1058 = vmatmul.mubr.f32.gmra.mrb[0].mxu0 %v946
      %v1059 = vpop.f32.mrb[0].mxu0
      %v1060 = vadd.f32 %v934, %v1059
      %v1061 = vpop.f32.mrb[0].mxu0
      %1062 = vmatprep.mubr.f32.mxu0 0.0
      %1063 = vmatmul.mubr.f32.gmra.mrb[0].mxu0 %v949
      %v1064 = vpop.f32.mrb[0].mxu0
      %v1065 = vadd.f32 %v934, %v1064
      %v1066 = vpop.f32.mrb[0].mxu0
      %1067 = vmatprep.mubr.f32.mxu0 0.0
      %1068 = vmatmul.mubr.f32.gmra.mrb[0].mxu0 %v952
      %v1069 = vpop.f32.mrb[0].mxu0
      %v1070 = vadd.f32 %v934, %v1069
      %v1071 = vpop.f32.mrb[0].mxu0
      %1072 = vmatprep.mubr.f32.mxu0 0.0
      %1073 = vmatmul.mubr.f32.gmra.mrb[0].mxu0 %v955
      %v1074 = vpop.f32.mrb[0].mxu0
      %v1075 = vadd.f32 %v934, %v1074
      %v1076 = vpop.f32.mrb[0].mxu0
      %1077 = vmatprep.mubr.f32.mxu0 0.0
      %1078 = vmatmul.mubr.f32.gmra.mrb[0].mxu0 %v958
      %v1079 = vpop.f32.mrb[0].mxu0
      %v1080 = vadd.f32 %v934, %v1079
      %v1081 = vpop.f32.mrb[0].mxu0
      %1082 = vmatprep.mubr.f32.mxu0 0.0
      %1083 = vmatmul.mubr.f32.gmra.mrb[0].mxu0 %v961
      %v1084 = vpop.f32.mrb[0].mxu0
      %v1085 = vadd.f32 %v934, %v1084
      %v1086 = vpop.f32.mrb[0].mxu0
      %1087 = vmatprep.mubr.f32.mxu0 0.0
      %1088 = vmatmul.mubr.f32.gmra.mrb[0].mxu0 %v964
      %v1089 = vpop.f32.mrb[0].mxu0
      %v1090 = vadd.f32 %v934, %v1089
      %v1091 = vpop.f32.mrb[0].mxu0
      %1092 = vmatprep.mubr.f32.mxu0 0.0
      %1093 = vmatmul.mubr.f32.gmra.mrb[0].mxu0 %v967
      %v1094 = vpop.f32.mrb[0].mxu0
      %v1095 = vadd.f32 %v934, %v1094
      %v1096 = vpop.f32.mrb[0].mxu0
      %1097 = vmatprep.mubr.f32.mxu0 0.0
      %1098 = vmatmul.mubr.f32.gmra.mrb[0].mxu0 %v970
      %v1099 = vpop.f32.mrb[0].mxu0
      %v1100 = vadd.f32 %v934, %v1099
      %v1101 = vpop.f32.mrb[0].mxu0
      %1102 = vmatprep.mubr.f32.mxu0 0.0
      %1103 = vmatmul.mubr.f32.gmra.mrb[0].mxu0 %v973
      %v1104 = vpop.f32.mrb[0].mxu0
      %v1105 = vadd.f32 %v934, %v1104
      %v1106 = vpop.f32.mrb[0].mxu0
      %1107 = vmatprep.mubr.f32.mxu0 0.0
      %1108 = vmatmul.mubr.f32.gmra.mrb[0].mxu0 %v976
      %v1109 = vpop.f32.mrb[0].mxu0
      %v1110 = vadd.f32 %v934, %v1109
      %v1111 = vpop.f32.mrb[0].mxu0
      %1112 = vdwg.mxu0
      %1113 = vst.msk [vmem:[%s337] sm:$0xff] %vm381, %v1045
      %1114 = vst.msk [vmem:[%s337 + $0x8] sm:$0xff] %vm381, %v1050
      %1115 = vst.msk [vmem:[%s337 + $0x10] sm:$0xff] %vm381, %v1055
      %1116 = vst.msk [vmem:[%s337 + $0x18] sm:$0xff] %vm381, %v1060
      %1117 = vst.msk [vmem:[%s337 + $0x20] sm:$0xff] %vm381, %v1065
      %1118 = vst.msk [vmem:[%s337 + $0x28] sm:$0xff] %vm381, %v1070
      %1119 = vst.msk [vmem:[%s337 + $0x30] sm:$0xff] %vm381, %v1075
      %1120 = vst.msk [vmem:[%s337 + $0x38] sm:$0xff] %vm381, %v1080
      %1121 = vst.msk [vmem:[%s337 + $0x40] sm:$0xff] %vm381, %v1085
      %1122 = vst.msk [vmem:[%s337 + $0x48] sm:$0xff] %vm381, %v1090
      %1123 = vst.msk [vmem:[%s337 + $0x50] sm:$0xff] %vm381, %v1095
      %1124 = vst.msk [vmem:[%s337 + $0x58] sm:$0xff] %vm381, %v1100
      %1125 = vst.msk [vmem:[%s337 + $0x60] sm:$0xff] %vm381, %v1105
      %1126 = vst.msk [vmem:[%s337 + $0x68] sm:$0xff] %vm381, %v1110
      %1141 = vrot.lane.b32.xlu0 %v1045, 96
      %v1142 = vpop.permute.xlu0 %1141
      %1143 = vrot.lane.b32.xlu0 %v1050, 96
      %v1144 = vpop.permute.xlu0 %1143
      %1145 = vrot.lane.b32.xlu0 %v1055, 96
      %v1146 = vpop.permute.xlu0 %1145
      %1147 = vrot.lane.b32.xlu0 %v1060, 96
      %v1148 = vpop.permute.xlu0 %1147
      %1149 = vrot.lane.b32.xlu0 %v1065, 96
      %v1150 = vpop.permute.xlu0 %1149
      %1151 = vrot.lane.b32.xlu0 %v1070, 96
      %v1152 = vpop.permute.xlu0 %1151
      %1153 = vrot.lane.b32.xlu0 %v1075, 96
      %v1154 = vpop.permute.xlu0 %1153
      %1155 = vrot.lane.b32.xlu0 %v1080, 96
      %v1156 = vpop.permute.xlu0 %1155
      %1157 = vrot.lane.b32.xlu0 %v1085, 96
      %v1158 = vpop.permute.xlu0 %1157
      %1159 = vrot.lane.b32.xlu0 %v1090, 96
      %v1160 = vpop.permute.xlu0 %1159
      %1161 = vrot.lane.b32.xlu0 %v1095, 96
      %v1162 = vpop.permute.xlu0 %1161
      %1163 = vrot.lane.b32.xlu0 %v1100, 96
      %v1164 = vpop.permute.xlu0 %1163
      %1165 = vrot.lane.b32.xlu0 %v1105, 96
      %v1166 = vpop.permute.xlu0 %1165
      %1167 = vrot.lane.b32.xlu0 %v1110, 96
      %v1168 = vpop.permute.xlu0 %1167
      %1183 = vst.msk [vmem:[%s343] sm:$0xff] %vm381, %v1142
      %1184 = vst.msk [vmem:[%s343 + $0x8] sm:$0xff] %vm381, %v1144
      %1185 = vst.msk [vmem:[%s343 + $0x10] sm:$0xff] %vm381, %v1146
      %1186 = vst.msk [vmem:[%s343 + $0x18] sm:$0xff] %vm381, %v1148
      %1187 = vst.msk [vmem:[%s343 + $0x20] sm:$0xff] %vm381, %v1150
      %1188 = vst.msk [vmem:[%s343 + $0x28] sm:$0xff] %vm381, %v1152
      %1189 = vst.msk [vmem:[%s343 + $0x30] sm:$0xff] %vm381, %v1154
      %1190 = vst.msk [vmem:[%s343 + $0x38] sm:$0xff] %vm381, %v1156
      %1191 = vst.msk [vmem:[%s343 + $0x40] sm:$0xff] %vm381, %v1158
      %1192 = vst.msk [vmem:[%s343 + $0x48] sm:$0xff] %vm381, %v1160
      %1193 = vst.msk [vmem:[%s343 + $0x50] sm:$0xff] %vm381, %v1162
      %1194 = vst.msk [vmem:[%s343 + $0x58] sm:$0xff] %vm381, %v1164
      %1195 = vst.msk [vmem:[%s343 + $0x60] sm:$0xff] %vm381, %v1166
      %1196 = vst.msk [vmem:[%s343 + $0x68] sm:$0xff] %vm381, %v1168
      %s1197 = smul.u32 14, %s20
      %p1198 = scmp.lt.s32.totalorder %s1197, 27
      %s1199 = scalar_select %p1198, %s1197, 27
      %s1200 = smul.addr %s1199, 8
      %s1201 = scalar_lea.vmem %s7, %s1200
      %s1202 = smul.u32 14, %s20
      %p1203 = scmp.lt.s32.totalorder %s1202, 27
      %s1204 = scalar_select %p1203, %s1202, 27
      %s1205 = smul.addr %s1204, 8
      %s1206 = scalar_lea.vmem %s8, %s1205
      // Predicated region
      $region49: #{gcn_layer_st_forward.2} parent=47 // pred_check
        %p1207 = pneg %p195
      $region50: #{gcn_layer_st_forward.2} parent=47 // pred_check_branch
        %1209 = sbr.rel (%p1207) target = $region52
      $region51: #{gcn_layer_st_forward.2} parent=47 // pred_region
        %s1210 = smul.u32 14, %s20
      $region52: #{gcn_layer_st_forward.2} parent=47 // pred_fallthru
        _
      // Predicated region
      $region53: #{gcn_layer_st_forward.2} parent=47 // pred_check
        %p1211 = pneg %p221
      $region54: #{gcn_layer_st_forward.2} parent=47 // pred_check_branch
        %1213 = sbr.rel (%p1211) target = $region56
      $region55: #{gcn_layer_st_forward.2} parent=47 // pred_region
        %s1214 = smul.u32 14, %s20
      $region56: #{gcn_layer_st_forward.2} parent=47 // pred_fallthru
        _
    $region48: #{gcn_layer_st_forward.2} parent=5 // pred_fallthru
      _
    %p1215 = scmp.le.s32.totalorder 2, %s15
    // Predicated region
    $region57: #{gcn_layer_st_forward.2} parent=5 // pred_check
      %p1216 = pneg %p1215
    $region58: #{gcn_layer_st_forward.2} parent=5 // pred_check_branch
      %1218 = sbr.rel (%p1216) target = $region60
    $region59: #{gcn_layer_st_forward.2} parent=5 // pred_region
      %s1219 = ssub.s32 %s15, 2
      // Predicated region
      $region61: #{gcn_layer_st_forward.2} parent=59 // pred_check
        %p1220 = pneg %p201
      $region62: #{gcn_layer_st_forward.2} parent=59 // pred_check_branch
        %1222 = sbr.rel (%p1220) target = $region64
      $region63: #{gcn_layer_st_forward.2} parent=59 // pred_region
        %s1223 = smul.u32 14, %s21
        %p1224 = scmp.lt.s32.totalorder %s1223, 27
        %s1225 = scalar_select %p1224, %s1223, 27
        %s1226 = smul.addr %s1225, 8
        %s1227 = scalar_lea.vmem %s7, %s1226
      $region64: #{gcn_layer_st_forward.2} parent=59 // pred_fallthru
        _
      // Predicated region
      $region65: #{gcn_layer_st_forward.2} parent=59 // pred_check
        %p1228 = pneg %p227
      $region66: #{gcn_layer_st_forward.2} parent=59 // pred_check_branch
        %1230 = sbr.rel (%p1228) target = $region68
      $region67: #{gcn_layer_st_forward.2} parent=59 // pred_region
        %s1231 = smul.u32 14, %s21
        %p1232 = scmp.lt.s32.totalorder %s1231, 27
        %s1233 = scalar_select %p1232, %s1231, 27
        %s1234 = smul.addr %s1233, 8
        %s1235 = scalar_lea.vmem %s8, %s1234
      $region68: #{gcn_layer_st_forward.2} parent=59 // pred_fallthru
        _
    $region60: #{gcn_layer_st_forward.2} parent=5 // pred_fallthru
      _
  $region6: #{gcn_layer_st_forward.2} parent=0 // loop_footer
    %s19 = sadd.s32 1, %s15
  $region7: #{gcn_layer_st_forward.2} parent=0 // loop_footer_branch
    %14 = sbr.rel target = $region3
  $region8: #{gcn_layer_st_forward.2} parent=0 // loop_exit
    _

</llo_original>
